<compile_context>
chip_gen: v5e
topology: v5e:2x2
jax: 0.10.0
libtpu: 0.0.40
codegen_flags: <defaults>
</compile_context>

<pallas_src>
import functools

import jax
import jax.numpy as jnp
from jax.experimental import pallas as pl
from jax.experimental.pallas import tpu as pltpu


_COMPILER_PARAMS = pltpu.CompilerParams(
    dimension_semantics=("parallel",),          # pure row-parallel grids
    vmem_limit_bytes=48 * 1024 * 1024,
)


def _pick_row_tile(m, target):
    """Largest row tile <= target that divides m (multiple of 8); fall back to
    `target` (Pallas masks the ragged edge block)."""
    if m <= target:
        return m
    for t in range(target, 63, -8):
        if m % t == 0:
            return t
    return target


# ---------------------------------------------------------------------------
# Pallas kernels
# ---------------------------------------------------------------------------

def conv_relu_pool_kernel(p_ref, w_ref, b_ref, o_ref):
    """Fused 3x3 conv (as patch matmul) + bias + ReLU + 2x2 maxpool.

    p_ref: (4, TM, 9*Cin)  patch rows for the 4 offsets of every 2x2 window
    w_ref: (9*Cin, Cout)   b_ref: (1, Cout)      o_ref: (TM, Cout) pooled out
    """
    w = w_ref[...]
    b = b_ref[...]
    acc = jnp.maximum(
        jnp.dot(p_ref[0], w, preferred_element_type=jnp.float32) + b, 0.0)
    for i in range(1, 4):
        y = jnp.maximum(
            jnp.dot(p_ref[i], w, preferred_element_type=jnp.float32) + b, 0.0)
        acc = jnp.maximum(acc, y)
    o_ref[...] = acc.astype(o_ref.dtype)


def mlp_head_kernel(x_ref, w1_ref, b1_ref, w2_ref, b2_ref, o_ref):
    """log_softmax(relu(x @ w1 + b1) @ w2 + b2), all in one kernel."""
    h = jnp.dot(x_ref[...], w1_ref[...], preferred_element_type=jnp.float32)
    h = jnp.maximum(h + b1_ref[...], 0.0).astype(w2_ref.dtype)
    y = jnp.dot(h, w2_ref[...], preferred_element_type=jnp.float32) + b2_ref[...]
    m = jnp.max(y, axis=-1, keepdims=True)
    s = y - m
    lse = jnp.log(jnp.sum(jnp.exp(s), axis=-1, keepdims=True))
    o_ref[...] = (s - lse).astype(o_ref.dtype)


# ---------------------------------------------------------------------------
# Wrappers (XLA does only layout plumbing; all compute is in the kernels)
# ---------------------------------------------------------------------------

def _conv_pool_patches(x_nhwc):
    """3x3/pad-1 patches grouped by 2x2-pool window offset.

    (B,H,W,C) -> (4, B*(H//2)*(W//2), 9*C), feature order (dy, dx, cin)."""
    B, H, W, C = x_nhwc.shape
    xp = jnp.pad(x_nhwc, ((0, 0), (1, 1), (1, 1), (0, 0)))
    taps = [xp[:, dy:dy + H, dx:dx + W, :] for dy in range(3) for dx in range(3)]
    pf = jnp.concatenate(taps, axis=-1)                        # (B,H,W,9C)
    Ho, Wo = H // 2, W // 2
    slabs = [pf[:, i::2, j::2, :].reshape(B * Ho * Wo, 9 * C)
             for i in (0, 1) for j in (0, 1)]
    return jnp.stack(slabs, axis=0)                            # (4, M, 9C)


def conv3x3_relu_pool(x_nhwc, w_oihw, bias, compute_dtype):
    B, H, W, Cin = x_nhwc.shape
    Cout = w_oihw.shape[0]
    Ho, Wo = H // 2, W // 2
    K = 9 * Cin
    M = B * Ho * Wo

    p4 = _conv_pool_patches(x_nhwc).astype(compute_dtype)
    w2d = jnp.transpose(w_oihw, (2, 3, 1, 0)).reshape(K, Cout).astype(compute_dtype)
    b2d = bias.reshape(1, Cout).astype(compute_dtype)

    TM = _pick_row_tile(M, 1024)
    out = pl.pallas_call(
        conv_relu_pool_kernel,
        out_shape=jax.ShapeDtypeStruct((M, Cout), compute_dtype),
        grid=(pl.cdiv(M, TM),),
        in_specs=[
            pl.BlockSpec((4, TM, K), lambda m: (0, m, 0)),
            pl.BlockSpec((K, Cout), lambda m: (0, 0)),
            pl.BlockSpec((1, Cout), lambda m: (0, 0)),
        ],
        out_specs=pl.BlockSpec((TM, Cout), lambda m: (m, 0)),
        compiler_params=_COMPILER_PARAMS,
    )(p4, w2d, b2d)
    return out.reshape(B, Ho, Wo, Cout)


def mlp_head(x, w1_io, b1, w2_io, b2, compute_dtype):
    B, K1 = x.shape
    Hdim = w1_io.shape[1]
    N = w2_io.shape[1]
    TB = _pick_row_tile(B, 256)
    return pl.pallas_call(
        mlp_head_kernel,
        out_shape=jax.ShapeDtypeStruct((B, N), jnp.float32),
        grid=(pl.cdiv(B, TB),),
        in_specs=[
            pl.BlockSpec((TB, K1), lambda m: (m, 0)),
            pl.BlockSpec((K1, Hdim), lambda m: (0, 0)),
            pl.BlockSpec((1, Hdim), lambda m: (0, 0)),
            pl.BlockSpec((Hdim, N), lambda m: (0, 0)),
            pl.BlockSpec((1, N), lambda m: (0, 0)),
        ],
        out_specs=pl.BlockSpec((TB, N), lambda m: (m, 0)),
        compiler_params=_COMPILER_PARAMS,
    )(x.astype(compute_dtype),
      w1_io.astype(compute_dtype), b1.reshape(1, Hdim).astype(compute_dtype),
      w2_io.astype(compute_dtype), b2.reshape(1, N).astype(compute_dtype))


@functools.partial(jax.jit, static_argnames=("compute_dtype",))
def model_forward(params, x_nchw, compute_dtype=jnp.float32):
    x = jnp.transpose(x_nchw, (0, 2, 3, 1))                         # NCHW -> NHWC
    x = conv3x3_relu_pool(x, params["conv1_w"], params["conv1_b"],
                          compute_dtype)                            # (B,14,14,32)
    x = conv3x3_relu_pool(x, params["conv2_w"], params["conv2_b"],
                          compute_dtype)                            # (B, 7, 7,64)
    B, Ho, Wo, C = x.shape
    x = x.reshape(B, Ho * Wo * C)          # NHWC flatten (pure bitcast, no copy)

    # PyTorch's .view flattens (C,H,W); permute lin1's columns ONCE (batch-
    # independent) to NHWC order instead of transposing the activation.
    w1 = params["lin1_w"].reshape(128, C, Ho, Wo)
    w1 = jnp.transpose(w1, (2, 3, 1, 0)).reshape(Ho * Wo * C, 128)  # (3136,128)
    w2 = params["lin2_w"].T                                         # (128,10)
    return mlp_head(x, w1, params["lin1_b"], w2, params["lin2_b"], compute_dtype)


# ---------------------------------------------------------------------------
# Deterministic parameter init (PyTorch-like uniform(-1/sqrt(fan_in), ...))
# ---------------------------------------------------------------------------

def init_params(key):
    ks = jax.random.split(key, 8)

    def u(k, shape, fan_in):
        bound = 1.0 / jnp.sqrt(jnp.float32(fan_in))
        return jax.random.uniform(k, shape, jnp.float32, -bound, bound)

    return {
        "conv1_w": u(ks[0], (32, 1, 3, 3), 1 * 9),          # (Cout, Cin, kh, kw)
        "conv1_b": u(ks[1], (32,), 1 * 9),
        "conv2_w": u(ks[2], (64, 32, 3, 3), 32 * 9),
        "conv2_b": u(ks[3], (64,), 32 * 9),
        "lin1_w": u(ks[4], (128, 64 * 7 * 7), 64 * 7 * 7),  # (out, in) PyTorch layout
        "lin1_b": u(ks[5], (128,), 64 * 7 * 7),
        "lin2_w": u(ks[6], (10, 128), 128),
        "lin2_b": u(ks[7], (10,), 128),
    }


# Pure-JAX reference of the same forward pass (for correctness checking).
def reference_forward(params, x_nchw):
    x = jnp.transpose(x_nchw, (0, 2, 3, 1))

    def conv(x, w, b):
        B, H, W, Cin = x.shape
        Cout = w.shape[0]
        xp = jnp.pad(x, ((0, 0), (1, 1), (1, 1), (0, 0)))
        cols = [xp[:, dy:dy + H, dx:dx + W, :] for dy in range(3) for dx in range(3)]
        p = jnp.concatenate(cols, axis=-1).reshape(B * H * W, 9 * Cin)
        w2d = jnp.transpose(w, (2, 3, 1, 0)).reshape(9 * Cin, Cout)
        return jnp.maximum(p @ w2d + b, 0.0).reshape(B, H, W, Cout)

    def pool(x):
        B, H, W, C = x.shape
        return jnp.max(x.reshape(B, H // 2, 2, W // 2, 2, C), axis=(2, 4))

    x = pool(conv(x, params["conv1_w"], params["conv1_b"]))
    x = pool(conv(x, params["conv2_w"], params["conv2_b"]))
    B = x.shape[0]
    x = jnp.transpose(x, (0, 3, 1, 2)).reshape(B, 64 * 7 * 7)   # (C,H,W) flatten
    x = jnp.maximum(x @ params["lin1_w"].T + params["lin1_b"], 0.0)
    y = x @ params["lin2_w"].T + params["lin2_b"]
    return jax.nn.log_softmax(y, axis=1)


if __name__ == "__main__":
    key = jax.random.PRNGKey(0)
    pkey, xkey = jax.random.split(key)
    params = init_params(pkey)
    # Input must be 28x28 (the module's flatten assumes 64*7*7 after two pools).
    x = jax.random.normal(xkey, (2, 1, 28, 28), jnp.float32)    # NCHW, like PyTorch

    out = model_forward(params, x)
    jax.block_until_ready(out)

    ref = reference_forward(params, x)
    assert out.shape == (2, 10)
    assert jnp.allclose(out, ref, atol=2e-4, rtol=2e-4), \
        float(jnp.max(jnp.abs(out - ref)))
    print("KERNEL_OK")
</pallas_src>

<mosaic_0001>
module attributes {stable_mosaic.version = 11 : i64} {
  func.func @conv_relu_pool_kernel(%arg0: i32, %arg1: memref<4x392x9xf32, #tpu.memory_space<vmem>>, %arg2: memref<9x32xf32, #tpu.memory_space<vmem>>, %arg3: memref<1x32xf32, #tpu.memory_space<vmem>>, %arg4: memref<392x32xf32, #tpu.memory_space<vmem>>) attributes {dimension_semantics = [#tpu.dimension_semantics<parallel>], iteration_bounds = array<i64: 1>, scalar_prefetch = 0 : i64, scratch_operands = 0 : i64, tpu.core_type = #tpu.core_type<tc>, window_params = [{transform_indices = @transform_0, window_bounds = array<i64: 4, 392, 9>}, {pipeline_mode = #tpu.pipeline_mode<synchronous>, transform_indices = @transform_1, window_bounds = array<i64: 9, 32>}, {pipeline_mode = #tpu.pipeline_mode<synchronous>, transform_indices = @transform_2, window_bounds = array<i64: 1, 32>}, {transform_indices = @transform_3, window_bounds = array<i64: 392, 32>}]} {
    %c0 = arith.constant 0 : index
    %c0_0 = arith.constant 0 : index
    %0 = vector.load %arg2[%c0, %c0_0] : memref<9x32xf32, #tpu.memory_space<vmem>>, vector<9x32xf32>
    %c0_1 = arith.constant 0 : index
    %c0_2 = arith.constant 0 : index
    %1 = vector.load %arg3[%c0_1, %c0_2] : memref<1x32xf32, #tpu.memory_space<vmem>>, vector<1x32xf32>
    %c0_3 = arith.constant 0 : index
    %c0_4 = arith.constant 0 : index
    %c0_5 = arith.constant 0 : index
    %2 = vector.load %arg1[%c0_3, %c0_4, %c0_5] : memref<4x392x9xf32, #tpu.memory_space<vmem>>, vector<1x392x9xf32>
    %3 = vector.shape_cast %2 : vector<1x392x9xf32> to vector<392x9xf32>
    %cst = arith.constant dense<0.000000e+00> : vector<392x32xf32>
    %4 = tpu.matmul %3, %0, %cst {dimension_numbers = #tpu.dot_dimension_numbers<[1], [0], [0], [1], [0, 0, 1, 1], [], []>} : vector<392x9xf32>, vector<9x32xf32>, vector<392x32xf32> -> vector<392x32xf32>
    %5 = vector.broadcast %1 : vector<1x32xf32> to vector<392x32xf32>
    %6 = arith.addf %4, %5 : vector<392x32xf32>
    %cst_6 = arith.constant 0.000000e+00 : f32
    %7 = vector.broadcast %cst_6 : f32 to vector<392x32xf32>
    %8 = arith.maximumf %6, %7 : vector<392x32xf32>
    %c1 = arith.constant 1 : index
    %c0_7 = arith.constant 0 : index
    %c0_8 = arith.constant 0 : index
    %9 = vector.load %arg1[%c1, %c0_7, %c0_8] : memref<4x392x9xf32, #tpu.memory_space<vmem>>, vector<1x392x9xf32>
    %10 = vector.shape_cast %9 : vector<1x392x9xf32> to vector<392x9xf32>
    %cst_9 = arith.constant dense<0.000000e+00> : vector<392x32xf32>
    %11 = tpu.matmul %10, %0, %cst_9 {dimension_numbers = #tpu.dot_dimension_numbers<[1], [0], [0], [1], [0, 0, 1, 1], [], []>} : vector<392x9xf32>, vector<9x32xf32>, vector<392x32xf32> -> vector<392x32xf32>
    %12 = vector.broadcast %1 : vector<1x32xf32> to vector<392x32xf32>
    %13 = arith.addf %11, %12 : vector<392x32xf32>
    %cst_10 = arith.constant 0.000000e+00 : f32
    %14 = vector.broadcast %cst_10 : f32 to vector<392x32xf32>
    %15 = arith.maximumf %13, %14 : vector<392x32xf32>
    %16 = arith.maximumf %8, %15 : vector<392x32xf32>
    %c2 = arith.constant 2 : index
    %c0_11 = arith.constant 0 : index
    %c0_12 = arith.constant 0 : index
    %17 = vector.load %arg1[%c2, %c0_11, %c0_12] : memref<4x392x9xf32, #tpu.memory_space<vmem>>, vector<1x392x9xf32>
    %18 = vector.shape_cast %17 : vector<1x392x9xf32> to vector<392x9xf32>
    %cst_13 = arith.constant dense<0.000000e+00> : vector<392x32xf32>
    %19 = tpu.matmul %18, %0, %cst_13 {dimension_numbers = #tpu.dot_dimension_numbers<[1], [0], [0], [1], [0, 0, 1, 1], [], []>} : vector<392x9xf32>, vector<9x32xf32>, vector<392x32xf32> -> vector<392x32xf32>
    %20 = vector.broadcast %1 : vector<1x32xf32> to vector<392x32xf32>
    %21 = arith.addf %19, %20 : vector<392x32xf32>
    %cst_14 = arith.constant 0.000000e+00 : f32
    %22 = vector.broadcast %cst_14 : f32 to vector<392x32xf32>
    %23 = arith.maximumf %21, %22 : vector<392x32xf32>
    %24 = arith.maximumf %16, %23 : vector<392x32xf32>
    %c3 = arith.constant 3 : index
    %c0_15 = arith.constant 0 : index
    %c0_16 = arith.constant 0 : index
    %25 = vector.load %arg1[%c3, %c0_15, %c0_16] : memref<4x392x9xf32, #tpu.memory_space<vmem>>, vector<1x392x9xf32>
    %26 = vector.shape_cast %25 : vector<1x392x9xf32> to vector<392x9xf32>
    %cst_17 = arith.constant dense<0.000000e+00> : vector<392x32xf32>
    %27 = tpu.matmul %26, %0, %cst_17 {dimension_numbers = #tpu.dot_dimension_numbers<[1], [0], [0], [1], [0, 0, 1, 1], [], []>} : vector<392x9xf32>, vector<9x32xf32>, vector<392x32xf32> -> vector<392x32xf32>
    %28 = vector.broadcast %1 : vector<1x32xf32> to vector<392x32xf32>
    %29 = arith.addf %27, %28 : vector<392x32xf32>
    %cst_18 = arith.constant 0.000000e+00 : f32
    %30 = vector.broadcast %cst_18 : f32 to vector<392x32xf32>
    %31 = arith.maximumf %29, %30 : vector<392x32xf32>
    %32 = arith.maximumf %24, %31 : vector<392x32xf32>
    %c0_19 = arith.constant 0 : index
    %c0_20 = arith.constant 0 : index
    %33 = vector.load %arg4[%c0_19, %c0_20] : memref<392x32xf32, #tpu.memory_space<vmem>>, vector<392x32xf32>
    tpu.vector_store %arg4[%c0_19, %c0_20], %32 {strides = array<i32>} : memref<392x32xf32, #tpu.memory_space<vmem>>, vector<392x32xf32>,
    return
  }
  func.func @transform_0(%arg0: i32) -> (i32, i32, i32) {
    %c0_i32 = arith.constant 0 : i32
    %c0_i32_0 = arith.constant 0 : i32
    %c0_i32_1 = arith.constant 0 : i32
    return %c0_i32, %arg0, %c0_i32_0 : i32, i32, i32
  }
  func.func @transform_1(%arg0: i32) -> (i32, i32) {
    %c0_i32 = arith.constant 0 : i32
    %c0_i32_0 = arith.constant 0 : i32
    %c0_i32_1 = arith.constant 0 : i32
    return %c0_i32, %c0_i32_0 : i32, i32
  }
  func.func @transform_2(%arg0: i32) -> (i32, i32) {
    %c0_i32 = arith.constant 0 : i32
    %c0_i32_0 = arith.constant 0 : i32
    %c0_i32_1 = arith.constant 0 : i32
    return %c0_i32, %c0_i32_0 : i32, i32
  }
  func.func @transform_3(%arg0: i32) -> (i32, i32) {
    %c0_i32 = arith.constant 0 : i32
    %c0_i32_0 = arith.constant 0 : i32
    return %arg0, %c0_i32 : i32, i32
  }
}

module attributes {stable_mosaic.version = 11 : i64} {
  func.func @conv_relu_pool_kernel(%arg0: i32, %arg1: memref<4x98x288xf32, #tpu.memory_space<vmem>>, %arg2: memref<288x64xf32, #tpu.memory_space<vmem>>, %arg3: memref<1x64xf32, #tpu.memory_space<vmem>>, %arg4: memref<98x64xf32, #tpu.memory_space<vmem>>) attributes {dimension_semantics = [#tpu.dimension_semantics<parallel>], iteration_bounds = array<i64: 1>, scalar_prefetch = 0 : i64, scratch_operands = 0 : i64, tpu.core_type = #tpu.core_type<tc>, window_params = [{transform_indices = @transform_0, window_bounds = array<i64: 4, 98, 288>}, {pipeline_mode = #tpu.pipeline_mode<synchronous>, transform_indices = @transform_1, window_bounds = array<i64: 288, 64>}, {pipeline_mode = #tpu.pipeline_mode<synchronous>, transform_indices = @transform_2, window_bounds = array<i64: 1, 64>}, {transform_indices = @transform_3, window_bounds = array<i64: 98, 64>}]} {
    %c0 = arith.constant 0 : index
    %c0_0 = arith.constant 0 : index
    %0 = vector.load %arg2[%c0, %c0_0] : memref<288x64xf32, #tpu.memory_space<vmem>>, vector<288x64xf32>
    %c0_1 = arith.constant 0 : index
    %c0_2 = arith.constant 0 : index
    %1 = vector.load %arg3[%c0_1, %c0_2] : memref<1x64xf32, #tpu.memory_space<vmem>>, vector<1x64xf32>
    %c0_3 = arith.constant 0 : index
    %c0_4 = arith.constant 0 : index
    %c0_5 = arith.constant 0 : index
    %2 = vector.load %arg1[%c0_3, %c0_4, %c0_5] : memref<4x98x288xf32, #tpu.memory_space<vmem>>, vector<1x98x288xf32>
    %3 = vector.shape_cast %2 : vector<1x98x288xf32> to vector<98x288xf32>
    %cst = arith.constant dense<0.000000e+00> : vector<98x64xf32>
    %4 = tpu.matmul %3, %0, %cst {dimension_numbers = #tpu.dot_dimension_numbers<[1], [0], [0], [1], [0, 0, 1, 1], [], []>} : vector<98x288xf32>, vector<288x64xf32>, vector<98x64xf32> -> vector<98x64xf32>
    %5 = vector.broadcast %1 : vector<1x64xf32> to vector<98x64xf32>
    %6 = arith.addf %4, %5 : vector<98x64xf32>
    %cst_6 = arith.constant 0.000000e+00 : f32
    %7 = vector.broadcast %cst_6 : f32 to vector<98x64xf32>
    %8 = arith.maximumf %6, %7 : vector<98x64xf32>
    %c1 = arith.constant 1 : index
    %c0_7 = arith.constant 0 : index
    %c0_8 = arith.constant 0 : index
    %9 = vector.load %arg1[%c1, %c0_7, %c0_8] : memref<4x98x288xf32, #tpu.memory_space<vmem>>, vector<1x98x288xf32>
    %10 = vector.shape_cast %9 : vector<1x98x288xf32> to vector<98x288xf32>
    %cst_9 = arith.constant dense<0.000000e+00> : vector<98x64xf32>
    %11 = tpu.matmul %10, %0, %cst_9 {dimension_numbers = #tpu.dot_dimension_numbers<[1], [0], [0], [1], [0, 0, 1, 1], [], []>} : vector<98x288xf32>, vector<288x64xf32>, vector<98x64xf32> -> vector<98x64xf32>
    %12 = vector.broadcast %1 : vector<1x64xf32> to vector<98x64xf32>
    %13 = arith.addf %11, %12 : vector<98x64xf32>
    %cst_10 = arith.constant 0.000000e+00 : f32
    %14 = vector.broadcast %cst_10 : f32 to vector<98x64xf32>
    %15 = arith.maximumf %13, %14 : vector<98x64xf32>
    %16 = arith.maximumf %8, %15 : vector<98x64xf32>
    %c2 = arith.constant 2 : index
    %c0_11 = arith.constant 0 : index
    %c0_12 = arith.constant 0 : index
    %17 = vector.load %arg1[%c2, %c0_11, %c0_12] : memref<4x98x288xf32, #tpu.memory_space<vmem>>, vector<1x98x288xf32>
    %18 = vector.shape_cast %17 : vector<1x98x288xf32> to vector<98x288xf32>
    %cst_13 = arith.constant dense<0.000000e+00> : vector<98x64xf32>
    %19 = tpu.matmul %18, %0, %cst_13 {dimension_numbers = #tpu.dot_dimension_numbers<[1], [0], [0], [1], [0, 0, 1, 1], [], []>} : vector<98x288xf32>, vector<288x64xf32>, vector<98x64xf32> -> vector<98x64xf32>
    %20 = vector.broadcast %1 : vector<1x64xf32> to vector<98x64xf32>
    %21 = arith.addf %19, %20 : vector<98x64xf32>
    %cst_14 = arith.constant 0.000000e+00 : f32
    %22 = vector.broadcast %cst_14 : f32 to vector<98x64xf32>
    %23 = arith.maximumf %21, %22 : vector<98x64xf32>
    %24 = arith.maximumf %16, %23 : vector<98x64xf32>
    %c3 = arith.constant 3 : index
    %c0_15 = arith.constant 0 : index
    %c0_16 = arith.constant 0 : index
    %25 = vector.load %arg1[%c3, %c0_15, %c0_16] : memref<4x98x288xf32, #tpu.memory_space<vmem>>, vector<1x98x288xf32>
    %26 = vector.shape_cast %25 : vector<1x98x288xf32> to vector<98x288xf32>
    %cst_17 = arith.constant dense<0.000000e+00> : vector<98x64xf32>
    %27 = tpu.matmul %26, %0, %cst_17 {dimension_numbers = #tpu.dot_dimension_numbers<[1], [0], [0], [1], [0, 0, 1, 1], [], []>} : vector<98x288xf32>, vector<288x64xf32>, vector<98x64xf32> -> vector<98x64xf32>
    %28 = vector.broadcast %1 : vector<1x64xf32> to vector<98x64xf32>
    %29 = arith.addf %27, %28 : vector<98x64xf32>
    %cst_18 = arith.constant 0.000000e+00 : f32
    %30 = vector.broadcast %cst_18 : f32 to vector<98x64xf32>
    %31 = arith.maximumf %29, %30 : vector<98x64xf32>
    %32 = arith.maximumf %24, %31 : vector<98x64xf32>
    %c0_19 = arith.constant 0 : index
    %c0_20 = arith.constant 0 : index
    %33 = vector.load %arg4[%c0_19, %c0_20] : memref<98x64xf32, #tpu.memory_space<vmem>>, vector<98x64xf32>
    tpu.vector_store %arg4[%c0_19, %c0_20], %32 {strides = array<i32>} : memref<98x64xf32, #tpu.memory_space<vmem>>, vector<98x64xf32>,
    return
  }
  func.func @transform_0(%arg0: i32) -> (i32, i32, i32) {
    %c0_i32 = arith.constant 0 : i32
    %c0_i32_0 = arith.constant 0 : i32
    %c0_i32_1 = arith.constant 0 : i32
    return %c0_i32, %arg0, %c0_i32_0 : i32, i32, i32
  }
  func.func @transform_1(%arg0: i32) -> (i32, i32) {
    %c0_i32 = arith.constant 0 : i32
    %c0_i32_0 = arith.constant 0 : i32
    %c0_i32_1 = arith.constant 0 : i32
    return %c0_i32, %c0_i32_0 : i32, i32
  }
  func.func @transform_2(%arg0: i32) -> (i32, i32) {
    %c0_i32 = arith.constant 0 : i32
    %c0_i32_0 = arith.constant 0 : i32
    %c0_i32_1 = arith.constant 0 : i32
    return %c0_i32, %c0_i32_0 : i32, i32
  }
  func.func @transform_3(%arg0: i32) -> (i32, i32) {
    %c0_i32 = arith.constant 0 : i32
    %c0_i32_0 = arith.constant 0 : i32
    return %arg0, %c0_i32 : i32, i32
  }
}

module attributes {stable_mosaic.version = 11 : i64} {
  func.func @mlp_head_kernel(%arg0: i32, %arg1: memref<2x3136xf32, #tpu.memory_space<vmem>>, %arg2: memref<3136x128xf32, #tpu.memory_space<vmem>>, %arg3: memref<1x128xf32, #tpu.memory_space<vmem>>, %arg4: memref<128x10xf32, #tpu.memory_space<vmem>>, %arg5: memref<1x10xf32, #tpu.memory_space<vmem>>, %arg6: memref<2x10xf32, #tpu.memory_space<vmem>>) attributes {dimension_semantics = [#tpu.dimension_semantics<parallel>], iteration_bounds = array<i64: 1>, scalar_prefetch = 0 : i64, scratch_operands = 0 : i64, tpu.core_type = #tpu.core_type<tc>, window_params = [{transform_indices = @transform_0, window_bounds = array<i64: 2, 3136>}, {pipeline_mode = #tpu.pipeline_mode<synchronous>, transform_indices = @transform_1, window_bounds = array<i64: 3136, 128>}, {pipeline_mode = #tpu.pipeline_mode<synchronous>, transform_indices = @transform_2, window_bounds = array<i64: 1, 128>}, {pipeline_mode = #tpu.pipeline_mode<synchronous>, transform_indices = @transform_3, window_bounds = array<i64: 128, 10>}, {pipeline_mode = #tpu.pipeline_mode<synchronous>, transform_indices = @transform_4, window_bounds = array<i64: 1, 10>}, {transform_indices = @transform_5, window_bounds = array<i64: 2, 10>}]} {
    %c0 = arith.constant 0 : index
    %c0_0 = arith.constant 0 : index
    %0 = vector.load %arg1[%c0, %c0_0] : memref<2x3136xf32, #tpu.memory_space<vmem>>, vector<2x3136xf32>
    %c0_1 = arith.constant 0 : index
    %c0_2 = arith.constant 0 : index
    %1 = vector.load %arg2[%c0_1, %c0_2] : memref<3136x128xf32, #tpu.memory_space<vmem>>, vector<3136x128xf32>
    %cst = arith.constant dense<0.000000e+00> : vector<2x128xf32>
    %2 = tpu.matmul %0, %1, %cst {dimension_numbers = #tpu.dot_dimension_numbers<[1], [0], [0], [1], [0, 0, 1, 1], [], []>} : vector<2x3136xf32>, vector<3136x128xf32>, vector<2x128xf32> -> vector<2x128xf32>
    %c0_3 = arith.constant 0 : index
    %c0_4 = arith.constant 0 : index
    %3 = vector.load %arg3[%c0_3, %c0_4] : memref<1x128xf32, #tpu.memory_space<vmem>>, vector<1x128xf32>
    %4 = vector.broadcast %3 : vector<1x128xf32> to vector<2x128xf32>
    %5 = arith.addf %2, %4 : vector<2x128xf32>
    %cst_5 = arith.constant 0.000000e+00 : f32
    %6 = vector.broadcast %cst_5 : f32 to vector<2x128xf32>
    %7 = arith.maximumf %5, %6 : vector<2x128xf32>
    %c0_6 = arith.constant 0 : index
    %c0_7 = arith.constant 0 : index
    %8 = vector.load %arg4[%c0_6, %c0_7] : memref<128x10xf32, #tpu.memory_space<vmem>>, vector<128x10xf32>
    %cst_8 = arith.constant dense<0.000000e+00> : vector<2x10xf32>
    %9 = tpu.matmul %7, %8, %cst_8 {dimension_numbers = #tpu.dot_dimension_numbers<[1], [0], [0], [1], [0, 0, 1, 1], [], []>} : vector<2x128xf32>, vector<128x10xf32>, vector<2x10xf32> -> vector<2x10xf32>
    %c0_9 = arith.constant 0 : index
    %c0_10 = arith.constant 0 : index
    %10 = vector.load %arg5[%c0_9, %c0_10] : memref<1x10xf32, #tpu.memory_space<vmem>>, vector<1x10xf32>
    %11 = vector.broadcast %10 : vector<1x10xf32> to vector<2x10xf32>
    %12 = arith.addf %9, %11 : vector<2x10xf32>
    %cst_11 = arith.constant dense<0xFF800000> : vector<2xf32>
    %13 = vector.multi_reduction <maximumf>, %12, %cst_11 [1] : vector<2x10xf32> to vector<2xf32>
    %14 = vector.shape_cast %13 : vector<2xf32> to vector<2x1xf32>
    %15 = vector.broadcast %14 : vector<2x1xf32> to vector<2x10xf32>
    %16 = arith.subf %12, %15 : vector<2x10xf32>
    %17 = math.exp %16 : vector<2x10xf32>
    %cst_12 = arith.constant dense<0.000000e+00> : vector<2xf32>
    %18 = vector.multi_reduction <add>, %17, %cst_12 [1] : vector<2x10xf32> to vector<2xf32>
    %19 = vector.shape_cast %18 : vector<2xf32> to vector<2x1xf32>
    %20 = math.log %19 : vector<2x1xf32>
    %21 = vector.broadcast %20 : vector<2x1xf32> to vector<2x10xf32>
    %22 = arith.subf %16, %21 : vector<2x10xf32>
    %c0_13 = arith.constant 0 : index
    %c0_14 = arith.constant 0 : index
    %23 = vector.load %arg6[%c0_13, %c0_14] : memref<2x10xf32, #tpu.memory_space<vmem>>, vector<2x10xf32>
    tpu.vector_store %arg6[%c0_13, %c0_14], %22 {strides = array<i32>} : memref<2x10xf32, #tpu.memory_space<vmem>>, vector<2x10xf32>,
    return
  }
  func.func @transform_0(%arg0: i32) -> (i32, i32) {
    %c0_i32 = arith.constant 0 : i32
    %c0_i32_0 = arith.constant 0 : i32
    return %arg0, %c0_i32 : i32, i32
  }
  func.func @transform_1(%arg0: i32) -> (i32, i32) {
    %c0_i32 = arith.constant 0 : i32
    %c0_i32_0 = arith.constant 0 : i32
    %c0_i32_1 = arith.constant 0 : i32
    return %c0_i32, %c0_i32_0 : i32, i32
  }
  func.func @transform_2(%arg0: i32) -> (i32, i32) {
    %c0_i32 = arith.constant 0 : i32
    %c0_i32_0 = arith.constant 0 : i32
    %c0_i32_1 = arith.constant 0 : i32
    return %c0_i32, %c0_i32_0 : i32, i32
  }
  func.func @transform_3(%arg0: i32) -> (i32, i32) {
    %c0_i32 = arith.constant 0 : i32
    %c0_i32_0 = arith.constant 0 : i32
    %c0_i32_1 = arith.constant 0 : i32
    return %c0_i32, %c0_i32_0 : i32, i32
  }
  func.func @transform_4(%arg0: i32) -> (i32, i32) {
    %c0_i32 = arith.constant 0 : i32
    %c0_i32_0 = arith.constant 0 : i32
    %c0_i32_1 = arith.constant 0 : i32
    return %c0_i32, %c0_i32_0 : i32, i32
  }
  func.func @transform_5(%arg0: i32) -> (i32, i32) {
    %c0_i32 = arith.constant 0 : i32
    %c0_i32_0 = arith.constant 0 : i32
    return %arg0, %c0_i32 : i32, i32
  }
}

</mosaic_0001>

<llo_original>
// kernel: model_forward.3
$region0: #{model_forward.3}
  #allocation0 [shape = 'u32[]', space=smem, size = 0x4, offset = 0x4, fixed_abs, tag = 'smem constant byte address 0x4 - core index']
  #allocation1 [shape = 'u32[72,128]{1,0:T(1,128)}', space=vmem, size = 0x9000, scoped, tag = 'internal scratch']
  %s0 = inlined_call_operand.vmem [shape: f32[4,392,9], index: 0, kind: input, shape index: {}]
  %s1 = inlined_call_operand.vmem [shape: f32[9,32], index: 1, kind: input, shape index: {}]
  %s2 = inlined_call_operand.vmem [shape: f32[1,32], index: 2, kind: input, shape index: {}]
  %s3 = inlined_call_operand.vmem [shape: f32[392,32], index: 3, kind: output, shape index: {}]
  %s4 = sld [smem:[#allocation0]]
  $region22: #{model_forward.3} parent=0
    _
  %s6 = ssub.s32 1, %s4
  %s7 = scalar_select 0, %s6, %s4
  // Predicated region
  $region2: #{model_forward.3} parent=0 // pred_check
    _
  $region3: #{model_forward.3} parent=0 // pred_check_branch
    %9 = sbr.rel (0) target = $region5
  $region4: #{model_forward.3} parent=0 // pred_region
    _
  $region5: #{model_forward.3} parent=0 // pred_fallthru
    _
  // Predicated region
  $region6: #{model_forward.3} parent=0 // pred_check
    _
  $region7: #{model_forward.3} parent=0 // pred_check_branch
    %11 = sbr.rel (0) target = $region9
  $region8: #{model_forward.3} parent=0 // pred_region
    _
  $region9: #{model_forward.3} parent=0 // pred_fallthru
    _
  // Predicated region
  $region10: #{model_forward.3} parent=0 // pred_check
    _
  $region11: #{model_forward.3} parent=0 // pred_check_branch
    %13 = sbr.rel (0) target = $region13
  $region12: #{model_forward.3} parent=0 // pred_region
    _
  $region13: #{model_forward.3} parent=0 // pred_fallthru
    _
  %v14 = vld [vmem:[%s1] sm:$0xff]
  %v15 = vld [vmem:[%s1 + $0x8] sm:$0x1]
  %v16 = vld [vmem:[%s2] sm:$0x1]
  %v17 = vld [vmem:[%s0] sm:$0xff]
  %v18 = vld [vmem:[%s0 + $0x8] sm:$0xff]
  %v19 = vld [vmem:[%s0 + $0x10] sm:$0xff]
  %v20 = vld [vmem:[%s0 + $0x18] sm:$0xff]
  %v21 = vld [vmem:[%s0 + $0x20] sm:$0xff]
  %v22 = vld [vmem:[%s0 + $0x28] sm:$0xff]
  %v23 = vld [vmem:[%s0 + $0x30] sm:$0xff]
  %v24 = vld [vmem:[%s0 + $0x38] sm:$0xff]
  %v25 = vld [vmem:[%s0 + $0x40] sm:$0xff]
  %v26 = vld [vmem:[%s0 + $0x48] sm:$0xff]
  %v27 = vld [vmem:[%s0 + $0x50] sm:$0xff]
  %v28 = vld [vmem:[%s0 + $0x58] sm:$0xff]
  %v29 = vld [vmem:[%s0 + $0x60] sm:$0xff]
  %v30 = vld [vmem:[%s0 + $0x68] sm:$0xff]
  %v31 = vld [vmem:[%s0 + $0x70] sm:$0xff]
  %v32 = vld [vmem:[%s0 + $0x78] sm:$0xff]
  %v33 = vld [vmem:[%s0 + $0x80] sm:$0xff]
  %v34 = vld [vmem:[%s0 + $0x88] sm:$0xff]
  %v35 = vld [vmem:[%s0 + $0x90] sm:$0xff]
  %v36 = vld [vmem:[%s0 + $0x98] sm:$0xff]
  %v37 = vld [vmem:[%s0 + $0xa0] sm:$0xff]
  %v38 = vld [vmem:[%s0 + $0xa8] sm:$0xff]
  %v39 = vld [vmem:[%s0 + $0xb0] sm:$0xff]
  %v40 = vld [vmem:[%s0 + $0xb8] sm:$0xff]
  %v41 = vld [vmem:[%s0 + $0xc0] sm:$0xff]
  %v42 = vld [vmem:[%s0 + $0xc8] sm:$0xff]
  %v43 = vld [vmem:[%s0 + $0xd0] sm:$0xff]
  %v44 = vld [vmem:[%s0 + $0xd8] sm:$0xff]
  %v45 = vld [vmem:[%s0 + $0xe0] sm:$0xff]
  %v46 = vld [vmem:[%s0 + $0xe8] sm:$0xff]
  %v47 = vld [vmem:[%s0 + $0xf0] sm:$0xff]
  %v48 = vld [vmem:[%s0 + $0xf8] sm:$0xff]
  %v49 = vld [vmem:[%s0 + $0x100] sm:$0xff]
  %v50 = vld [vmem:[%s0 + $0x108] sm:$0xff]
  %v51 = vld [vmem:[%s0 + $0x110] sm:$0xff]
  %v52 = vld [vmem:[%s0 + $0x118] sm:$0xff]
  %v53 = vld [vmem:[%s0 + $0x120] sm:$0xff]
  %v54 = vld [vmem:[%s0 + $0x128] sm:$0xff]
  %v55 = vld [vmem:[%s0 + $0x130] sm:$0xff]
  %v56 = vld [vmem:[%s0 + $0x138] sm:$0xff]
  %v57 = vld [vmem:[%s0 + $0x140] sm:$0xff]
  %v58 = vld [vmem:[%s0 + $0x148] sm:$0xff]
  %v59 = vld [vmem:[%s0 + $0x150] sm:$0xff]
  %v60 = vld [vmem:[%s0 + $0x158] sm:$0xff]
  %v61 = vld [vmem:[%s0 + $0x160] sm:$0xff]
  %v62 = vld [vmem:[%s0 + $0x168] sm:$0xff]
  %v63 = vld [vmem:[%s0 + $0x170] sm:$0xff]
  %v64 = vld [vmem:[%s0 + $0x178] sm:$0xff]
  %v65 = vld [vmem:[%s0 + $0x180] sm:$0xff]
  %v67 = vperm.slane %v16, 0
  %vm69 = vcmask 72704
  %v71 = vsel %vm69, %v17, 0
  %v74 = vsel %vm69, %v18, 0
  %v77 = vsel %vm69, %v19, 0
  %v80 = vsel %vm69, %v20, 0
  %v83 = vsel %vm69, %v21, 0
  %v86 = vsel %vm69, %v22, 0
  %v89 = vsel %vm69, %v23, 0
  %v92 = vsel %vm69, %v24, 0
  %v95 = vsel %vm69, %v25, 0
  %v98 = vsel %vm69, %v26, 0
  %v101 = vsel %vm69, %v27, 0
  %v104 = vsel %vm69, %v28, 0
  %v107 = vsel %vm69, %v29, 0
  %v110 = vsel %vm69, %v30, 0
  %v113 = vsel %vm69, %v31, 0
  %v116 = vsel %vm69, %v32, 0
  %v119 = vsel %vm69, %v33, 0
  %v122 = vsel %vm69, %v34, 0
  %v125 = vsel %vm69, %v35, 0
  %v128 = vsel %vm69, %v36, 0
  %v131 = vsel %vm69, %v37, 0
  %v134 = vsel %vm69, %v38, 0
  %v137 = vsel %vm69, %v39, 0
  %v140 = vsel %vm69, %v40, 0
  %v143 = vsel %vm69, %v41, 0
  %v146 = vsel %vm69, %v42, 0
  %v149 = vsel %vm69, %v43, 0
  %v152 = vsel %vm69, %v44, 0
  %v155 = vsel %vm69, %v45, 0
  %v158 = vsel %vm69, %v46, 0
  %v161 = vsel %vm69, %v47, 0
  %v164 = vsel %vm69, %v48, 0
  %v167 = vsel %vm69, %v49, 0
  %v170 = vsel %vm69, %v50, 0
  %v173 = vsel %vm69, %v51, 0
  %v176 = vsel %vm69, %v52, 0
  %v179 = vsel %vm69, %v53, 0
  %v182 = vsel %vm69, %v54, 0
  %v185 = vsel %vm69, %v55, 0
  %v188 = vsel %vm69, %v56, 0
  %v191 = vsel %vm69, %v57, 0
  %v194 = vsel %vm69, %v58, 0
  %v197 = vsel %vm69, %v59, 0
  %v200 = vsel %vm69, %v60, 0
  %v203 = vsel %vm69, %v61, 0
  %v206 = vsel %vm69, %v62, 0
  %v209 = vsel %vm69, %v63, 0
  %v212 = vsel %vm69, %v64, 0
  %v215 = vsel %vm69, %v65, 0
  %vm217 = vcmask 1040384
  %v219 = vsel %vm217, %v15, 0
  %221 = vmatpush.msra.mxu0 0.0
  %222 = vmatpush.msra.mxu0 0.0
  %223 = vmatpush.msra.mxu0 0.0
  %224 = vmatpush.msra.mxu0 0.0
  %225 = vmatpush.msra.mxu0 0.0
  %226 = vmatpush.msra.mxu0 0.0
  %227 = vmatpush.msra.mxu0 0.0
  %228 = vmatpush.msra.mxu0 0.0
  %229 = vmatpush.msra.mxu0 0.0
  %230 = vmatpush.msra.mxu0 0.0
  %231 = vmatpush.msra.mxu0 0.0
  %232 = vmatpush.msra.mxu0 0.0
  %233 = vmatpush.msra.mxu0 0.0
  %234 = vmatpush.msra.mxu0 0.0
  %235 = vmatpush.msra.mxu0 %v219
  %236 = vmatpush.msra.mxu0 %v14
  %237 = vmatmul.f32.gmra.mxu0 %v71
  %v238 = vpop.f32.mrf.mxu0
  %v239 = vadd.f32 %v67, %v238
  %240 = vmatmul.f32.gmra.mxu0 %v74
  %v241 = vpop.f32.mrf.mxu0
  %v242 = vadd.f32 %v67, %v241
  %243 = vmatmul.f32.gmra.mxu0 %v77
  %v244 = vpop.f32.mrf.mxu0
  %v245 = vadd.f32 %v67, %v244
  %246 = vmatmul.f32.gmra.mxu0 %v80
  %v247 = vpop.f32.mrf.mxu0
  %v248 = vadd.f32 %v67, %v247
  %249 = vmatmul.f32.gmra.mxu0 %v83
  %v250 = vpop.f32.mrf.mxu0
  %v251 = vadd.f32 %v67, %v250
  %252 = vmatmul.f32.gmra.mxu0 %v86
  %v253 = vpop.f32.mrf.mxu0
  %v254 = vadd.f32 %v67, %v253
  %255 = vmatmul.f32.gmra.mxu0 %v89
  %v256 = vpop.f32.mrf.mxu0
  %v257 = vadd.f32 %v67, %v256
  %258 = vmatmul.f32.gmra.mxu0 %v92
  %v259 = vpop.f32.mrf.mxu0
  %v260 = vadd.f32 %v67, %v259
  %261 = vmatmul.f32.gmra.mxu0 %v95
  %v262 = vpop.f32.mrf.mxu0
  %v263 = vadd.f32 %v67, %v262
  %264 = vmatmul.f32.gmra.mxu0 %v98
  %v265 = vpop.f32.mrf.mxu0
  %v266 = vadd.f32 %v67, %v265
  %267 = vmatmul.f32.gmra.mxu0 %v101
  %v268 = vpop.f32.mrf.mxu0
  %v269 = vadd.f32 %v67, %v268
  %270 = vmatmul.f32.gmra.mxu0 %v104
  %v271 = vpop.f32.mrf.mxu0
  %v272 = vadd.f32 %v67, %v271
  %273 = vmatmul.f32.gmra.mxu0 %v107
  %v274 = vpop.f32.mrf.mxu0
  %v275 = vadd.f32 %v67, %v274
  %276 = vmatmul.f32.gmra.mxu0 %v110
  %v277 = vpop.f32.mrf.mxu0
  %v278 = vadd.f32 %v67, %v277
  %279 = vmatmul.f32.gmra.mxu0 %v113
  %v280 = vpop.f32.mrf.mxu0
  %v281 = vadd.f32 %v67, %v280
  %282 = vmatmul.f32.gmra.mxu0 %v116
  %v283 = vpop.f32.mrf.mxu0
  %v284 = vadd.f32 %v67, %v283
  %285 = vmatmul.f32.gmra.mxu0 %v119
  %v286 = vpop.f32.mrf.mxu0
  %v287 = vadd.f32 %v67, %v286
  %288 = vmatmul.f32.gmra.mxu0 %v122
  %v289 = vpop.f32.mrf.mxu0
  %v290 = vadd.f32 %v67, %v289
  %291 = vmatmul.f32.gmra.mxu0 %v125
  %v292 = vpop.f32.mrf.mxu0
  %v293 = vadd.f32 %v67, %v292
  %294 = vmatmul.f32.gmra.mxu0 %v128
  %v295 = vpop.f32.mrf.mxu0
  %v296 = vadd.f32 %v67, %v295
  %297 = vmatmul.f32.gmra.mxu0 %v131
  %v298 = vpop.f32.mrf.mxu0
  %v299 = vadd.f32 %v67, %v298
  %300 = vmatmul.f32.gmra.mxu0 %v134
  %v301 = vpop.f32.mrf.mxu0
  %v302 = vadd.f32 %v67, %v301
  %303 = vmatmul.f32.gmra.mxu0 %v137
  %v304 = vpop.f32.mrf.mxu0
  %v305 = vadd.f32 %v67, %v304
  %306 = vmatmul.f32.gmra.mxu0 %v140
  %v307 = vpop.f32.mrf.mxu0
  %v308 = vadd.f32 %v67, %v307
  %309 = vmatmul.f32.gmra.mxu0 %v143
  %v310 = vpop.f32.mrf.mxu0
  %v311 = vadd.f32 %v67, %v310
  %312 = vmatmul.f32.gmra.mxu0 %v146
  %v313 = vpop.f32.mrf.mxu0
  %v314 = vadd.f32 %v67, %v313
  %315 = vmatmul.f32.gmra.mxu0 %v149
  %v316 = vpop.f32.mrf.mxu0
  %v317 = vadd.f32 %v67, %v316
  %318 = vmatmul.f32.gmra.mxu0 %v152
  %v319 = vpop.f32.mrf.mxu0
  %v320 = vadd.f32 %v67, %v319
  %321 = vmatmul.f32.gmra.mxu0 %v155
  %v322 = vpop.f32.mrf.mxu0
  %v323 = vadd.f32 %v67, %v322
  %324 = vmatmul.f32.gmra.mxu0 %v158
  %v325 = vpop.f32.mrf.mxu0
  %v326 = vadd.f32 %v67, %v325
  %327 = vmatmul.f32.gmra.mxu0 %v161
  %v328 = vpop.f32.mrf.mxu0
  %v329 = vadd.f32 %v67, %v328
  %330 = vmatmul.f32.gmra.mxu0 %v164
  %v331 = vpop.f32.mrf.mxu0
  %v332 = vadd.f32 %v67, %v331
  %333 = vmatmul.f32.gmra.mxu0 %v167
  %v334 = vpop.f32.mrf.mxu0
  %v335 = vadd.f32 %v67, %v334
  %336 = vmatmul.f32.gmra.mxu0 %v170
  %v337 = vpop.f32.mrf.mxu0
  %v338 = vadd.f32 %v67, %v337
  %339 = vmatmul.f32.gmra.mxu0 %v173
  %v340 = vpop.f32.mrf.mxu0
  %v341 = vadd.f32 %v67, %v340
  %342 = vmatmul.f32.gmra.mxu0 %v176
  %v343 = vpop.f32.mrf.mxu0
  %v344 = vadd.f32 %v67, %v343
  %345 = vmatmul.f32.gmra.mxu0 %v179
  %v346 = vpop.f32.mrf.mxu0
  %v347 = vadd.f32 %v67, %v346
  %348 = vmatmul.f32.gmra.mxu0 %v182
  %v349 = vpop.f32.mrf.mxu0
  %v350 = vadd.f32 %v67, %v349
  %351 = vmatmul.f32.gmra.mxu0 %v185
  %v352 = vpop.f32.mrf.mxu0
  %v353 = vadd.f32 %v67, %v352
  %354 = vmatmul.f32.gmra.mxu0 %v188
  %v355 = vpop.f32.mrf.mxu0
  %v356 = vadd.f32 %v67, %v355
  %357 = vmatmul.f32.gmra.mxu0 %v191
  %v358 = vpop.f32.mrf.mxu0
  %v359 = vadd.f32 %v67, %v358
  %360 = vmatmul.f32.gmra.mxu0 %v194
  %v361 = vpop.f32.mrf.mxu0
  %v362 = vadd.f32 %v67, %v361
  %363 = vmatmul.f32.gmra.mxu0 %v197
  %v364 = vpop.f32.mrf.mxu0
  %v365 = vadd.f32 %v67, %v364
  %366 = vmatmul.f32.gmra.mxu0 %v200
  %v367 = vpop.f32.mrf.mxu0
  %v368 = vadd.f32 %v67, %v367
  %369 = vmatmul.f32.gmra.mxu0 %v203
  %v370 = vpop.f32.mrf.mxu0
  %v371 = vadd.f32 %v67, %v370
  %372 = vmatmul.f32.gmra.mxu0 %v206
  %v373 = vpop.f32.mrf.mxu0
  %v374 = vadd.f32 %v67, %v373
  %375 = vmatmul.f32.gmra.mxu0 %v209
  %v376 = vpop.f32.mrf.mxu0
  %v377 = vadd.f32 %v67, %v376
  %378 = vmatmul.f32.gmra.mxu0 %v212
  %v379 = vpop.f32.mrf.mxu0
  %v380 = vadd.f32 %v67, %v379
  %381 = vmatmul.f32.gmra.mxu0 %v215
  %v382 = vpop.f32.mrf.mxu0
  %v383 = vadd.f32 %v67, %v382
  %384 = vdwg.mxu0
  %v385 = vmax.f32 %v239, 0.0
  %v386 = vmax.f32 %v242, 0.0
  %v387 = vmax.f32 %v245, 0.0
  %v388 = vmax.f32 %v248, 0.0
  %v389 = vmax.f32 %v251, 0.0
  %v390 = vmax.f32 %v254, 0.0
  %v391 = vmax.f32 %v257, 0.0
  %v392 = vmax.f32 %v260, 0.0
  %v393 = vmax.f32 %v263, 0.0
  %v394 = vmax.f32 %v266, 0.0
  %v395 = vmax.f32 %v269, 0.0
  %v396 = vmax.f32 %v272, 0.0
  %v397 = vmax.f32 %v275, 0.0
  %v398 = vmax.f32 %v278, 0.0
  %v399 = vmax.f32 %v281, 0.0
  %v400 = vmax.f32 %v284, 0.0
  %v401 = vmax.f32 %v287, 0.0
  %v402 = vmax.f32 %v290, 0.0
  %v403 = vmax.f32 %v293, 0.0
  %v404 = vmax.f32 %v296, 0.0
  %v405 = vmax.f32 %v299, 0.0
  %v406 = vmax.f32 %v302, 0.0
  %v407 = vmax.f32 %v305, 0.0
  %v408 = vmax.f32 %v308, 0.0
  %v409 = vmax.f32 %v311, 0.0
  %v410 = vmax.f32 %v314, 0.0
  %v411 = vmax.f32 %v317, 0.0
  %v412 = vmax.f32 %v320, 0.0
  %v413 = vmax.f32 %v323, 0.0
  %v414 = vmax.f32 %v326, 0.0
  %v415 = vmax.f32 %v329, 0.0
  %v416 = vmax.f32 %v332, 0.0
  %v417 = vmax.f32 %v335, 0.0
  %v418 = vmax.f32 %v338, 0.0
  %v419 = vmax.f32 %v341, 0.0
  %v420 = vmax.f32 %v344, 0.0
  %v421 = vmax.f32 %v347, 0.0
  %v422 = vmax.f32 %v350, 0.0
  %v423 = vmax.f32 %v353, 0.0
  %v424 = vmax.f32 %v356, 0.0
  %v425 = vmax.f32 %v359, 0.0
  %v426 = vmax.f32 %v362, 0.0
  %v427 = vmax.f32 %v365, 0.0
  %v428 = vmax.f32 %v368, 0.0
  %v429 = vmax.f32 %v371, 0.0
  %v430 = vmax.f32 %v374, 0.0
  %v431 = vmax.f32 %v377, 0.0
  %v432 = vmax.f32 %v380, 0.0
  %v433 = vmax.f32 %v383, 0.0
  %s434 = scalar_lea.vmem %s0, 392
  %v435 = vld [vmem:[%s434] sm:$0xff]
  %v436 = vld [vmem:[%s434 + $0x8] sm:$0xff]
  %v437 = vld [vmem:[%s434 + $0x10] sm:$0xff]
  %v438 = vld [vmem:[%s434 + $0x18] sm:$0xff]
  %v439 = vld [vmem:[%s434 + $0x20] sm:$0xff]
  %v440 = vld [vmem:[%s434 + $0x28] sm:$0xff]
  %v441 = vld [vmem:[%s434 + $0x30] sm:$0xff]
  %v442 = vld [vmem:[%s434 + $0x38] sm:$0xff]
  %v443 = vld [vmem:[%s434 + $0x40] sm:$0xff]
  %v444 = vld [vmem:[%s434 + $0x48] sm:$0xff]
  %v445 = vld [vmem:[%s434 + $0x50] sm:$0xff]
  %v446 = vld [vmem:[%s434 + $0x58] sm:$0xff]
  %v447 = vld [vmem:[%s434 + $0x60] sm:$0xff]
  %v448 = vld [vmem:[%s434 + $0x68] sm:$0xff]
  %v449 = vld [vmem:[%s434 + $0x70] sm:$0xff]
  %v450 = vld [vmem:[%s434 + $0x78] sm:$0xff]
  %v451 = vld [vmem:[%s434 + $0x80] sm:$0xff]
  %v452 = vld [vmem:[%s434 + $0x88] sm:$0xff]
  %v453 = vld [vmem:[%s434 + $0x90] sm:$0xff]
  %v454 = vld [vmem:[%s434 + $0x98] sm:$0xff]
  %v455 = vld [vmem:[%s434 + $0xa0] sm:$0xff]
  %v456 = vld [vmem:[%s434 + $0xa8] sm:$0xff]
  %v457 = vld [vmem:[%s434 + $0xb0] sm:$0xff]
  %v458 = vld [vmem:[%s434 + $0xb8] sm:$0xff]
  %v459 = vld [vmem:[%s434 + $0xc0] sm:$0xff]
  %v460 = vld [vmem:[%s434 + $0xc8] sm:$0xff]
  %v461 = vld [vmem:[%s434 + $0xd0] sm:$0xff]
  %v462 = vld [vmem:[%s434 + $0xd8] sm:$0xff]
  %v463 = vld [vmem:[%s434 + $0xe0] sm:$0xff]
  %v464 = vld [vmem:[%s434 + $0xe8] sm:$0xff]
  %v465 = vld [vmem:[%s434 + $0xf0] sm:$0xff]
  %v466 = vld [vmem:[%s434 + $0xf8] sm:$0xff]
  %v467 = vld [vmem:[%s434 + $0x100] sm:$0xff]
  %v468 = vld [vmem:[%s434 + $0x108] sm:$0xff]
  %v469 = vld [vmem:[%s434 + $0x110] sm:$0xff]
  %v470 = vld [vmem:[%s434 + $0x118] sm:$0xff]
  %v471 = vld [vmem:[%s434 + $0x120] sm:$0xff]
  %v472 = vld [vmem:[%s434 + $0x128] sm:$0xff]
  %v473 = vld [vmem:[%s434 + $0x130] sm:$0xff]
  %v474 = vld [vmem:[%s434 + $0x138] sm:$0xff]
  %v475 = vld [vmem:[%s434 + $0x140] sm:$0xff]
  %v476 = vld [vmem:[%s434 + $0x148] sm:$0xff]
  %v477 = vld [vmem:[%s434 + $0x150] sm:$0xff]
  %v478 = vld [vmem:[%s434 + $0x158] sm:$0xff]
  %v479 = vld [vmem:[%s434 + $0x160] sm:$0xff]
  %v480 = vld [vmem:[%s434 + $0x168] sm:$0xff]
  %v481 = vld [vmem:[%s434 + $0x170] sm:$0xff]
  %v482 = vld [vmem:[%s434 + $0x178] sm:$0xff]
  %v483 = vld [vmem:[%s434 + $0x180] sm:$0xff]
  %v485 = vsel %vm69, %v435, 0
  %v488 = vsel %vm69, %v436, 0
  %v491 = vsel %vm69, %v437, 0
  %v494 = vsel %vm69, %v438, 0
  %v497 = vsel %vm69, %v439, 0
  %v500 = vsel %vm69, %v440, 0
  %v503 = vsel %vm69, %v441, 0
  %v506 = vsel %vm69, %v442, 0
  %v509 = vsel %vm69, %v443, 0
  %v512 = vsel %vm69, %v444, 0
  %v515 = vsel %vm69, %v445, 0
  %v518 = vsel %vm69, %v446, 0
  %v521 = vsel %vm69, %v447, 0
  %v524 = vsel %vm69, %v448, 0
  %v527 = vsel %vm69, %v449, 0
  %v530 = vsel %vm69, %v450, 0
  %v533 = vsel %vm69, %v451, 0
  %v536 = vsel %vm69, %v452, 0
  %v539 = vsel %vm69, %v453, 0
  %v542 = vsel %vm69, %v454, 0
  %v545 = vsel %vm69, %v455, 0
  %v548 = vsel %vm69, %v456, 0
  %v551 = vsel %vm69, %v457, 0
  %v554 = vsel %vm69, %v458, 0
  %v557 = vsel %vm69, %v459, 0
  %v560 = vsel %vm69, %v460, 0
  %v563 = vsel %vm69, %v461, 0
  %v566 = vsel %vm69, %v462, 0
  %v569 = vsel %vm69, %v463, 0
  %v572 = vsel %vm69, %v464, 0
  %v575 = vsel %vm69, %v465, 0
  %v578 = vsel %vm69, %v466, 0
  %v581 = vsel %vm69, %v467, 0
  %v584 = vsel %vm69, %v468, 0
  %v587 = vsel %vm69, %v469, 0
  %v590 = vsel %vm69, %v470, 0
  %v593 = vsel %vm69, %v471, 0
  %v596 = vsel %vm69, %v472, 0
  %v599 = vsel %vm69, %v473, 0
  %v602 = vsel %vm69, %v474, 0
  %v605 = vsel %vm69, %v475, 0
  %v608 = vsel %vm69, %v476, 0
  %v611 = vsel %vm69, %v477, 0
  %v614 = vsel %vm69, %v478, 0
  %v617 = vsel %vm69, %v479, 0
  %v620 = vsel %vm69, %v480, 0
  %v623 = vsel %vm69, %v481, 0
  %v626 = vsel %vm69, %v482, 0
  %v629 = vsel %vm69, %v483, 0
  %631 = vmatpush.msra.mxu0 0.0
  %632 = vmatpush.msra.mxu0 0.0
  %633 = vmatpush.msra.mxu0 0.0
  %634 = vmatpush.msra.mxu0 0.0
  %635 = vmatpush.msra.mxu0 0.0
  %636 = vmatpush.msra.mxu0 0.0
  %637 = vmatpush.msra.mxu0 0.0
  %638 = vmatpush.msra.mxu0 0.0
  %639 = vmatpush.msra.mxu0 0.0
  %640 = vmatpush.msra.mxu0 0.0
  %641 = vmatpush.msra.mxu0 0.0
  %642 = vmatpush.msra.mxu0 0.0
  %643 = vmatpush.msra.mxu0 0.0
  %644 = vmatpush.msra.mxu0 0.0
  %645 = vmatpush.msra.mxu0 %v219
  %646 = vmatpush.msra.mxu0 %v14
  %647 = vmatmul.f32.gmra.mxu0 %v485
  %v648 = vpop.f32.mrf.mxu0
  %v649 = vadd.f32 %v67, %v648
  %650 = vmatmul.f32.gmra.mxu0 %v488
  %v651 = vpop.f32.mrf.mxu0
  %v652 = vadd.f32 %v67, %v651
  %653 = vmatmul.f32.gmra.mxu0 %v491
  %v654 = vpop.f32.mrf.mxu0
  %v655 = vadd.f32 %v67, %v654
  %656 = vmatmul.f32.gmra.mxu0 %v494
  %v657 = vpop.f32.mrf.mxu0
  %v658 = vadd.f32 %v67, %v657
  %659 = vmatmul.f32.gmra.mxu0 %v497
  %v660 = vpop.f32.mrf.mxu0
  %v661 = vadd.f32 %v67, %v660
  %662 = vmatmul.f32.gmra.mxu0 %v500
  %v663 = vpop.f32.mrf.mxu0
  %v664 = vadd.f32 %v67, %v663
  %665 = vmatmul.f32.gmra.mxu0 %v503
  %v666 = vpop.f32.mrf.mxu0
  %v667 = vadd.f32 %v67, %v666
  %668 = vmatmul.f32.gmra.mxu0 %v506
  %v669 = vpop.f32.mrf.mxu0
  %v670 = vadd.f32 %v67, %v669
  %671 = vmatmul.f32.gmra.mxu0 %v509
  %v672 = vpop.f32.mrf.mxu0
  %v673 = vadd.f32 %v67, %v672
  %674 = vmatmul.f32.gmra.mxu0 %v512
  %v675 = vpop.f32.mrf.mxu0
  %v676 = vadd.f32 %v67, %v675
  %677 = vmatmul.f32.gmra.mxu0 %v515
  %v678 = vpop.f32.mrf.mxu0
  %v679 = vadd.f32 %v67, %v678
  %680 = vmatmul.f32.gmra.mxu0 %v518
  %v681 = vpop.f32.mrf.mxu0
  %v682 = vadd.f32 %v67, %v681
  %683 = vmatmul.f32.gmra.mxu0 %v521
  %v684 = vpop.f32.mrf.mxu0
  %v685 = vadd.f32 %v67, %v684
  %686 = vmatmul.f32.gmra.mxu0 %v524
  %v687 = vpop.f32.mrf.mxu0
  %v688 = vadd.f32 %v67, %v687
  %689 = vmatmul.f32.gmra.mxu0 %v527
  %v690 = vpop.f32.mrf.mxu0
  %v691 = vadd.f32 %v67, %v690
  %692 = vmatmul.f32.gmra.mxu0 %v530
  %v693 = vpop.f32.mrf.mxu0
  %v694 = vadd.f32 %v67, %v693
  %695 = vmatmul.f32.gmra.mxu0 %v533
  %v696 = vpop.f32.mrf.mxu0
  %v697 = vadd.f32 %v67, %v696
  %698 = vmatmul.f32.gmra.mxu0 %v536
  %v699 = vpop.f32.mrf.mxu0
  %v700 = vadd.f32 %v67, %v699
  %701 = vmatmul.f32.gmra.mxu0 %v539
  %v702 = vpop.f32.mrf.mxu0
  %v703 = vadd.f32 %v67, %v702
  %704 = vmatmul.f32.gmra.mxu0 %v542
  %v705 = vpop.f32.mrf.mxu0
  %v706 = vadd.f32 %v67, %v705
  %707 = vmatmul.f32.gmra.mxu0 %v545
  %v708 = vpop.f32.mrf.mxu0
  %v709 = vadd.f32 %v67, %v708
  %710 = vmatmul.f32.gmra.mxu0 %v548
  %v711 = vpop.f32.mrf.mxu0
  %v712 = vadd.f32 %v67, %v711
  %713 = vmatmul.f32.gmra.mxu0 %v551
  %v714 = vpop.f32.mrf.mxu0
  %v715 = vadd.f32 %v67, %v714
  %716 = vmatmul.f32.gmra.mxu0 %v554
  %v717 = vpop.f32.mrf.mxu0
  %v718 = vadd.f32 %v67, %v717
  %719 = vmatmul.f32.gmra.mxu0 %v557
  %v720 = vpop.f32.mrf.mxu0
  %v721 = vadd.f32 %v67, %v720
  %722 = vmatmul.f32.gmra.mxu0 %v560
  %v723 = vpop.f32.mrf.mxu0
  %v724 = vadd.f32 %v67, %v723
  %725 = vmatmul.f32.gmra.mxu0 %v563
  %v726 = vpop.f32.mrf.mxu0
  %v727 = vadd.f32 %v67, %v726
  %728 = vmatmul.f32.gmra.mxu0 %v566
  %v729 = vpop.f32.mrf.mxu0
  %v730 = vadd.f32 %v67, %v729
  %731 = vmatmul.f32.gmra.mxu0 %v569
  %v732 = vpop.f32.mrf.mxu0
  %v733 = vadd.f32 %v67, %v732
  %734 = vmatmul.f32.gmra.mxu0 %v572
  %v735 = vpop.f32.mrf.mxu0
  %v736 = vadd.f32 %v67, %v735
  %737 = vmatmul.f32.gmra.mxu0 %v575
  %v738 = vpop.f32.mrf.mxu0
  %v739 = vadd.f32 %v67, %v738
  %740 = vmatmul.f32.gmra.mxu0 %v578
  %v741 = vpop.f32.mrf.mxu0
  %v742 = vadd.f32 %v67, %v741
  %743 = vmatmul.f32.gmra.mxu0 %v581
  %v744 = vpop.f32.mrf.mxu0
  %v745 = vadd.f32 %v67, %v744
  %746 = vmatmul.f32.gmra.mxu0 %v584
  %v747 = vpop.f32.mrf.mxu0
  %v748 = vadd.f32 %v67, %v747
  %749 = vmatmul.f32.gmra.mxu0 %v587
  %v750 = vpop.f32.mrf.mxu0
  %v751 = vadd.f32 %v67, %v750
  %752 = vmatmul.f32.gmra.mxu0 %v590
  %v753 = vpop.f32.mrf.mxu0
  %v754 = vadd.f32 %v67, %v753
  %755 = vmatmul.f32.gmra.mxu0 %v593
  %v756 = vpop.f32.mrf.mxu0
  %v757 = vadd.f32 %v67, %v756
  %758 = vmatmul.f32.gmra.mxu0 %v596
  %v759 = vpop.f32.mrf.mxu0
  %v760 = vadd.f32 %v67, %v759
  %761 = vmatmul.f32.gmra.mxu0 %v599
  %v762 = vpop.f32.mrf.mxu0
  %v763 = vadd.f32 %v67, %v762
  %764 = vmatmul.f32.gmra.mxu0 %v602
  %v765 = vpop.f32.mrf.mxu0
  %v766 = vadd.f32 %v67, %v765
  %767 = vmatmul.f32.gmra.mxu0 %v605
  %v768 = vpop.f32.mrf.mxu0
  %v769 = vadd.f32 %v67, %v768
  %770 = vmatmul.f32.gmra.mxu0 %v608
  %v771 = vpop.f32.mrf.mxu0
  %v772 = vadd.f32 %v67, %v771
  %773 = vmatmul.f32.gmra.mxu0 %v611
  %v774 = vpop.f32.mrf.mxu0
  %v775 = vadd.f32 %v67, %v774
  %776 = vmatmul.f32.gmra.mxu0 %v614
  %v777 = vpop.f32.mrf.mxu0
  %v778 = vadd.f32 %v67, %v777
  %779 = vmatmul.f32.gmra.mxu0 %v617
  %v780 = vpop.f32.mrf.mxu0
  %v781 = vadd.f32 %v67, %v780
  %782 = vmatmul.f32.gmra.mxu0 %v620
  %v783 = vpop.f32.mrf.mxu0
  %v784 = vadd.f32 %v67, %v783
  %785 = vmatmul.f32.gmra.mxu0 %v623
  %v786 = vpop.f32.mrf.mxu0
  %v787 = vadd.f32 %v67, %v786
  %788 = vmatmul.f32.gmra.mxu0 %v626
  %v789 = vpop.f32.mrf.mxu0
  %v790 = vadd.f32 %v67, %v789
  %791 = vmatmul.f32.gmra.mxu0 %v629
  %v792 = vpop.f32.mrf.mxu0
  %v793 = vadd.f32 %v67, %v792
  %794 = vdwg.mxu0
  %v795 = vmax.f32 %v649, 0.0
  %v796 = vmax.f32 %v652, 0.0
  %v797 = vmax.f32 %v655, 0.0
  %v798 = vmax.f32 %v658, 0.0
  %v799 = vmax.f32 %v661, 0.0
  %v800 = vmax.f32 %v664, 0.0
  %v801 = vmax.f32 %v667, 0.0
  %v802 = vmax.f32 %v670, 0.0
  %v803 = vmax.f32 %v673, 0.0
  %v804 = vmax.f32 %v676, 0.0
  %v805 = vmax.f32 %v679, 0.0
  %v806 = vmax.f32 %v682, 0.0
  %v807 = vmax.f32 %v685, 0.0
  %v808 = vmax.f32 %v688, 0.0
  %v809 = vmax.f32 %v691, 0.0
  %v810 = vmax.f32 %v694, 0.0
  %v811 = vmax.f32 %v697, 0.0
  %v812 = vmax.f32 %v700, 0.0
  %v813 = vmax.f32 %v703, 0.0
  %v814 = vmax.f32 %v706, 0.0
  %v815 = vmax.f32 %v709, 0.0
  %v816 = vmax.f32 %v712, 0.0
  %v817 = vmax.f32 %v715, 0.0
  %v818 = vmax.f32 %v718, 0.0
  %v819 = vmax.f32 %v721, 0.0
  %v820 = vmax.f32 %v724, 0.0
  %v821 = vmax.f32 %v727, 0.0
  %v822 = vmax.f32 %v730, 0.0
  %v823 = vmax.f32 %v733, 0.0
  %v824 = vmax.f32 %v736, 0.0
  %v825 = vmax.f32 %v739, 0.0
  %v826 = vmax.f32 %v742, 0.0
  %v827 = vmax.f32 %v745, 0.0
  %v828 = vmax.f32 %v748, 0.0
  %v829 = vmax.f32 %v751, 0.0
  %v830 = vmax.f32 %v754, 0.0
  %v831 = vmax.f32 %v757, 0.0
  %v832 = vmax.f32 %v760, 0.0
  %v833 = vmax.f32 %v763, 0.0
  %v834 = vmax.f32 %v766, 0.0
  %v835 = vmax.f32 %v769, 0.0
  %v836 = vmax.f32 %v772, 0.0
  %v837 = vmax.f32 %v775, 0.0
  %v838 = vmax.f32 %v778, 0.0
  %v839 = vmax.f32 %v781, 0.0
  %v840 = vmax.f32 %v784, 0.0
  %v841 = vmax.f32 %v787, 0.0
  %v842 = vmax.f32 %v790, 0.0
  %v843 = vmax.f32 %v793, 0.0
  %v844 = vmax.f32 %v385, %v795
  %v845 = vmax.f32 %v386, %v796
  %v846 = vmax.f32 %v387, %v797
  %v847 = vmax.f32 %v388, %v798
  %v848 = vmax.f32 %v389, %v799
  %v849 = vmax.f32 %v390, %v800
  %v850 = vmax.f32 %v391, %v801
  %v851 = vmax.f32 %v392, %v802
  %v852 = vmax.f32 %v393, %v803
  %v853 = vmax.f32 %v394, %v804
  %v854 = vmax.f32 %v395, %v805
  %v855 = vmax.f32 %v396, %v806
  %v856 = vmax.f32 %v397, %v807
  %v857 = vmax.f32 %v398, %v808
  %v858 = vmax.f32 %v399, %v809
  %v859 = vmax.f32 %v400, %v810
  %v860 = vmax.f32 %v401, %v811
  %v861 = vmax.f32 %v402, %v812
  %v862 = vmax.f32 %v403, %v813
  %v863 = vmax.f32 %v404, %v814
  %v864 = vmax.f32 %v405, %v815
  %v865 = vmax.f32 %v406, %v816
  %v866 = vmax.f32 %v407, %v817
  %v867 = vmax.f32 %v408, %v818
  %v868 = vmax.f32 %v409, %v819
  %v869 = vmax.f32 %v410, %v820
  %v870 = vmax.f32 %v411, %v821
  %v871 = vmax.f32 %v412, %v822
  %v872 = vmax.f32 %v413, %v823
  %v873 = vmax.f32 %v414, %v824
  %v874 = vmax.f32 %v415, %v825
  %v875 = vmax.f32 %v416, %v826
  %v876 = vmax.f32 %v417, %v827
  %v877 = vmax.f32 %v418, %v828
  %v878 = vmax.f32 %v419, %v829
  %v879 = vmax.f32 %v420, %v830
  %v880 = vmax.f32 %v421, %v831
  %v881 = vmax.f32 %v422, %v832
  %v882 = vmax.f32 %v423, %v833
  %v883 = vmax.f32 %v424, %v834
  %v884 = vmax.f32 %v425, %v835
  %v885 = vmax.f32 %v426, %v836
  %v886 = vmax.f32 %v427, %v837
  %v887 = vmax.f32 %v428, %v838
  %v888 = vmax.f32 %v429, %v839
  %v889 = vmax.f32 %v430, %v840
  %v890 = vmax.f32 %v431, %v841
  %v891 = vmax.f32 %v432, %v842
  %v892 = vmax.f32 %v433, %v843
  %s893 = scalar_lea.vmem %s0, 784
  %v894 = vld [vmem:[%s893] sm:$0xff]
  %v895 = vld [vmem:[%s893 + $0x8] sm:$0xff]
  %v896 = vld [vmem:[%s893 + $0x10] sm:$0xff]
  %v897 = vld [vmem:[%s893 + $0x18] sm:$0xff]
  %v898 = vld [vmem:[%s893 + $0x20] sm:$0xff]
  %v899 = vld [vmem:[%s893 + $0x28] sm:$0xff]
  %v900 = vld [vmem:[%s893 + $0x30] sm:$0xff]
  %v901 = vld [vmem:[%s893 + $0x38] sm:$0xff]
  %v902 = vld [vmem:[%s893 + $0x40] sm:$0xff]
  %v903 = vld [vmem:[%s893 + $0x48] sm:$0xff]
  %v904 = vld [vmem:[%s893 + $0x50] sm:$0xff]
  %v905 = vld [vmem:[%s893 + $0x58] sm:$0xff]
  %v906 = vld [vmem:[%s893 + $0x60] sm:$0xff]
  %v907 = vld [vmem:[%s893 + $0x68] sm:$0xff]
  %v908 = vld [vmem:[%s893 + $0x70] sm:$0xff]
  %v909 = vld [vmem:[%s893 + $0x78] sm:$0xff]
  %v910 = vld [vmem:[%s893 + $0x80] sm:$0xff]
  %v911 = vld [vmem:[%s893 + $0x88] sm:$0xff]
  %v912 = vld [vmem:[%s893 + $0x90] sm:$0xff]
  %v913 = vld [vmem:[%s893 + $0x98] sm:$0xff]
  %v914 = vld [vmem:[%s893 + $0xa0] sm:$0xff]
  %v915 = vld [vmem:[%s893 + $0xa8] sm:$0xff]
  %v916 = vld [vmem:[%s893 + $0xb0] sm:$0xff]
  %v917 = vld [vmem:[%s893 + $0xb8] sm:$0xff]
  %v918 = vld [vmem:[%s893 + $0xc0] sm:$0xff]
  %v919 = vld [vmem:[%s893 + $0xc8] sm:$0xff]
  %v920 = vld [vmem:[%s893 + $0xd0] sm:$0xff]
  %v921 = vld [vmem:[%s893 + $0xd8] sm:$0xff]
  %v922 = vld [vmem:[%s893 + $0xe0] sm:$0xff]
  %v923 = vld [vmem:[%s893 + $0xe8] sm:$0xff]
  %v924 = vld [vmem:[%s893 + $0xf0] sm:$0xff]
  %v925 = vld [vmem:[%s893 + $0xf8] sm:$0xff]
  %v926 = vld [vmem:[%s893 + $0x100] sm:$0xff]
  %v927 = vld [vmem:[%s893 + $0x108] sm:$0xff]
  %v928 = vld [vmem:[%s893 + $0x110] sm:$0xff]
  %v929 = vld [vmem:[%s893 + $0x118] sm:$0xff]
  %v930 = vld [vmem:[%s893 + $0x120] sm:$0xff]
  %v931 = vld [vmem:[%s893 + $0x128] sm:$0xff]
  %v932 = vld [vmem:[%s893 + $0x130] sm:$0xff]
  %v933 = vld [vmem:[%s893 + $0x138] sm:$0xff]
  %v934 = vld [vmem:[%s893 + $0x140] sm:$0xff]
  %v935 = vld [vmem:[%s893 + $0x148] sm:$0xff]
  %v936 = vld [vmem:[%s893 + $0x150] sm:$0xff]
  %v937 = vld [vmem:[%s893 + $0x158] sm:$0xff]
  %v938 = vld [vmem:[%s893 + $0x160] sm:$0xff]
  %v939 = vld [vmem:[%s893 + $0x168] sm:$0xff]
  %v940 = vld [vmem:[%s893 + $0x170] sm:$0xff]
  %v941 = vld [vmem:[%s893 + $0x178] sm:$0xff]
  %v942 = vld [vmem:[%s893 + $0x180] sm:$0xff]
  %v944 = vsel %vm69, %v894, 0
  %v947 = vsel %vm69, %v895, 0
  %v950 = vsel %vm69, %v896, 0
  %v953 = vsel %vm69, %v897, 0
  %v956 = vsel %vm69, %v898, 0
  %v959 = vsel %vm69, %v899, 0
  %v962 = vsel %vm69, %v900, 0
  %v965 = vsel %vm69, %v901, 0
  %v968 = vsel %vm69, %v902, 0
  %v971 = vsel %vm69, %v903, 0
  %v974 = vsel %vm69, %v904, 0
  %v977 = vsel %vm69, %v905, 0
  %v980 = vsel %vm69, %v906, 0
  %v983 = vsel %vm69, %v907, 0
  %v986 = vsel %vm69, %v908, 0
  %v989 = vsel %vm69, %v909, 0
  %v992 = vsel %vm69, %v910, 0
  %v995 = vsel %vm69, %v911, 0
  %v998 = vsel %vm69, %v912, 0
  %v1001 = vsel %vm69, %v913, 0
  %v1004 = vsel %vm69, %v914, 0
  %v1007 = vsel %vm69, %v915, 0
  %v1010 = vsel %vm69, %v916, 0
  %v1013 = vsel %vm69, %v917, 0
  %v1016 = vsel %vm69, %v918, 0
  %v1019 = vsel %vm69, %v919, 0
  %v1022 = vsel %vm69, %v920, 0
  %v1025 = vsel %vm69, %v921, 0
  %v1028 = vsel %vm69, %v922, 0
  %v1031 = vsel %vm69, %v923, 0
  %v1034 = vsel %vm69, %v924, 0
  %v1037 = vsel %vm69, %v925, 0
  %v1040 = vsel %vm69, %v926, 0
  %v1043 = vsel %vm69, %v927, 0
  %v1046 = vsel %vm69, %v928, 0
  %v1049 = vsel %vm69, %v929, 0
  %v1052 = vsel %vm69, %v930, 0
  %v1055 = vsel %vm69, %v931, 0
  %v1058 = vsel %vm69, %v932, 0
  %v1061 = vsel %vm69, %v933, 0
  %v1064 = vsel %vm69, %v934, 0
  %v1067 = vsel %vm69, %v935, 0
  %v1070 = vsel %vm69, %v936, 0
  %v1073 = vsel %vm69, %v937, 0
  %v1076 = vsel %vm69, %v938, 0
  %v1079 = vsel %vm69, %v939, 0
  %v1082 = vsel %vm69, %v940, 0
  %v1085 = vsel %vm69, %v941, 0
  %v1088 = vsel %vm69, %v942, 0
  %1090 = vmatpush.msra.mxu0 0.0
  %1091 = vmatpush.msra.mxu0 0.0
  %1092 = vmatpush.msra.mxu0 0.0
  %1093 = vmatpush.msra.mxu0 0.0
  %1094 = vmatpush.msra.mxu0 0.0
  %1095 = vmatpush.msra.mxu0 0.0
  %1096 = vmatpush.msra.mxu0 0.0
  %1097 = vmatpush.msra.mxu0 0.0
  %1098 = vmatpush.msra.mxu0 0.0
  %1099 = vmatpush.msra.mxu0 0.0
  %1100 = vmatpush.msra.mxu0 0.0
  %1101 = vmatpush.msra.mxu0 0.0
  %1102 = vmatpush.msra.mxu0 0.0
  %1103 = vmatpush.msra.mxu0 0.0
  %1104 = vmatpush.msra.mxu0 %v219
  %1105 = vmatpush.msra.mxu0 %v14
  %1106 = vmatmul.f32.gmra.mxu0 %v944
  %v1107 = vpop.f32.mrf.mxu0
  %v1108 = vadd.f32 %v67, %v1107
  %1109 = vmatmul.f32.gmra.mxu0 %v947
  %v1110 = vpop.f32.mrf.mxu0
  %v1111 = vadd.f32 %v67, %v1110
  %1112 = vmatmul.f32.gmra.mxu0 %v950
  %v1113 = vpop.f32.mrf.mxu0
  %v1114 = vadd.f32 %v67, %v1113
  %1115 = vmatmul.f32.gmra.mxu0 %v953
  %v1116 = vpop.f32.mrf.mxu0
  %v1117 = vadd.f32 %v67, %v1116
  %1118 = vmatmul.f32.gmra.mxu0 %v956
  %v1119 = vpop.f32.mrf.mxu0
  %v1120 = vadd.f32 %v67, %v1119
  %1121 = vmatmul.f32.gmra.mxu0 %v959
  %v1122 = vpop.f32.mrf.mxu0
  %v1123 = vadd.f32 %v67, %v1122
  %1124 = vmatmul.f32.gmra.mxu0 %v962
  %v1125 = vpop.f32.mrf.mxu0
  %v1126 = vadd.f32 %v67, %v1125
  %1127 = vmatmul.f32.gmra.mxu0 %v965
  %v1128 = vpop.f32.mrf.mxu0
  %v1129 = vadd.f32 %v67, %v1128
  %1130 = vmatmul.f32.gmra.mxu0 %v968
  %v1131 = vpop.f32.mrf.mxu0
  %v1132 = vadd.f32 %v67, %v1131
  %1133 = vmatmul.f32.gmra.mxu0 %v971
  %v1134 = vpop.f32.mrf.mxu0
  %v1135 = vadd.f32 %v67, %v1134
  %1136 = vmatmul.f32.gmra.mxu0 %v974
  %v1137 = vpop.f32.mrf.mxu0
  %v1138 = vadd.f32 %v67, %v1137
  %1139 = vmatmul.f32.gmra.mxu0 %v977
  %v1140 = vpop.f32.mrf.mxu0
  %v1141 = vadd.f32 %v67, %v1140
  %1142 = vmatmul.f32.gmra.mxu0 %v980
  %v1143 = vpop.f32.mrf.mxu0
  %v1144 = vadd.f32 %v67, %v1143
  %1145 = vmatmul.f32.gmra.mxu0 %v983
  %v1146 = vpop.f32.mrf.mxu0
  %v1147 = vadd.f32 %v67, %v1146
  %1148 = vmatmul.f32.gmra.mxu0 %v986
  %v1149 = vpop.f32.mrf.mxu0
  %v1150 = vadd.f32 %v67, %v1149
  %1151 = vmatmul.f32.gmra.mxu0 %v989
  %v1152 = vpop.f32.mrf.mxu0
  %v1153 = vadd.f32 %v67, %v1152
  %1154 = vmatmul.f32.gmra.mxu0 %v992
  %v1155 = vpop.f32.mrf.mxu0
  %v1156 = vadd.f32 %v67, %v1155
  %1157 = vmatmul.f32.gmra.mxu0 %v995
  %v1158 = vpop.f32.mrf.mxu0
  %v1159 = vadd.f32 %v67, %v1158
  %1160 = vmatmul.f32.gmra.mxu0 %v998
  %v1161 = vpop.f32.mrf.mxu0
  %v1162 = vadd.f32 %v67, %v1161
  %1163 = vmatmul.f32.gmra.mxu0 %v1001
  %v1164 = vpop.f32.mrf.mxu0
  %v1165 = vadd.f32 %v67, %v1164
  %1166 = vmatmul.f32.gmra.mxu0 %v1004
  %v1167 = vpop.f32.mrf.mxu0
  %v1168 = vadd.f32 %v67, %v1167
  %1169 = vmatmul.f32.gmra.mxu0 %v1007
  %v1170 = vpop.f32.mrf.mxu0
  %v1171 = vadd.f32 %v67, %v1170
  %1172 = vmatmul.f32.gmra.mxu0 %v1010
  %v1173 = vpop.f32.mrf.mxu0
  %v1174 = vadd.f32 %v67, %v1173
  %1175 = vmatmul.f32.gmra.mxu0 %v1013
  %v1176 = vpop.f32.mrf.mxu0
  %v1177 = vadd.f32 %v67, %v1176
  %1178 = vmatmul.f32.gmra.mxu0 %v1016
  %v1179 = vpop.f32.mrf.mxu0
  %v1180 = vadd.f32 %v67, %v1179
  %1181 = vmatmul.f32.gmra.mxu0 %v1019
  %v1182 = vpop.f32.mrf.mxu0
  %v1183 = vadd.f32 %v67, %v1182
  %1184 = vmatmul.f32.gmra.mxu0 %v1022
  %v1185 = vpop.f32.mrf.mxu0
  %v1186 = vadd.f32 %v67, %v1185
  %1187 = vmatmul.f32.gmra.mxu0 %v1025
  %v1188 = vpop.f32.mrf.mxu0
  %v1189 = vadd.f32 %v67, %v1188
  %1190 = vmatmul.f32.gmra.mxu0 %v1028
  %v1191 = vpop.f32.mrf.mxu0
  %v1192 = vadd.f32 %v67, %v1191
  %1193 = vmatmul.f32.gmra.mxu0 %v1031
  %v1194 = vpop.f32.mrf.mxu0
  %v1195 = vadd.f32 %v67, %v1194
  %1196 = vmatmul.f32.gmra.mxu0 %v1034
  %v1197 = vpop.f32.mrf.mxu0
  %v1198 = vadd.f32 %v67, %v1197
  %1199 = vmatmul.f32.gmra.mxu0 %v1037
  %v1200 = vpop.f32.mrf.mxu0
  %v1201 = vadd.f32 %v67, %v1200
  %1202 = vmatmul.f32.gmra.mxu0 %v1040
  %v1203 = vpop.f32.mrf.mxu0
  %v1204 = vadd.f32 %v67, %v1203
  %1205 = vmatmul.f32.gmra.mxu0 %v1043
  %v1206 = vpop.f32.mrf.mxu0
  %v1207 = vadd.f32 %v67, %v1206
  %1208 = vmatmul.f32.gmra.mxu0 %v1046
  %v1209 = vpop.f32.mrf.mxu0
  %v1210 = vadd.f32 %v67, %v1209
  %1211 = vmatmul.f32.gmra.mxu0 %v1049
  %v1212 = vpop.f32.mrf.mxu0
  %v1213 = vadd.f32 %v67, %v1212
  %1214 = vmatmul.f32.gmra.mxu0 %v1052
  %v1215 = vpop.f32.mrf.mxu0
  %v1216 = vadd.f32 %v67, %v1215
  %1217 = vmatmul.f32.gmra.mxu0 %v1055
  %v1218 = vpop.f32.mrf.mxu0
  %v1219 = vadd.f32 %v67, %v1218
  %1220 = vmatmul.f32.gmra.mxu0 %v1058
  %v1221 = vpop.f32.mrf.mxu0
  %v1222 = vadd.f32 %v67, %v1221
  %1223 = vmatmul.f32.gmra.mxu0 %v1061
  %v1224 = vpop.f32.mrf.mxu0
  %v1225 = vadd.f32 %v67, %v1224
  %1226 = vmatmul.f32.gmra.mxu0 %v1064
  %v1227 = vpop.f32.mrf.mxu0
  %v1228 = vadd.f32 %v67, %v1227
  %1229 = vmatmul.f32.gmra.mxu0 %v1067
  %v1230 = vpop.f32.mrf.mxu0
  %v1231 = vadd.f32 %v67, %v1230
  %1232 = vmatmul.f32.gmra.mxu0 %v1070
  %v1233 = vpop.f32.mrf.mxu0
  %v1234 = vadd.f32 %v67, %v1233
  %1235 = vmatmul.f32.gmra.mxu0 %v1073
  %v1236 = vpop.f32.mrf.mxu0
  %v1237 = vadd.f32 %v67, %v1236
  %1238 = vmatmul.f32.gmra.mxu0 %v1076
  %v1239 = vpop.f32.mrf.mxu0
  %v1240 = vadd.f32 %v67, %v1239
  %1241 = vmatmul.f32.gmra.mxu0 %v1079
  %v1242 = vpop.f32.mrf.mxu0
  %v1243 = vadd.f32 %v67, %v1242
  %1244 = vmatmul.f32.gmra.mxu0 %v1082
  %v1245 = vpop.f32.mrf.mxu0
  %v1246 = vadd.f32 %v67, %v1245
  %1247 = vmatmul.f32.gmra.mxu0 %v1085
  %v1248 = vpop.f32.mrf.mxu0
  %v1249 = vadd.f32 %v67, %v1248
  %1250 = vmatmul.f32.gmra.mxu0 %v1088
  %v1251 = vpop.f32.mrf.mxu0
  %v1252 = vadd.f32 %v67, %v1251
  %1253 = vdwg.mxu0
  %v1254 = vmax.f32 %v1108, 0.0
  %v1255 = vmax.f32 %v1111, 0.0
  %v1256 = vmax.f32 %v1114, 0.0
  %v1257 = vmax.f32 %v1117, 0.0
  %v1258 = vmax.f32 %v1120, 0.0
  %v1259 = vmax.f32 %v1123, 0.0
  %v1260 = vmax.f32 %v1126, 0.0
  %v1261 = vmax.f32 %v1129, 0.0
  %v1262 = vmax.f32 %v1132, 0.0
  %v1263 = vmax.f32 %v1135, 0.0
  %v1264 = vmax.f32 %v1138, 0.0
  %v1265 = vmax.f32 %v1141, 0.0
  %v1266 = vmax.f32 %v1144, 0.0
  %v1267 = vmax.f32 %v1147, 0.0
  %v1268 = vmax.f32 %v1150, 0.0
  %v1269 = vmax.f32 %v1153, 0.0
  %v1270 = vmax.f32 %v1156, 0.0
  %v1271 = vmax.f32 %v1159, 0.0
  %v1272 = vmax.f32 %v1162, 0.0
  %v1273 = vmax.f32 %v1165, 0.0
  %v1274 = vmax.f32 %v1168, 0.0
  %v1275 = vmax.f32 %v1171, 0.0
  %v1276 = vmax.f32 %v1174, 0.0
  %v1277 = vmax.f32 %v1177, 0.0
  %v1278 = vmax.f32 %v1180, 0.0
  %v1279 = vmax.f32 %v1183, 0.0
  %v1280 = vmax.f32 %v1186, 0.0
  %v1281 = vmax.f32 %v1189, 0.0
  %v1282 = vmax.f32 %v1192, 0.0
  %v1283 = vmax.f32 %v1195, 0.0
  %v1284 = vmax.f32 %v1198, 0.0
  %v1285 = vmax.f32 %v1201, 0.0
  %v1286 = vmax.f32 %v1204, 0.0
  %v1287 = vmax.f32 %v1207, 0.0
  %v1288 = vmax.f32 %v1210, 0.0
  %v1289 = vmax.f32 %v1213, 0.0
  %v1290 = vmax.f32 %v1216, 0.0
  %v1291 = vmax.f32 %v1219, 0.0
  %v1292 = vmax.f32 %v1222, 0.0
  %v1293 = vmax.f32 %v1225, 0.0
  %v1294 = vmax.f32 %v1228, 0.0
  %v1295 = vmax.f32 %v1231, 0.0
  %v1296 = vmax.f32 %v1234, 0.0
  %v1297 = vmax.f32 %v1237, 0.0
  %v1298 = vmax.f32 %v1240, 0.0
  %v1299 = vmax.f32 %v1243, 0.0
  %v1300 = vmax.f32 %v1246, 0.0
  %v1301 = vmax.f32 %v1249, 0.0
  %v1302 = vmax.f32 %v1252, 0.0
  %v1303 = vmax.f32 %v844, %v1254
  %v1304 = vmax.f32 %v845, %v1255
  %v1305 = vmax.f32 %v846, %v1256
  %v1306 = vmax.f32 %v847, %v1257
  %v1307 = vmax.f32 %v848, %v1258
  %v1308 = vmax.f32 %v849, %v1259
  %v1309 = vmax.f32 %v850, %v1260
  %v1310 = vmax.f32 %v851, %v1261
  %v1311 = vmax.f32 %v852, %v1262
  %v1312 = vmax.f32 %v853, %v1263
  %v1313 = vmax.f32 %v854, %v1264
  %v1314 = vmax.f32 %v855, %v1265
  %v1315 = vmax.f32 %v856, %v1266
  %v1316 = vmax.f32 %v857, %v1267
  %v1317 = vmax.f32 %v858, %v1268
  %v1318 = vmax.f32 %v859, %v1269
  %v1319 = vmax.f32 %v860, %v1270
  %v1320 = vmax.f32 %v861, %v1271
  %v1321 = vmax.f32 %v862, %v1272
  %v1322 = vmax.f32 %v863, %v1273
  %v1323 = vmax.f32 %v864, %v1274
  %v1324 = vmax.f32 %v865, %v1275
  %v1325 = vmax.f32 %v866, %v1276
  %v1326 = vmax.f32 %v867, %v1277
  %v1327 = vmax.f32 %v868, %v1278
  %v1328 = vmax.f32 %v869, %v1279
  %v1329 = vmax.f32 %v870, %v1280
  %v1330 = vmax.f32 %v871, %v1281
  %v1331 = vmax.f32 %v872, %v1282
  %v1332 = vmax.f32 %v873, %v1283
  %v1333 = vmax.f32 %v874, %v1284
  %v1334 = vmax.f32 %v875, %v1285
  %v1335 = vmax.f32 %v876, %v1286
  %v1336 = vmax.f32 %v877, %v1287
  %v1337 = vmax.f32 %v878, %v1288
  %v1338 = vmax.f32 %v879, %v1289
  %v1339 = vmax.f32 %v880, %v1290
  %v1340 = vmax.f32 %v881, %v1291
  %v1341 = vmax.f32 %v882, %v1292
  %v1342 = vmax.f32 %v883, %v1293
  %v1343 = vmax.f32 %v884, %v1294
  %v1344 = vmax.f32 %v885, %v1295
  %v1345 = vmax.f32 %v886, %v1296
  %v1346 = vmax.f32 %v887, %v1297
  %v1347 = vmax.f32 %v888, %v1298
  %v1348 = vmax.f32 %v889, %v1299
  %v1349 = vmax.f32 %v890, %v1300
  %v1350 = vmax.f32 %v891, %v1301
  %v1351 = vmax.f32 %v892, %v1302
  %s1352 = scalar_lea.vmem %s0, 1176
  %v1353 = vld [vmem:[%s1352] sm:$0xff]
  %v1354 = vld [vmem:[%s1352 + $0x8] sm:$0xff]
  %v1355 = vld [vmem:[%s1352 + $0x10] sm:$0xff]
  %v1356 = vld [vmem:[%s1352 + $0x18] sm:$0xff]
  %v1357 = vld [vmem:[%s1352 + $0x20] sm:$0xff]
  %v1358 = vld [vmem:[%s1352 + $0x28] sm:$0xff]
  %v1359 = vld [vmem:[%s1352 + $0x30] sm:$0xff]
  %v1360 = vld [vmem:[%s1352 + $0x38] sm:$0xff]
  %v1361 = vld [vmem:[%s1352 + $0x40] sm:$0xff]
  %v1362 = vld [vmem:[%s1352 + $0x48] sm:$0xff]
  %v1363 = vld [vmem:[%s1352 + $0x50] sm:$0xff]
  %v1364 = vld [vmem:[%s1352 + $0x58] sm:$0xff]
  %v1365 = vld [vmem:[%s1352 + $0x60] sm:$0xff]
  %v1366 = vld [vmem:[%s1352 + $0x68] sm:$0xff]
  %v1367 = vld [vmem:[%s1352 + $0x70] sm:$0xff]
  %v1368 = vld [vmem:[%s1352 + $0x78] sm:$0xff]
  %v1369 = vld [vmem:[%s1352 + $0x80] sm:$0xff]
  %v1370 = vld [vmem:[%s1352 + $0x88] sm:$0xff]
  %v1371 = vld [vmem:[%s1352 + $0x90] sm:$0xff]
  %v1372 = vld [vmem:[%s1352 + $0x98] sm:$0xff]
  %v1373 = vld [vmem:[%s1352 + $0xa0] sm:$0xff]
  %v1374 = vld [vmem:[%s1352 + $0xa8] sm:$0xff]
  %v1375 = vld [vmem:[%s1352 + $0xb0] sm:$0xff]
  %v1376 = vld [vmem:[%s1352 + $0xb8] sm:$0xff]
  %v1377 = vld [vmem:[%s1352 + $0xc0] sm:$0xff]
  %v1378 = vld [vmem:[%s1352 + $0xc8] sm:$0xff]
  %v1379 = vld [vmem:[%s1352 + $0xd0] sm:$0xff]
  %v1380 = vld [vmem:[%s1352 + $0xd8] sm:$0xff]
  %v1381 = vld [vmem:[%s1352 + $0xe0] sm:$0xff]
  %v1382 = vld [vmem:[%s1352 + $0xe8] sm:$0xff]
  %v1383 = vld [vmem:[%s1352 + $0xf0] sm:$0xff]
  %v1384 = vld [vmem:[%s1352 + $0xf8] sm:$0xff]
  %v1385 = vld [vmem:[%s1352 + $0x100] sm:$0xff]
  %v1386 = vld [vmem:[%s1352 + $0x108] sm:$0xff]
  %v1387 = vld [vmem:[%s1352 + $0x110] sm:$0xff]
  %v1388 = vld [vmem:[%s1352 + $0x118] sm:$0xff]
  %v1389 = vld [vmem:[%s1352 + $0x120] sm:$0xff]
  %v1390 = vld [vmem:[%s1352 + $0x128] sm:$0xff]
  %v1391 = vld [vmem:[%s1352 + $0x130] sm:$0xff]
  %v1392 = vld [vmem:[%s1352 + $0x138] sm:$0xff]
  %v1393 = vld [vmem:[%s1352 + $0x140] sm:$0xff]
  %v1394 = vld [vmem:[%s1352 + $0x148] sm:$0xff]
  %v1395 = vld [vmem:[%s1352 + $0x150] sm:$0xff]
  %v1396 = vld [vmem:[%s1352 + $0x158] sm:$0xff]
  %v1397 = vld [vmem:[%s1352 + $0x160] sm:$0xff]
  %v1398 = vld [vmem:[%s1352 + $0x168] sm:$0xff]
  %v1399 = vld [vmem:[%s1352 + $0x170] sm:$0xff]
  %v1400 = vld [vmem:[%s1352 + $0x178] sm:$0xff]
  %v1401 = vld [vmem:[%s1352 + $0x180] sm:$0xff]
  %v1403 = vsel %vm69, %v1353, 0
  %v1406 = vsel %vm69, %v1354, 0
  %v1409 = vsel %vm69, %v1355, 0
  %v1412 = vsel %vm69, %v1356, 0
  %v1415 = vsel %vm69, %v1357, 0
  %v1418 = vsel %vm69, %v1358, 0
  %v1421 = vsel %vm69, %v1359, 0
  %v1424 = vsel %vm69, %v1360, 0
  %v1427 = vsel %vm69, %v1361, 0
  %v1430 = vsel %vm69, %v1362, 0
  %v1433 = vsel %vm69, %v1363, 0
  %v1436 = vsel %vm69, %v1364, 0
  %v1439 = vsel %vm69, %v1365, 0
  %v1442 = vsel %vm69, %v1366, 0
  %v1445 = vsel %vm69, %v1367, 0
  %v1448 = vsel %vm69, %v1368, 0
  %v1451 = vsel %vm69, %v1369, 0
  %v1454 = vsel %vm69, %v1370, 0
  %v1457 = vsel %vm69, %v1371, 0
  %v1460 = vsel %vm69, %v1372, 0
  %v1463 = vsel %vm69, %v1373, 0
  %v1466 = vsel %vm69, %v1374, 0
  %v1469 = vsel %vm69, %v1375, 0
  %v1472 = vsel %vm69, %v1376, 0
  %v1475 = vsel %vm69, %v1377, 0
  %v1478 = vsel %vm69, %v1378, 0
  %v1481 = vsel %vm69, %v1379, 0
  %v1484 = vsel %vm69, %v1380, 0
  %v1487 = vsel %vm69, %v1381, 0
  %v1490 = vsel %vm69, %v1382, 0
  %v1493 = vsel %vm69, %v1383, 0
  %v1496 = vsel %vm69, %v1384, 0
  %v1499 = vsel %vm69, %v1385, 0
  %v1502 = vsel %vm69, %v1386, 0
  %v1505 = vsel %vm69, %v1387, 0
  %v1508 = vsel %vm69, %v1388, 0
  %v1511 = vsel %vm69, %v1389, 0
  %v1514 = vsel %vm69, %v1390, 0
  %v1517 = vsel %vm69, %v1391, 0
  %v1520 = vsel %vm69, %v1392, 0
  %v1523 = vsel %vm69, %v1393, 0
  %v1526 = vsel %vm69, %v1394, 0
  %v1529 = vsel %vm69, %v1395, 0
  %v1532 = vsel %vm69, %v1396, 0
  %v1535 = vsel %vm69, %v1397, 0
  %v1538 = vsel %vm69, %v1398, 0
  %v1541 = vsel %vm69, %v1399, 0
  %v1544 = vsel %vm69, %v1400, 0
  %v1547 = vsel %vm69, %v1401, 0
  %1549 = vmatpush.msra.mxu0 0.0
  %1550 = vmatpush.msra.mxu0 0.0
  %1551 = vmatpush.msra.mxu0 0.0
  %1552 = vmatpush.msra.mxu0 0.0
  %1553 = vmatpush.msra.mxu0 0.0
  %1554 = vmatpush.msra.mxu0 0.0
  %1555 = vmatpush.msra.mxu0 0.0
  %1556 = vmatpush.msra.mxu0 0.0
  %1557 = vmatpush.msra.mxu0 0.0
  %1558 = vmatpush.msra.mxu0 0.0
  %1559 = vmatpush.msra.mxu0 0.0
  %1560 = vmatpush.msra.mxu0 0.0
  %1561 = vmatpush.msra.mxu0 0.0
  %1562 = vmatpush.msra.mxu0 0.0
  %1563 = vmatpush.msra.mxu0 %v219
  %1564 = vmatpush.msra.mxu0 %v14
  %1565 = vmatmul.f32.gmra.mxu0 %v1403
  %v1566 = vpop.f32.mrf.mxu0
  %v1567 = vadd.f32 %v67, %v1566
  %1568 = vmatmul.f32.gmra.mxu0 %v1406
  %v1569 = vpop.f32.mrf.mxu0
  %v1570 = vadd.f32 %v67, %v1569
  %1571 = vmatmul.f32.gmra.mxu0 %v1409
  %v1572 = vpop.f32.mrf.mxu0
  %v1573 = vadd.f32 %v67, %v1572
  %1574 = vmatmul.f32.gmra.mxu0 %v1412
  %v1575 = vpop.f32.mrf.mxu0
  %v1576 = vadd.f32 %v67, %v1575
  %1577 = vmatmul.f32.gmra.mxu0 %v1415
  %v1578 = vpop.f32.mrf.mxu0
  %v1579 = vadd.f32 %v67, %v1578
  %1580 = vmatmul.f32.gmra.mxu0 %v1418
  %v1581 = vpop.f32.mrf.mxu0
  %v1582 = vadd.f32 %v67, %v1581
  %1583 = vmatmul.f32.gmra.mxu0 %v1421
  %v1584 = vpop.f32.mrf.mxu0
  %v1585 = vadd.f32 %v67, %v1584
  %1586 = vmatmul.f32.gmra.mxu0 %v1424
  %v1587 = vpop.f32.mrf.mxu0
  %v1588 = vadd.f32 %v67, %v1587
  %1589 = vmatmul.f32.gmra.mxu0 %v1427
  %v1590 = vpop.f32.mrf.mxu0
  %v1591 = vadd.f32 %v67, %v1590
  %1592 = vmatmul.f32.gmra.mxu0 %v1430
  %v1593 = vpop.f32.mrf.mxu0
  %v1594 = vadd.f32 %v67, %v1593
  %1595 = vmatmul.f32.gmra.mxu0 %v1433
  %v1596 = vpop.f32.mrf.mxu0
  %v1597 = vadd.f32 %v67, %v1596
  %1598 = vmatmul.f32.gmra.mxu0 %v1436
  %v1599 = vpop.f32.mrf.mxu0
  %v1600 = vadd.f32 %v67, %v1599
  %1601 = vmatmul.f32.gmra.mxu0 %v1439
  %v1602 = vpop.f32.mrf.mxu0
  %v1603 = vadd.f32 %v67, %v1602
  %1604 = vmatmul.f32.gmra.mxu0 %v1442
  %v1605 = vpop.f32.mrf.mxu0
  %v1606 = vadd.f32 %v67, %v1605
  %1607 = vmatmul.f32.gmra.mxu0 %v1445
  %v1608 = vpop.f32.mrf.mxu0
  %v1609 = vadd.f32 %v67, %v1608
  %1610 = vmatmul.f32.gmra.mxu0 %v1448
  %v1611 = vpop.f32.mrf.mxu0
  %v1612 = vadd.f32 %v67, %v1611
  %1613 = vmatmul.f32.gmra.mxu0 %v1451
  %v1614 = vpop.f32.mrf.mxu0
  %v1615 = vadd.f32 %v67, %v1614
  %1616 = vmatmul.f32.gmra.mxu0 %v1454
  %v1617 = vpop.f32.mrf.mxu0
  %v1618 = vadd.f32 %v67, %v1617
  %1619 = vmatmul.f32.gmra.mxu0 %v1457
  %v1620 = vpop.f32.mrf.mxu0
  %v1621 = vadd.f32 %v67, %v1620
  %1622 = vmatmul.f32.gmra.mxu0 %v1460
  %v1623 = vpop.f32.mrf.mxu0
  %v1624 = vadd.f32 %v67, %v1623
  %1625 = vmatmul.f32.gmra.mxu0 %v1463
  %v1626 = vpop.f32.mrf.mxu0
  %v1627 = vadd.f32 %v67, %v1626
  %1628 = vmatmul.f32.gmra.mxu0 %v1466
  %v1629 = vpop.f32.mrf.mxu0
  %v1630 = vadd.f32 %v67, %v1629
  %1631 = vmatmul.f32.gmra.mxu0 %v1469
  %v1632 = vpop.f32.mrf.mxu0
  %v1633 = vadd.f32 %v67, %v1632
  %1634 = vmatmul.f32.gmra.mxu0 %v1472
  %v1635 = vpop.f32.mrf.mxu0
  %v1636 = vadd.f32 %v67, %v1635
  %1637 = vmatmul.f32.gmra.mxu0 %v1475
  %v1638 = vpop.f32.mrf.mxu0
  %v1639 = vadd.f32 %v67, %v1638
  %1640 = vmatmul.f32.gmra.mxu0 %v1478
  %v1641 = vpop.f32.mrf.mxu0
  %v1642 = vadd.f32 %v67, %v1641
  %1643 = vmatmul.f32.gmra.mxu0 %v1481
  %v1644 = vpop.f32.mrf.mxu0
  %v1645 = vadd.f32 %v67, %v1644
  %1646 = vmatmul.f32.gmra.mxu0 %v1484
  %v1647 = vpop.f32.mrf.mxu0
  %v1648 = vadd.f32 %v67, %v1647
  %1649 = vmatmul.f32.gmra.mxu0 %v1487
  %v1650 = vpop.f32.mrf.mxu0
  %v1651 = vadd.f32 %v67, %v1650
  %1652 = vmatmul.f32.gmra.mxu0 %v1490
  %v1653 = vpop.f32.mrf.mxu0
  %v1654 = vadd.f32 %v67, %v1653
  %1655 = vmatmul.f32.gmra.mxu0 %v1493
  %v1656 = vpop.f32.mrf.mxu0
  %v1657 = vadd.f32 %v67, %v1656
  %1658 = vmatmul.f32.gmra.mxu0 %v1496
  %v1659 = vpop.f32.mrf.mxu0
  %v1660 = vadd.f32 %v67, %v1659
  %1661 = vmatmul.f32.gmra.mxu0 %v1499
  %v1662 = vpop.f32.mrf.mxu0
  %v1663 = vadd.f32 %v67, %v1662
  %1664 = vmatmul.f32.gmra.mxu0 %v1502
  %v1665 = vpop.f32.mrf.mxu0
  %v1666 = vadd.f32 %v67, %v1665
  %1667 = vmatmul.f32.gmra.mxu0 %v1505
  %v1668 = vpop.f32.mrf.mxu0
  %v1669 = vadd.f32 %v67, %v1668
  %1670 = vmatmul.f32.gmra.mxu0 %v1508
  %v1671 = vpop.f32.mrf.mxu0
  %v1672 = vadd.f32 %v67, %v1671
  %1673 = vmatmul.f32.gmra.mxu0 %v1511
  %v1674 = vpop.f32.mrf.mxu0
  %v1675 = vadd.f32 %v67, %v1674
  %1676 = vmatmul.f32.gmra.mxu0 %v1514
  %v1677 = vpop.f32.mrf.mxu0
  %v1678 = vadd.f32 %v67, %v1677
  %1679 = vmatmul.f32.gmra.mxu0 %v1517
  %v1680 = vpop.f32.mrf.mxu0
  %v1681 = vadd.f32 %v67, %v1680
  %1682 = vmatmul.f32.gmra.mxu0 %v1520
  %v1683 = vpop.f32.mrf.mxu0
  %v1684 = vadd.f32 %v67, %v1683
  %1685 = vmatmul.f32.gmra.mxu0 %v1523
  %v1686 = vpop.f32.mrf.mxu0
  %v1687 = vadd.f32 %v67, %v1686
  %1688 = vmatmul.f32.gmra.mxu0 %v1526
  %v1689 = vpop.f32.mrf.mxu0
  %v1690 = vadd.f32 %v67, %v1689
  %1691 = vmatmul.f32.gmra.mxu0 %v1529
  %v1692 = vpop.f32.mrf.mxu0
  %v1693 = vadd.f32 %v67, %v1692
  %1694 = vmatmul.f32.gmra.mxu0 %v1532
  %v1695 = vpop.f32.mrf.mxu0
  %v1696 = vadd.f32 %v67, %v1695
  %1697 = vmatmul.f32.gmra.mxu0 %v1535
  %v1698 = vpop.f32.mrf.mxu0
  %v1699 = vadd.f32 %v67, %v1698
  %1700 = vmatmul.f32.gmra.mxu0 %v1538
  %v1701 = vpop.f32.mrf.mxu0
  %v1702 = vadd.f32 %v67, %v1701
  %1703 = vmatmul.f32.gmra.mxu0 %v1541
  %v1704 = vpop.f32.mrf.mxu0
  %v1705 = vadd.f32 %v67, %v1704
  %1706 = vmatmul.f32.gmra.mxu0 %v1544
  %v1707 = vpop.f32.mrf.mxu0
  %v1708 = vadd.f32 %v67, %v1707
  %1709 = vmatmul.f32.gmra.mxu0 %v1547
  %v1710 = vpop.f32.mrf.mxu0
  %v1711 = vadd.f32 %v67, %v1710
  %1712 = vdwg.mxu0
  %v1713 = vmax.f32 %v1567, 0.0
  %v1714 = vmax.f32 %v1570, 0.0
  %v1715 = vmax.f32 %v1573, 0.0
  %v1716 = vmax.f32 %v1576, 0.0
  %v1717 = vmax.f32 %v1579, 0.0
  %v1718 = vmax.f32 %v1582, 0.0
  %v1719 = vmax.f32 %v1585, 0.0
  %v1720 = vmax.f32 %v1588, 0.0
  %v1721 = vmax.f32 %v1591, 0.0
  %v1722 = vmax.f32 %v1594, 0.0
  %v1723 = vmax.f32 %v1597, 0.0
  %v1724 = vmax.f32 %v1600, 0.0
  %v1725 = vmax.f32 %v1603, 0.0
  %v1726 = vmax.f32 %v1606, 0.0
  %v1727 = vmax.f32 %v1609, 0.0
  %v1728 = vmax.f32 %v1612, 0.0
  %v1729 = vmax.f32 %v1615, 0.0
  %v1730 = vmax.f32 %v1618, 0.0
  %v1731 = vmax.f32 %v1621, 0.0
  %v1732 = vmax.f32 %v1624, 0.0
  %v1733 = vmax.f32 %v1627, 0.0
  %v1734 = vmax.f32 %v1630, 0.0
  %v1735 = vmax.f32 %v1633, 0.0
  %v1736 = vmax.f32 %v1636, 0.0
  %v1737 = vmax.f32 %v1639, 0.0
  %v1738 = vmax.f32 %v1642, 0.0
  %v1739 = vmax.f32 %v1645, 0.0
  %v1740 = vmax.f32 %v1648, 0.0
  %v1741 = vmax.f32 %v1651, 0.0
  %v1742 = vmax.f32 %v1654, 0.0
  %v1743 = vmax.f32 %v1657, 0.0
  %v1744 = vmax.f32 %v1660, 0.0
  %v1745 = vmax.f32 %v1663, 0.0
  %v1746 = vmax.f32 %v1666, 0.0
  %v1747 = vmax.f32 %v1669, 0.0
  %v1748 = vmax.f32 %v1672, 0.0
  %v1749 = vmax.f32 %v1675, 0.0
  %v1750 = vmax.f32 %v1678, 0.0
  %v1751 = vmax.f32 %v1681, 0.0
  %v1752 = vmax.f32 %v1684, 0.0
  %v1753 = vmax.f32 %v1687, 0.0
  %v1754 = vmax.f32 %v1690, 0.0
  %v1755 = vmax.f32 %v1693, 0.0
  %v1756 = vmax.f32 %v1696, 0.0
  %v1757 = vmax.f32 %v1699, 0.0
  %v1758 = vmax.f32 %v1702, 0.0
  %v1759 = vmax.f32 %v1705, 0.0
  %v1760 = vmax.f32 %v1708, 0.0
  %v1761 = vmax.f32 %v1711, 0.0
  %v1762 = vmax.f32 %v1303, %v1713
  %v1763 = vmax.f32 %v1304, %v1714
  %v1764 = vmax.f32 %v1305, %v1715
  %v1765 = vmax.f32 %v1306, %v1716
  %v1766 = vmax.f32 %v1307, %v1717
  %v1767 = vmax.f32 %v1308, %v1718
  %v1768 = vmax.f32 %v1309, %v1719
  %v1769 = vmax.f32 %v1310, %v1720
  %v1770 = vmax.f32 %v1311, %v1721
  %v1771 = vmax.f32 %v1312, %v1722
  %v1772 = vmax.f32 %v1313, %v1723
  %v1773 = vmax.f32 %v1314, %v1724
  %v1774 = vmax.f32 %v1315, %v1725
  %v1775 = vmax.f32 %v1316, %v1726
  %v1776 = vmax.f32 %v1317, %v1727
  %v1777 = vmax.f32 %v1318, %v1728
  %v1778 = vmax.f32 %v1319, %v1729
  %v1779 = vmax.f32 %v1320, %v1730
  %v1780 = vmax.f32 %v1321, %v1731
  %v1781 = vmax.f32 %v1322, %v1732
  %v1782 = vmax.f32 %v1323, %v1733
  %v1783 = vmax.f32 %v1324, %v1734
  %v1784 = vmax.f32 %v1325, %v1735
  %v1785 = vmax.f32 %v1326, %v1736
  %v1786 = vmax.f32 %v1327, %v1737
  %v1787 = vmax.f32 %v1328, %v1738
  %v1788 = vmax.f32 %v1329, %v1739
  %v1789 = vmax.f32 %v1330, %v1740
  %v1790 = vmax.f32 %v1331, %v1741
  %v1791 = vmax.f32 %v1332, %v1742
  %v1792 = vmax.f32 %v1333, %v1743
  %v1793 = vmax.f32 %v1334, %v1744
  %v1794 = vmax.f32 %v1335, %v1745
  %v1795 = vmax.f32 %v1336, %v1746
  %v1796 = vmax.f32 %v1337, %v1747
  %v1797 = vmax.f32 %v1338, %v1748
  %v1798 = vmax.f32 %v1339, %v1749
  %v1799 = vmax.f32 %v1340, %v1750
  %v1800 = vmax.f32 %v1341, %v1751
  %v1801 = vmax.f32 %v1342, %v1752
  %v1802 = vmax.f32 %v1343, %v1753
  %v1803 = vmax.f32 %v1344, %v1754
  %v1804 = vmax.f32 %v1345, %v1755
  %v1805 = vmax.f32 %v1346, %v1756
  %v1806 = vmax.f32 %v1347, %v1757
  %v1807 = vmax.f32 %v1348, %v1758
  %v1808 = vmax.f32 %v1349, %v1759
  %v1809 = vmax.f32 %v1350, %v1760
  %v1810 = vmax.f32 %v1351, %v1761
  %vm1811 = vcmask 261120
  %1812 = vst.msk [vmem:[%s3] sm:$0xff] %vm1811, %v1762
  %1813 = vst.msk [vmem:[%s3 + $0x8] sm:$0xff] %vm1811, %v1763
  %1814 = vst.msk [vmem:[%s3 + $0x10] sm:$0xff] %vm1811, %v1764
  %1815 = vst.msk [vmem:[%s3 + $0x18] sm:$0xff] %vm1811, %v1765
  %1816 = vst.msk [vmem:[%s3 + $0x20] sm:$0xff] %vm1811, %v1766
  %1817 = vst.msk [vmem:[%s3 + $0x28] sm:$0xff] %vm1811, %v1767
  %1818 = vst.msk [vmem:[%s3 + $0x30] sm:$0xff] %vm1811, %v1768
  %1819 = vst.msk [vmem:[%s3 + $0x38] sm:$0xff] %vm1811, %v1769
  %1820 = vst.msk [vmem:[%s3 + $0x40] sm:$0xff] %vm1811, %v1770
  %1821 = vst.msk [vmem:[%s3 + $0x48] sm:$0xff] %vm1811, %v1771
  %1822 = vst.msk [vmem:[%s3 + $0x50] sm:$0xff] %vm1811, %v1772
  %1823 = vst.msk [vmem:[%s3 + $0x58] sm:$0xff] %vm1811, %v1773
  %1824 = vst.msk [vmem:[%s3 + $0x60] sm:$0xff] %vm1811, %v1774
  %1825 = vst.msk [vmem:[%s3 + $0x68] sm:$0xff] %vm1811, %v1775
  %1826 = vst.msk [vmem:[%s3 + $0x70] sm:$0xff] %vm1811, %v1776
  %1827 = vst.msk [vmem:[%s3 + $0x78] sm:$0xff] %vm1811, %v1777
  %1828 = vst.msk [vmem:[%s3 + $0x80] sm:$0xff] %vm1811, %v1778
  %1829 = vst.msk [vmem:[%s3 + $0x88] sm:$0xff] %vm1811, %v1779
  %1830 = vst.msk [vmem:[%s3 + $0x90] sm:$0xff] %vm1811, %v1780
  %1831 = vst.msk [vmem:[%s3 + $0x98] sm:$0xff] %vm1811, %v1781
  %1832 = vst.msk [vmem:[%s3 + $0xa0] sm:$0xff] %vm1811, %v1782
  %1833 = vst.msk [vmem:[%s3 + $0xa8] sm:$0xff] %vm1811, %v1783
  %1834 = vst.msk [vmem:[%s3 + $0xb0] sm:$0xff] %vm1811, %v1784
  %1835 = vst.msk [vmem:[%s3 + $0xb8] sm:$0xff] %vm1811, %v1785
  %1836 = vst.msk [vmem:[%s3 + $0xc0] sm:$0xff] %vm1811, %v1786
  %1837 = vst.msk [vmem:[%s3 + $0xc8] sm:$0xff] %vm1811, %v1787
  %1838 = vst.msk [vmem:[%s3 + $0xd0] sm:$0xff] %vm1811, %v1788
  %1839 = vst.msk [vmem:[%s3 + $0xd8] sm:$0xff] %vm1811, %v1789
  %1840 = vst.msk [vmem:[%s3 + $0xe0] sm:$0xff] %vm1811, %v1790
  %1841 = vst.msk [vmem:[%s3 + $0xe8] sm:$0xff] %vm1811, %v1791
  %1842 = vst.msk [vmem:[%s3 + $0xf0] sm:$0xff] %vm1811, %v1792
  %1843 = vst.msk [vmem:[%s3 + $0xf8] sm:$0xff] %vm1811, %v1793
  %1844 = vst.msk [vmem:[%s3 + $0x100] sm:$0xff] %vm1811, %v1794
  %1845 = vst.msk [vmem:[%s3 + $0x108] sm:$0xff] %vm1811, %v1795
  %1846 = vst.msk [vmem:[%s3 + $0x110] sm:$0xff] %vm1811, %v1796
  %1847 = vst.msk [vmem:[%s3 + $0x118] sm:$0xff] %vm1811, %v1797
  %1848 = vst.msk [vmem:[%s3 + $0x120] sm:$0xff] %vm1811, %v1798
  %1849 = vst.msk [vmem:[%s3 + $0x128] sm:$0xff] %vm1811, %v1799
  %1850 = vst.msk [vmem:[%s3 + $0x130] sm:$0xff] %vm1811, %v1800
  %1851 = vst.msk [vmem:[%s3 + $0x138] sm:$0xff] %vm1811, %v1801
  %1852 = vst.msk [vmem:[%s3 + $0x140] sm:$0xff] %vm1811, %v1802
  %1853 = vst.msk [vmem:[%s3 + $0x148] sm:$0xff] %vm1811, %v1803
  %1854 = vst.msk [vmem:[%s3 + $0x150] sm:$0xff] %vm1811, %v1804
  %1855 = vst.msk [vmem:[%s3 + $0x158] sm:$0xff] %vm1811, %v1805
  %1856 = vst.msk [vmem:[%s3 + $0x160] sm:$0xff] %vm1811, %v1806
  %1857 = vst.msk [vmem:[%s3 + $0x168] sm:$0xff] %vm1811, %v1807
  %1858 = vst.msk [vmem:[%s3 + $0x170] sm:$0xff] %vm1811, %v1808
  %1859 = vst.msk [vmem:[%s3 + $0x178] sm:$0xff] %vm1811, %v1809
  %1860 = vst.msk [vmem:[%s3 + $0x180] sm:$0xff] %vm1811, %v1810
  // Predicated region
  $region14: #{model_forward.3} parent=0 // pred_check
    _
  $region15: #{model_forward.3} parent=0 // pred_check_branch
    %1862 = sbr.rel (0) target = $region17
  $region16: #{model_forward.3} parent=0 // pred_region
    _
  $region17: #{model_forward.3} parent=0 // pred_fallthru
    _
  // Predicated region
  $region18: #{model_forward.3} parent=0 // pred_check
    _
  $region19: #{model_forward.3} parent=0 // pred_check_branch
    %1864 = sbr.rel (0) target = $region21
  $region20: #{model_forward.3} parent=0 // pred_region
    _
  $region21: #{model_forward.3} parent=0 // pred_fallthru
    _

// kernel: model_forward.4
$region0: #{model_forward.4}
  #allocation0 [shape = 'u32[]', space=smem, size = 0x4, offset = 0x4, fixed_abs, tag = 'smem constant byte address 0x4 - core index']
  #allocation1 [shape = 'u32[72,128]{1,0:T(1,128)}', space=vmem, size = 0x9000, scoped, tag = 'internal scratch']
  %s0 = inlined_call_operand.vmem [shape: f32[4,98,288], index: 0, kind: input, shape index: {}]
  %s1 = inlined_call_operand.vmem [shape: f32[288,64], index: 1, kind: input, shape index: {}]
  %s2 = inlined_call_operand.vmem [shape: f32[1,64], index: 2, kind: input, shape index: {}]
  %s3 = inlined_call_operand.vmem [shape: f32[98,64], index: 3, kind: output, shape index: {}]
  %s4 = sld [smem:[#allocation0]]
  $region22: #{model_forward.4} parent=0
    _
  %s6 = ssub.s32 1, %s4
  %s7 = scalar_select 0, %s6, %s4
  // Predicated region
  $region2: #{model_forward.4} parent=0 // pred_check
    _
  $region3: #{model_forward.4} parent=0 // pred_check_branch
    %9 = sbr.rel (0) target = $region5
  $region4: #{model_forward.4} parent=0 // pred_region
    _
  $region5: #{model_forward.4} parent=0 // pred_fallthru
    _
  // Predicated region
  $region6: #{model_forward.4} parent=0 // pred_check
    _
  $region7: #{model_forward.4} parent=0 // pred_check_branch
    %11 = sbr.rel (0) target = $region9
  $region8: #{model_forward.4} parent=0 // pred_region
    _
  $region9: #{model_forward.4} parent=0 // pred_fallthru
    _
  // Predicated region
  $region10: #{model_forward.4} parent=0 // pred_check
    _
  $region11: #{model_forward.4} parent=0 // pred_check_branch
    %13 = sbr.rel (0) target = $region13
  $region12: #{model_forward.4} parent=0 // pred_region
    _
  $region13: #{model_forward.4} parent=0 // pred_fallthru
    _
  %v14 = vld [vmem:[%s1] sm:$0xff]
  %v15 = vld [vmem:[%s1 + $0x8] sm:$0xff]
  %v16 = vld [vmem:[%s1 + $0x10] sm:$0xff]
  %v17 = vld [vmem:[%s1 + $0x18] sm:$0xff]
  %v18 = vld [vmem:[%s1 + $0x20] sm:$0xff]
  %v19 = vld [vmem:[%s1 + $0x28] sm:$0xff]
  %v20 = vld [vmem:[%s1 + $0x30] sm:$0xff]
  %v21 = vld [vmem:[%s1 + $0x38] sm:$0xff]
  %v22 = vld [vmem:[%s1 + $0x40] sm:$0xff]
  %v23 = vld [vmem:[%s1 + $0x48] sm:$0xff]
  %v24 = vld [vmem:[%s1 + $0x50] sm:$0xff]
  %v25 = vld [vmem:[%s1 + $0x58] sm:$0xff]
  %v26 = vld [vmem:[%s1 + $0x60] sm:$0xff]
  %v27 = vld [vmem:[%s1 + $0x68] sm:$0xff]
  %v28 = vld [vmem:[%s1 + $0x70] sm:$0xff]
  %v29 = vld [vmem:[%s1 + $0x78] sm:$0xff]
  %v30 = vld [vmem:[%s1 + $0x80] sm:$0xff]
  %v31 = vld [vmem:[%s1 + $0x88] sm:$0xff]
  %v32 = vld [vmem:[%s1 + $0x90] sm:$0xff]
  %v33 = vld [vmem:[%s1 + $0x98] sm:$0xff]
  %v34 = vld [vmem:[%s1 + $0xa0] sm:$0xff]
  %v35 = vld [vmem:[%s1 + $0xa8] sm:$0xff]
  %v36 = vld [vmem:[%s1 + $0xb0] sm:$0xff]
  %v37 = vld [vmem:[%s1 + $0xb8] sm:$0xff]
  %v38 = vld [vmem:[%s1 + $0xc0] sm:$0xff]
  %v39 = vld [vmem:[%s1 + $0xc8] sm:$0xff]
  %v40 = vld [vmem:[%s1 + $0xd0] sm:$0xff]
  %v41 = vld [vmem:[%s1 + $0xd8] sm:$0xff]
  %v42 = vld [vmem:[%s1 + $0xe0] sm:$0xff]
  %v43 = vld [vmem:[%s1 + $0xe8] sm:$0xff]
  %v44 = vld [vmem:[%s1 + $0xf0] sm:$0xff]
  %v45 = vld [vmem:[%s1 + $0xf8] sm:$0xff]
  %v46 = vld [vmem:[%s1 + $0x100] sm:$0xff]
  %v47 = vld [vmem:[%s1 + $0x108] sm:$0xff]
  %v48 = vld [vmem:[%s1 + $0x110] sm:$0xff]
  %v49 = vld [vmem:[%s1 + $0x118] sm:$0xff]
  %v50 = vld [vmem:[%s2] sm:$0x1]
  %v51 = vld [vmem:[%s0] sm:$0xff]
  %v52 = vld [vmem:[%s0 + $0x8] sm:$0xff]
  %v53 = vld [vmem:[%s0 + $0x10] sm:$0xff]
  %v54 = vld [vmem:[%s0 + $0x18] sm:$0xff]
  %v55 = vld [vmem:[%s0 + $0x20] sm:$0xff]
  %v56 = vld [vmem:[%s0 + $0x28] sm:$0xff]
  %v57 = vld [vmem:[%s0 + $0x30] sm:$0xff]
  %v58 = vld [vmem:[%s0 + $0x38] sm:$0xff]
  %v59 = vld [vmem:[%s0 + $0x40] sm:$0xff]
  %v60 = vld [vmem:[%s0 + $0x48] sm:$0xff]
  %v61 = vld [vmem:[%s0 + $0x50] sm:$0xff]
  %v62 = vld [vmem:[%s0 + $0x58] sm:$0xff]
  %v63 = vld [vmem:[%s0 + $0x60] sm:$0xff]
  %v64 = vld [vmem:[%s0 + $0x68] sm:$0xff]
  %v65 = vld [vmem:[%s0 + $0x70] sm:$0xff]
  %v66 = vld [vmem:[%s0 + $0x78] sm:$0xff]
  %v67 = vld [vmem:[%s0 + $0x80] sm:$0xff]
  %v68 = vld [vmem:[%s0 + $0x88] sm:$0xff]
  %v69 = vld [vmem:[%s0 + $0x90] sm:$0xff]
  %v70 = vld [vmem:[%s0 + $0x98] sm:$0xff]
  %v71 = vld [vmem:[%s0 + $0xa0] sm:$0xff]
  %v72 = vld [vmem:[%s0 + $0xa8] sm:$0xff]
  %v73 = vld [vmem:[%s0 + $0xb0] sm:$0xff]
  %v74 = vld [vmem:[%s0 + $0xb8] sm:$0xff]
  %v75 = vld [vmem:[%s0 + $0xc0] sm:$0xff]
  %v76 = vld [vmem:[%s0 + $0xc8] sm:$0xff]
  %v77 = vld [vmem:[%s0 + $0xd0] sm:$0xff]
  %v78 = vld [vmem:[%s0 + $0xd8] sm:$0xff]
  %v79 = vld [vmem:[%s0 + $0xe0] sm:$0xff]
  %v80 = vld [vmem:[%s0 + $0xe8] sm:$0xff]
  %v81 = vld [vmem:[%s0 + $0xf0] sm:$0xff]
  %v82 = vld [vmem:[%s0 + $0xf8] sm:$0xff]
  %v83 = vld [vmem:[%s0 + $0x100] sm:$0xff]
  %v84 = vld [vmem:[%s0 + $0x108] sm:$0xff]
  %v85 = vld [vmem:[%s0 + $0x110] sm:$0xff]
  %v86 = vld [vmem:[%s0 + $0x118] sm:$0xff]
  %v87 = vld [vmem:[%s0 + $0x120] sm:$0x3]
  %v88 = vld [vmem:[%s0 + $0x128] sm:$0x3]
  %v89 = vld [vmem:[%s0 + $0x130] sm:$0x3]
  %v91 = vperm.slane %v50, 0
  %vm93 = vcmask 261120
  %v95 = vsel %vm93, %v53, 0
  %v98 = vsel %vm93, %v56, 0
  %v101 = vsel %vm93, %v59, 0
  %v104 = vsel %vm93, %v62, 0
  %v107 = vsel %vm93, %v65, 0
  %v110 = vsel %vm93, %v68, 0
  %v113 = vsel %vm93, %v71, 0
  %v116 = vsel %vm93, %v74, 0
  %v119 = vsel %vm93, %v77, 0
  %v122 = vsel %vm93, %v80, 0
  %v125 = vsel %vm93, %v83, 0
  %v128 = vsel %vm93, %v86, 0
  %v131 = vsel %vm93, %v89, 0
  %133 = vmatpush.msra.mxu0 %v29
  %134 = vmatpush.msra.mxu0 %v28
  %135 = vmatpush.msra.mxu0 %v27
  %136 = vmatpush.msra.mxu0 %v26
  %137 = vmatpush.msra.mxu0 %v25
  %138 = vmatpush.msra.mxu0 %v24
  %139 = vmatpush.msra.mxu0 %v23
  %140 = vmatpush.msra.mxu0 %v22
  %141 = vmatpush.msra.mxu0 %v21
  %142 = vmatpush.msra.mxu0 %v20
  %143 = vmatpush.msra.mxu0 %v19
  %144 = vmatpush.msra.mxu0 %v18
  %145 = vmatpush.msra.mxu0 %v17
  %146 = vmatpush.msra.mxu0 %v16
  %147 = vmatpush.msra.mxu0 %v15
  %148 = vmatpush.msra.mxu0 %v14
  %149 = vmatmul.f32.gmra.mxu0 %v51
  %v150 = vpop.f32.mrf.mxu0
  %v151 = vadd.f32 %v91, %v150
  %152 = vmatmul.f32.gmra.mxu0 %v54
  %v153 = vpop.f32.mrf.mxu0
  %v154 = vadd.f32 %v91, %v153
  %155 = vmatmul.f32.gmra.mxu0 %v57
  %v156 = vpop.f32.mrf.mxu0
  %v157 = vadd.f32 %v91, %v156
  %158 = vmatmul.f32.gmra.mxu0 %v60
  %v159 = vpop.f32.mrf.mxu0
  %v160 = vadd.f32 %v91, %v159
  %161 = vmatmul.f32.gmra.mxu0 %v63
  %v162 = vpop.f32.mrf.mxu0
  %v163 = vadd.f32 %v91, %v162
  %164 = vmatmul.f32.gmra.mxu0 %v66
  %v165 = vpop.f32.mrf.mxu0
  %v166 = vadd.f32 %v91, %v165
  %167 = vmatmul.f32.gmra.mxu0 %v69
  %v168 = vpop.f32.mrf.mxu0
  %v169 = vadd.f32 %v91, %v168
  %170 = vmatmul.f32.gmra.mxu0 %v72
  %v171 = vpop.f32.mrf.mxu0
  %v172 = vadd.f32 %v91, %v171
  %173 = vmatmul.f32.gmra.mxu0 %v75
  %v174 = vpop.f32.mrf.mxu0
  %v175 = vadd.f32 %v91, %v174
  %176 = vmatmul.f32.gmra.mxu0 %v78
  %v177 = vpop.f32.mrf.mxu0
  %v178 = vadd.f32 %v91, %v177
  %179 = vmatmul.f32.gmra.mxu0 %v81
  %v180 = vpop.f32.mrf.mxu0
  %v181 = vadd.f32 %v91, %v180
  %182 = vmatmul.f32.gmra.mxu0 %v84
  %v183 = vpop.f32.mrf.mxu0
  %v184 = vadd.f32 %v91, %v183
  %185 = vmatmul.f32.gmra.mxu0 %v87
  %v186 = vpop.f32.mrf.mxu0
  %v187 = vadd.f32 %v91, %v186
  %188 = vdwg.mxu0
  %189 = vmatpush.msra.mxu0 %v45
  %190 = vmatpush.msra.mxu0 %v44
  %191 = vmatpush.msra.mxu0 %v43
  %192 = vmatpush.msra.mxu0 %v42
  %193 = vmatpush.msra.mxu0 %v41
  %194 = vmatpush.msra.mxu0 %v40
  %195 = vmatpush.msra.mxu0 %v39
  %196 = vmatpush.msra.mxu0 %v38
  %197 = vmatpush.msra.mxu0 %v37
  %198 = vmatpush.msra.mxu0 %v36
  %199 = vmatpush.msra.mxu0 %v35
  %200 = vmatpush.msra.mxu0 %v34
  %201 = vmatpush.msra.mxu0 %v33
  %202 = vmatpush.msra.mxu0 %v32
  %203 = vmatpush.msra.mxu0 %v31
  %204 = vmatpush.msra.mxu0 %v30
  %205 = vmatmul.f32.gmra.mxu0 %v52
  %v206 = vpop.f32.mrf.mxu0
  %v207 = vadd.f32 %v151, %v206
  %208 = vmatmul.f32.gmra.mxu0 %v55
  %v209 = vpop.f32.mrf.mxu0
  %v210 = vadd.f32 %v154, %v209
  %211 = vmatmul.f32.gmra.mxu0 %v58
  %v212 = vpop.f32.mrf.mxu0
  %v213 = vadd.f32 %v157, %v212
  %214 = vmatmul.f32.gmra.mxu0 %v61
  %v215 = vpop.f32.mrf.mxu0
  %v216 = vadd.f32 %v160, %v215
  %217 = vmatmul.f32.gmra.mxu0 %v64
  %v218 = vpop.f32.mrf.mxu0
  %v219 = vadd.f32 %v163, %v218
  %220 = vmatmul.f32.gmra.mxu0 %v67
  %v221 = vpop.f32.mrf.mxu0
  %v222 = vadd.f32 %v166, %v221
  %223 = vmatmul.f32.gmra.mxu0 %v70
  %v224 = vpop.f32.mrf.mxu0
  %v225 = vadd.f32 %v169, %v224
  %226 = vmatmul.f32.gmra.mxu0 %v73
  %v227 = vpop.f32.mrf.mxu0
  %v228 = vadd.f32 %v172, %v227
  %229 = vmatmul.f32.gmra.mxu0 %v76
  %v230 = vpop.f32.mrf.mxu0
  %v231 = vadd.f32 %v175, %v230
  %232 = vmatmul.f32.gmra.mxu0 %v79
  %v233 = vpop.f32.mrf.mxu0
  %v234 = vadd.f32 %v178, %v233
  %235 = vmatmul.f32.gmra.mxu0 %v82
  %v236 = vpop.f32.mrf.mxu0
  %v237 = vadd.f32 %v181, %v236
  %238 = vmatmul.f32.gmra.mxu0 %v85
  %v239 = vpop.f32.mrf.mxu0
  %v240 = vadd.f32 %v184, %v239
  %241 = vmatmul.f32.gmra.mxu0 %v88
  %v242 = vpop.f32.mrf.mxu0
  %v243 = vadd.f32 %v187, %v242
  %244 = vdwg.mxu0
  %245 = vmatpush.msra.mxu0 0.0
  %246 = vmatpush.msra.mxu0 0.0
  %247 = vmatpush.msra.mxu0 0.0
  %248 = vmatpush.msra.mxu0 0.0
  %249 = vmatpush.msra.mxu0 0.0
  %250 = vmatpush.msra.mxu0 0.0
  %251 = vmatpush.msra.mxu0 0.0
  %252 = vmatpush.msra.mxu0 0.0
  %253 = vmatpush.msra.mxu0 0.0
  %254 = vmatpush.msra.mxu0 0.0
  %255 = vmatpush.msra.mxu0 0.0
  %256 = vmatpush.msra.mxu0 0.0
  %257 = vmatpush.msra.mxu0 %v49
  %258 = vmatpush.msra.mxu0 %v48
  %259 = vmatpush.msra.mxu0 %v47
  %260 = vmatpush.msra.mxu0 %v46
  %261 = vmatmul.f32.gmra.mxu0 %v95
  %v262 = vpop.f32.mrf.mxu0
  %v263 = vadd.f32 %v207, %v262
  %264 = vmatmul.f32.gmra.mxu0 %v98
  %v265 = vpop.f32.mrf.mxu0
  %v266 = vadd.f32 %v210, %v265
  %267 = vmatmul.f32.gmra.mxu0 %v101
  %v268 = vpop.f32.mrf.mxu0
  %v269 = vadd.f32 %v213, %v268
  %270 = vmatmul.f32.gmra.mxu0 %v104
  %v271 = vpop.f32.mrf.mxu0
  %v272 = vadd.f32 %v216, %v271
  %273 = vmatmul.f32.gmra.mxu0 %v107
  %v274 = vpop.f32.mrf.mxu0
  %v275 = vadd.f32 %v219, %v274
  %276 = vmatmul.f32.gmra.mxu0 %v110
  %v277 = vpop.f32.mrf.mxu0
  %v278 = vadd.f32 %v222, %v277
  %279 = vmatmul.f32.gmra.mxu0 %v113
  %v280 = vpop.f32.mrf.mxu0
  %v281 = vadd.f32 %v225, %v280
  %282 = vmatmul.f32.gmra.mxu0 %v116
  %v283 = vpop.f32.mrf.mxu0
  %v284 = vadd.f32 %v228, %v283
  %285 = vmatmul.f32.gmra.mxu0 %v119
  %v286 = vpop.f32.mrf.mxu0
  %v287 = vadd.f32 %v231, %v286
  %288 = vmatmul.f32.gmra.mxu0 %v122
  %v289 = vpop.f32.mrf.mxu0
  %v290 = vadd.f32 %v234, %v289
  %291 = vmatmul.f32.gmra.mxu0 %v125
  %v292 = vpop.f32.mrf.mxu0
  %v293 = vadd.f32 %v237, %v292
  %294 = vmatmul.f32.gmra.mxu0 %v128
  %v295 = vpop.f32.mrf.mxu0
  %v296 = vadd.f32 %v240, %v295
  %297 = vmatmul.f32.gmra.mxu0 %v131
  %v298 = vpop.f32.mrf.mxu0
  %v299 = vadd.f32 %v243, %v298
  %300 = vdwg.mxu0
  %v301 = vmax.f32 %v263, 0.0
  %v302 = vmax.f32 %v266, 0.0
  %v303 = vmax.f32 %v269, 0.0
  %v304 = vmax.f32 %v272, 0.0
  %v305 = vmax.f32 %v275, 0.0
  %v306 = vmax.f32 %v278, 0.0
  %v307 = vmax.f32 %v281, 0.0
  %v308 = vmax.f32 %v284, 0.0
  %v309 = vmax.f32 %v287, 0.0
  %v310 = vmax.f32 %v290, 0.0
  %v311 = vmax.f32 %v293, 0.0
  %v312 = vmax.f32 %v296, 0.0
  %v313 = vmax.f32 %v299, 0.0
  %s314 = scalar_lea.vmem %s0, 312
  %v315 = vld [vmem:[%s314] sm:$0xff]
  %v316 = vld [vmem:[%s314 + $0x8] sm:$0xff]
  %v317 = vld [vmem:[%s314 + $0x10] sm:$0xff]
  %v318 = vld [vmem:[%s314 + $0x18] sm:$0xff]
  %v319 = vld [vmem:[%s314 + $0x20] sm:$0xff]
  %v320 = vld [vmem:[%s314 + $0x28] sm:$0xff]
  %v321 = vld [vmem:[%s314 + $0x30] sm:$0xff]
  %v322 = vld [vmem:[%s314 + $0x38] sm:$0xff]
  %v323 = vld [vmem:[%s314 + $0x40] sm:$0xff]
  %v324 = vld [vmem:[%s314 + $0x48] sm:$0xff]
  %v325 = vld [vmem:[%s314 + $0x50] sm:$0xff]
  %v326 = vld [vmem:[%s314 + $0x58] sm:$0xff]
  %v327 = vld [vmem:[%s314 + $0x60] sm:$0xff]
  %v328 = vld [vmem:[%s314 + $0x68] sm:$0xff]
  %v329 = vld [vmem:[%s314 + $0x70] sm:$0xff]
  %v330 = vld [vmem:[%s314 + $0x78] sm:$0xff]
  %v331 = vld [vmem:[%s314 + $0x80] sm:$0xff]
  %v332 = vld [vmem:[%s314 + $0x88] sm:$0xff]
  %v333 = vld [vmem:[%s314 + $0x90] sm:$0xff]
  %v334 = vld [vmem:[%s314 + $0x98] sm:$0xff]
  %v335 = vld [vmem:[%s314 + $0xa0] sm:$0xff]
  %v336 = vld [vmem:[%s314 + $0xa8] sm:$0xff]
  %v337 = vld [vmem:[%s314 + $0xb0] sm:$0xff]
  %v338 = vld [vmem:[%s314 + $0xb8] sm:$0xff]
  %v339 = vld [vmem:[%s314 + $0xc0] sm:$0xff]
  %v340 = vld [vmem:[%s314 + $0xc8] sm:$0xff]
  %v341 = vld [vmem:[%s314 + $0xd0] sm:$0xff]
  %v342 = vld [vmem:[%s314 + $0xd8] sm:$0xff]
  %v343 = vld [vmem:[%s314 + $0xe0] sm:$0xff]
  %v344 = vld [vmem:[%s314 + $0xe8] sm:$0xff]
  %v345 = vld [vmem:[%s314 + $0xf0] sm:$0xff]
  %v346 = vld [vmem:[%s314 + $0xf8] sm:$0xff]
  %v347 = vld [vmem:[%s314 + $0x100] sm:$0xff]
  %v348 = vld [vmem:[%s314 + $0x108] sm:$0xff]
  %v349 = vld [vmem:[%s314 + $0x110] sm:$0xff]
  %v350 = vld [vmem:[%s314 + $0x118] sm:$0xff]
  %v351 = vld [vmem:[%s314 + $0x120] sm:$0x3]
  %v352 = vld [vmem:[%s314 + $0x128] sm:$0x3]
  %v353 = vld [vmem:[%s314 + $0x130] sm:$0x3]
  %v355 = vsel %vm93, %v317, 0
  %v358 = vsel %vm93, %v320, 0
  %v361 = vsel %vm93, %v323, 0
  %v364 = vsel %vm93, %v326, 0
  %v367 = vsel %vm93, %v329, 0
  %v370 = vsel %vm93, %v332, 0
  %v373 = vsel %vm93, %v335, 0
  %v376 = vsel %vm93, %v338, 0
  %v379 = vsel %vm93, %v341, 0
  %v382 = vsel %vm93, %v344, 0
  %v385 = vsel %vm93, %v347, 0
  %v388 = vsel %vm93, %v350, 0
  %v391 = vsel %vm93, %v353, 0
  %393 = vmatpush.msra.mxu0 %v29
  %394 = vmatpush.msra.mxu0 %v28
  %395 = vmatpush.msra.mxu0 %v27
  %396 = vmatpush.msra.mxu0 %v26
  %397 = vmatpush.msra.mxu0 %v25
  %398 = vmatpush.msra.mxu0 %v24
  %399 = vmatpush.msra.mxu0 %v23
  %400 = vmatpush.msra.mxu0 %v22
  %401 = vmatpush.msra.mxu0 %v21
  %402 = vmatpush.msra.mxu0 %v20
  %403 = vmatpush.msra.mxu0 %v19
  %404 = vmatpush.msra.mxu0 %v18
  %405 = vmatpush.msra.mxu0 %v17
  %406 = vmatpush.msra.mxu0 %v16
  %407 = vmatpush.msra.mxu0 %v15
  %408 = vmatpush.msra.mxu0 %v14
  %409 = vmatmul.f32.gmra.mxu0 %v315
  %v410 = vpop.f32.mrf.mxu0
  %v411 = vadd.f32 %v91, %v410
  %412 = vmatmul.f32.gmra.mxu0 %v318
  %v413 = vpop.f32.mrf.mxu0
  %v414 = vadd.f32 %v91, %v413
  %415 = vmatmul.f32.gmra.mxu0 %v321
  %v416 = vpop.f32.mrf.mxu0
  %v417 = vadd.f32 %v91, %v416
  %418 = vmatmul.f32.gmra.mxu0 %v324
  %v419 = vpop.f32.mrf.mxu0
  %v420 = vadd.f32 %v91, %v419
  %421 = vmatmul.f32.gmra.mxu0 %v327
  %v422 = vpop.f32.mrf.mxu0
  %v423 = vadd.f32 %v91, %v422
  %424 = vmatmul.f32.gmra.mxu0 %v330
  %v425 = vpop.f32.mrf.mxu0
  %v426 = vadd.f32 %v91, %v425
  %427 = vmatmul.f32.gmra.mxu0 %v333
  %v428 = vpop.f32.mrf.mxu0
  %v429 = vadd.f32 %v91, %v428
  %430 = vmatmul.f32.gmra.mxu0 %v336
  %v431 = vpop.f32.mrf.mxu0
  %v432 = vadd.f32 %v91, %v431
  %433 = vmatmul.f32.gmra.mxu0 %v339
  %v434 = vpop.f32.mrf.mxu0
  %v435 = vadd.f32 %v91, %v434
  %436 = vmatmul.f32.gmra.mxu0 %v342
  %v437 = vpop.f32.mrf.mxu0
  %v438 = vadd.f32 %v91, %v437
  %439 = vmatmul.f32.gmra.mxu0 %v345
  %v440 = vpop.f32.mrf.mxu0
  %v441 = vadd.f32 %v91, %v440
  %442 = vmatmul.f32.gmra.mxu0 %v348
  %v443 = vpop.f32.mrf.mxu0
  %v444 = vadd.f32 %v91, %v443
  %445 = vmatmul.f32.gmra.mxu0 %v351
  %v446 = vpop.f32.mrf.mxu0
  %v447 = vadd.f32 %v91, %v446
  %448 = vdwg.mxu0
  %449 = vmatpush.msra.mxu0 %v45
  %450 = vmatpush.msra.mxu0 %v44
  %451 = vmatpush.msra.mxu0 %v43
  %452 = vmatpush.msra.mxu0 %v42
  %453 = vmatpush.msra.mxu0 %v41
  %454 = vmatpush.msra.mxu0 %v40
  %455 = vmatpush.msra.mxu0 %v39
  %456 = vmatpush.msra.mxu0 %v38
  %457 = vmatpush.msra.mxu0 %v37
  %458 = vmatpush.msra.mxu0 %v36
  %459 = vmatpush.msra.mxu0 %v35
  %460 = vmatpush.msra.mxu0 %v34
  %461 = vmatpush.msra.mxu0 %v33
  %462 = vmatpush.msra.mxu0 %v32
  %463 = vmatpush.msra.mxu0 %v31
  %464 = vmatpush.msra.mxu0 %v30
  %465 = vmatmul.f32.gmra.mxu0 %v316
  %v466 = vpop.f32.mrf.mxu0
  %v467 = vadd.f32 %v411, %v466
  %468 = vmatmul.f32.gmra.mxu0 %v319
  %v469 = vpop.f32.mrf.mxu0
  %v470 = vadd.f32 %v414, %v469
  %471 = vmatmul.f32.gmra.mxu0 %v322
  %v472 = vpop.f32.mrf.mxu0
  %v473 = vadd.f32 %v417, %v472
  %474 = vmatmul.f32.gmra.mxu0 %v325
  %v475 = vpop.f32.mrf.mxu0
  %v476 = vadd.f32 %v420, %v475
  %477 = vmatmul.f32.gmra.mxu0 %v328
  %v478 = vpop.f32.mrf.mxu0
  %v479 = vadd.f32 %v423, %v478
  %480 = vmatmul.f32.gmra.mxu0 %v331
  %v481 = vpop.f32.mrf.mxu0
  %v482 = vadd.f32 %v426, %v481
  %483 = vmatmul.f32.gmra.mxu0 %v334
  %v484 = vpop.f32.mrf.mxu0
  %v485 = vadd.f32 %v429, %v484
  %486 = vmatmul.f32.gmra.mxu0 %v337
  %v487 = vpop.f32.mrf.mxu0
  %v488 = vadd.f32 %v432, %v487
  %489 = vmatmul.f32.gmra.mxu0 %v340
  %v490 = vpop.f32.mrf.mxu0
  %v491 = vadd.f32 %v435, %v490
  %492 = vmatmul.f32.gmra.mxu0 %v343
  %v493 = vpop.f32.mrf.mxu0
  %v494 = vadd.f32 %v438, %v493
  %495 = vmatmul.f32.gmra.mxu0 %v346
  %v496 = vpop.f32.mrf.mxu0
  %v497 = vadd.f32 %v441, %v496
  %498 = vmatmul.f32.gmra.mxu0 %v349
  %v499 = vpop.f32.mrf.mxu0
  %v500 = vadd.f32 %v444, %v499
  %501 = vmatmul.f32.gmra.mxu0 %v352
  %v502 = vpop.f32.mrf.mxu0
  %v503 = vadd.f32 %v447, %v502
  %504 = vdwg.mxu0
  %505 = vmatpush.msra.mxu0 0.0
  %506 = vmatpush.msra.mxu0 0.0
  %507 = vmatpush.msra.mxu0 0.0
  %508 = vmatpush.msra.mxu0 0.0
  %509 = vmatpush.msra.mxu0 0.0
  %510 = vmatpush.msra.mxu0 0.0
  %511 = vmatpush.msra.mxu0 0.0
  %512 = vmatpush.msra.mxu0 0.0
  %513 = vmatpush.msra.mxu0 0.0
  %514 = vmatpush.msra.mxu0 0.0
  %515 = vmatpush.msra.mxu0 0.0
  %516 = vmatpush.msra.mxu0 0.0
  %517 = vmatpush.msra.mxu0 %v49
  %518 = vmatpush.msra.mxu0 %v48
  %519 = vmatpush.msra.mxu0 %v47
  %520 = vmatpush.msra.mxu0 %v46
  %521 = vmatmul.f32.gmra.mxu0 %v355
  %v522 = vpop.f32.mrf.mxu0
  %v523 = vadd.f32 %v467, %v522
  %524 = vmatmul.f32.gmra.mxu0 %v358
  %v525 = vpop.f32.mrf.mxu0
  %v526 = vadd.f32 %v470, %v525
  %527 = vmatmul.f32.gmra.mxu0 %v361
  %v528 = vpop.f32.mrf.mxu0
  %v529 = vadd.f32 %v473, %v528
  %530 = vmatmul.f32.gmra.mxu0 %v364
  %v531 = vpop.f32.mrf.mxu0
  %v532 = vadd.f32 %v476, %v531
  %533 = vmatmul.f32.gmra.mxu0 %v367
  %v534 = vpop.f32.mrf.mxu0
  %v535 = vadd.f32 %v479, %v534
  %536 = vmatmul.f32.gmra.mxu0 %v370
  %v537 = vpop.f32.mrf.mxu0
  %v538 = vadd.f32 %v482, %v537
  %539 = vmatmul.f32.gmra.mxu0 %v373
  %v540 = vpop.f32.mrf.mxu0
  %v541 = vadd.f32 %v485, %v540
  %542 = vmatmul.f32.gmra.mxu0 %v376
  %v543 = vpop.f32.mrf.mxu0
  %v544 = vadd.f32 %v488, %v543
  %545 = vmatmul.f32.gmra.mxu0 %v379
  %v546 = vpop.f32.mrf.mxu0
  %v547 = vadd.f32 %v491, %v546
  %548 = vmatmul.f32.gmra.mxu0 %v382
  %v549 = vpop.f32.mrf.mxu0
  %v550 = vadd.f32 %v494, %v549
  %551 = vmatmul.f32.gmra.mxu0 %v385
  %v552 = vpop.f32.mrf.mxu0
  %v553 = vadd.f32 %v497, %v552
  %554 = vmatmul.f32.gmra.mxu0 %v388
  %v555 = vpop.f32.mrf.mxu0
  %v556 = vadd.f32 %v500, %v555
  %557 = vmatmul.f32.gmra.mxu0 %v391
  %v558 = vpop.f32.mrf.mxu0
  %v559 = vadd.f32 %v503, %v558
  %560 = vdwg.mxu0
  %v561 = vmax.f32 %v523, 0.0
  %v562 = vmax.f32 %v526, 0.0
  %v563 = vmax.f32 %v529, 0.0
  %v564 = vmax.f32 %v532, 0.0
  %v565 = vmax.f32 %v535, 0.0
  %v566 = vmax.f32 %v538, 0.0
  %v567 = vmax.f32 %v541, 0.0
  %v568 = vmax.f32 %v544, 0.0
  %v569 = vmax.f32 %v547, 0.0
  %v570 = vmax.f32 %v550, 0.0
  %v571 = vmax.f32 %v553, 0.0
  %v572 = vmax.f32 %v556, 0.0
  %v573 = vmax.f32 %v559, 0.0
  %v574 = vmax.f32 %v301, %v561
  %v575 = vmax.f32 %v302, %v562
  %v576 = vmax.f32 %v303, %v563
  %v577 = vmax.f32 %v304, %v564
  %v578 = vmax.f32 %v305, %v565
  %v579 = vmax.f32 %v306, %v566
  %v580 = vmax.f32 %v307, %v567
  %v581 = vmax.f32 %v308, %v568
  %v582 = vmax.f32 %v309, %v569
  %v583 = vmax.f32 %v310, %v570
  %v584 = vmax.f32 %v311, %v571
  %v585 = vmax.f32 %v312, %v572
  %v586 = vmax.f32 %v313, %v573
  %s587 = scalar_lea.vmem %s0, 624
  %v588 = vld [vmem:[%s587] sm:$0xff]
  %v589 = vld [vmem:[%s587 + $0x8] sm:$0xff]
  %v590 = vld [vmem:[%s587 + $0x10] sm:$0xff]
  %v591 = vld [vmem:[%s587 + $0x18] sm:$0xff]
  %v592 = vld [vmem:[%s587 + $0x20] sm:$0xff]
  %v593 = vld [vmem:[%s587 + $0x28] sm:$0xff]
  %v594 = vld [vmem:[%s587 + $0x30] sm:$0xff]
  %v595 = vld [vmem:[%s587 + $0x38] sm:$0xff]
  %v596 = vld [vmem:[%s587 + $0x40] sm:$0xff]
  %v597 = vld [vmem:[%s587 + $0x48] sm:$0xff]
  %v598 = vld [vmem:[%s587 + $0x50] sm:$0xff]
  %v599 = vld [vmem:[%s587 + $0x58] sm:$0xff]
  %v600 = vld [vmem:[%s587 + $0x60] sm:$0xff]
  %v601 = vld [vmem:[%s587 + $0x68] sm:$0xff]
  %v602 = vld [vmem:[%s587 + $0x70] sm:$0xff]
  %v603 = vld [vmem:[%s587 + $0x78] sm:$0xff]
  %v604 = vld [vmem:[%s587 + $0x80] sm:$0xff]
  %v605 = vld [vmem:[%s587 + $0x88] sm:$0xff]
  %v606 = vld [vmem:[%s587 + $0x90] sm:$0xff]
  %v607 = vld [vmem:[%s587 + $0x98] sm:$0xff]
  %v608 = vld [vmem:[%s587 + $0xa0] sm:$0xff]
  %v609 = vld [vmem:[%s587 + $0xa8] sm:$0xff]
  %v610 = vld [vmem:[%s587 + $0xb0] sm:$0xff]
  %v611 = vld [vmem:[%s587 + $0xb8] sm:$0xff]
  %v612 = vld [vmem:[%s587 + $0xc0] sm:$0xff]
  %v613 = vld [vmem:[%s587 + $0xc8] sm:$0xff]
  %v614 = vld [vmem:[%s587 + $0xd0] sm:$0xff]
  %v615 = vld [vmem:[%s587 + $0xd8] sm:$0xff]
  %v616 = vld [vmem:[%s587 + $0xe0] sm:$0xff]
  %v617 = vld [vmem:[%s587 + $0xe8] sm:$0xff]
  %v618 = vld [vmem:[%s587 + $0xf0] sm:$0xff]
  %v619 = vld [vmem:[%s587 + $0xf8] sm:$0xff]
  %v620 = vld [vmem:[%s587 + $0x100] sm:$0xff]
  %v621 = vld [vmem:[%s587 + $0x108] sm:$0xff]
  %v622 = vld [vmem:[%s587 + $0x110] sm:$0xff]
  %v623 = vld [vmem:[%s587 + $0x118] sm:$0xff]
  %v624 = vld [vmem:[%s587 + $0x120] sm:$0x3]
  %v625 = vld [vmem:[%s587 + $0x128] sm:$0x3]
  %v626 = vld [vmem:[%s587 + $0x130] sm:$0x3]
  %v628 = vsel %vm93, %v590, 0
  %v631 = vsel %vm93, %v593, 0
  %v634 = vsel %vm93, %v596, 0
  %v637 = vsel %vm93, %v599, 0
  %v640 = vsel %vm93, %v602, 0
  %v643 = vsel %vm93, %v605, 0
  %v646 = vsel %vm93, %v608, 0
  %v649 = vsel %vm93, %v611, 0
  %v652 = vsel %vm93, %v614, 0
  %v655 = vsel %vm93, %v617, 0
  %v658 = vsel %vm93, %v620, 0
  %v661 = vsel %vm93, %v623, 0
  %v664 = vsel %vm93, %v626, 0
  %666 = vmatpush.msra.mxu0 %v29
  %667 = vmatpush.msra.mxu0 %v28
  %668 = vmatpush.msra.mxu0 %v27
  %669 = vmatpush.msra.mxu0 %v26
  %670 = vmatpush.msra.mxu0 %v25
  %671 = vmatpush.msra.mxu0 %v24
  %672 = vmatpush.msra.mxu0 %v23
  %673 = vmatpush.msra.mxu0 %v22
  %674 = vmatpush.msra.mxu0 %v21
  %675 = vmatpush.msra.mxu0 %v20
  %676 = vmatpush.msra.mxu0 %v19
  %677 = vmatpush.msra.mxu0 %v18
  %678 = vmatpush.msra.mxu0 %v17
  %679 = vmatpush.msra.mxu0 %v16
  %680 = vmatpush.msra.mxu0 %v15
  %681 = vmatpush.msra.mxu0 %v14
  %682 = vmatmul.f32.gmra.mxu0 %v588
  %v683 = vpop.f32.mrf.mxu0
  %v684 = vadd.f32 %v91, %v683
  %685 = vmatmul.f32.gmra.mxu0 %v591
  %v686 = vpop.f32.mrf.mxu0
  %v687 = vadd.f32 %v91, %v686
  %688 = vmatmul.f32.gmra.mxu0 %v594
  %v689 = vpop.f32.mrf.mxu0
  %v690 = vadd.f32 %v91, %v689
  %691 = vmatmul.f32.gmra.mxu0 %v597
  %v692 = vpop.f32.mrf.mxu0
  %v693 = vadd.f32 %v91, %v692
  %694 = vmatmul.f32.gmra.mxu0 %v600
  %v695 = vpop.f32.mrf.mxu0
  %v696 = vadd.f32 %v91, %v695
  %697 = vmatmul.f32.gmra.mxu0 %v603
  %v698 = vpop.f32.mrf.mxu0
  %v699 = vadd.f32 %v91, %v698
  %700 = vmatmul.f32.gmra.mxu0 %v606
  %v701 = vpop.f32.mrf.mxu0
  %v702 = vadd.f32 %v91, %v701
  %703 = vmatmul.f32.gmra.mxu0 %v609
  %v704 = vpop.f32.mrf.mxu0
  %v705 = vadd.f32 %v91, %v704
  %706 = vmatmul.f32.gmra.mxu0 %v612
  %v707 = vpop.f32.mrf.mxu0
  %v708 = vadd.f32 %v91, %v707
  %709 = vmatmul.f32.gmra.mxu0 %v615
  %v710 = vpop.f32.mrf.mxu0
  %v711 = vadd.f32 %v91, %v710
  %712 = vmatmul.f32.gmra.mxu0 %v618
  %v713 = vpop.f32.mrf.mxu0
  %v714 = vadd.f32 %v91, %v713
  %715 = vmatmul.f32.gmra.mxu0 %v621
  %v716 = vpop.f32.mrf.mxu0
  %v717 = vadd.f32 %v91, %v716
  %718 = vmatmul.f32.gmra.mxu0 %v624
  %v719 = vpop.f32.mrf.mxu0
  %v720 = vadd.f32 %v91, %v719
  %721 = vdwg.mxu0
  %722 = vmatpush.msra.mxu0 %v45
  %723 = vmatpush.msra.mxu0 %v44
  %724 = vmatpush.msra.mxu0 %v43
  %725 = vmatpush.msra.mxu0 %v42
  %726 = vmatpush.msra.mxu0 %v41
  %727 = vmatpush.msra.mxu0 %v40
  %728 = vmatpush.msra.mxu0 %v39
  %729 = vmatpush.msra.mxu0 %v38
  %730 = vmatpush.msra.mxu0 %v37
  %731 = vmatpush.msra.mxu0 %v36
  %732 = vmatpush.msra.mxu0 %v35
  %733 = vmatpush.msra.mxu0 %v34
  %734 = vmatpush.msra.mxu0 %v33
  %735 = vmatpush.msra.mxu0 %v32
  %736 = vmatpush.msra.mxu0 %v31
  %737 = vmatpush.msra.mxu0 %v30
  %738 = vmatmul.f32.gmra.mxu0 %v589
  %v739 = vpop.f32.mrf.mxu0
  %v740 = vadd.f32 %v684, %v739
  %741 = vmatmul.f32.gmra.mxu0 %v592
  %v742 = vpop.f32.mrf.mxu0
  %v743 = vadd.f32 %v687, %v742
  %744 = vmatmul.f32.gmra.mxu0 %v595
  %v745 = vpop.f32.mrf.mxu0
  %v746 = vadd.f32 %v690, %v745
  %747 = vmatmul.f32.gmra.mxu0 %v598
  %v748 = vpop.f32.mrf.mxu0
  %v749 = vadd.f32 %v693, %v748
  %750 = vmatmul.f32.gmra.mxu0 %v601
  %v751 = vpop.f32.mrf.mxu0
  %v752 = vadd.f32 %v696, %v751
  %753 = vmatmul.f32.gmra.mxu0 %v604
  %v754 = vpop.f32.mrf.mxu0
  %v755 = vadd.f32 %v699, %v754
  %756 = vmatmul.f32.gmra.mxu0 %v607
  %v757 = vpop.f32.mrf.mxu0
  %v758 = vadd.f32 %v702, %v757
  %759 = vmatmul.f32.gmra.mxu0 %v610
  %v760 = vpop.f32.mrf.mxu0
  %v761 = vadd.f32 %v705, %v760
  %762 = vmatmul.f32.gmra.mxu0 %v613
  %v763 = vpop.f32.mrf.mxu0
  %v764 = vadd.f32 %v708, %v763
  %765 = vmatmul.f32.gmra.mxu0 %v616
  %v766 = vpop.f32.mrf.mxu0
  %v767 = vadd.f32 %v711, %v766
  %768 = vmatmul.f32.gmra.mxu0 %v619
  %v769 = vpop.f32.mrf.mxu0
  %v770 = vadd.f32 %v714, %v769
  %771 = vmatmul.f32.gmra.mxu0 %v622
  %v772 = vpop.f32.mrf.mxu0
  %v773 = vadd.f32 %v717, %v772
  %774 = vmatmul.f32.gmra.mxu0 %v625
  %v775 = vpop.f32.mrf.mxu0
  %v776 = vadd.f32 %v720, %v775
  %777 = vdwg.mxu0
  %778 = vmatpush.msra.mxu0 0.0
  %779 = vmatpush.msra.mxu0 0.0
  %780 = vmatpush.msra.mxu0 0.0
  %781 = vmatpush.msra.mxu0 0.0
  %782 = vmatpush.msra.mxu0 0.0
  %783 = vmatpush.msra.mxu0 0.0
  %784 = vmatpush.msra.mxu0 0.0
  %785 = vmatpush.msra.mxu0 0.0
  %786 = vmatpush.msra.mxu0 0.0
  %787 = vmatpush.msra.mxu0 0.0
  %788 = vmatpush.msra.mxu0 0.0
  %789 = vmatpush.msra.mxu0 0.0
  %790 = vmatpush.msra.mxu0 %v49
  %791 = vmatpush.msra.mxu0 %v48
  %792 = vmatpush.msra.mxu0 %v47
  %793 = vmatpush.msra.mxu0 %v46
  %794 = vmatmul.f32.gmra.mxu0 %v628
  %v795 = vpop.f32.mrf.mxu0
  %v796 = vadd.f32 %v740, %v795
  %797 = vmatmul.f32.gmra.mxu0 %v631
  %v798 = vpop.f32.mrf.mxu0
  %v799 = vadd.f32 %v743, %v798
  %800 = vmatmul.f32.gmra.mxu0 %v634
  %v801 = vpop.f32.mrf.mxu0
  %v802 = vadd.f32 %v746, %v801
  %803 = vmatmul.f32.gmra.mxu0 %v637
  %v804 = vpop.f32.mrf.mxu0
  %v805 = vadd.f32 %v749, %v804
  %806 = vmatmul.f32.gmra.mxu0 %v640
  %v807 = vpop.f32.mrf.mxu0
  %v808 = vadd.f32 %v752, %v807
  %809 = vmatmul.f32.gmra.mxu0 %v643
  %v810 = vpop.f32.mrf.mxu0
  %v811 = vadd.f32 %v755, %v810
  %812 = vmatmul.f32.gmra.mxu0 %v646
  %v813 = vpop.f32.mrf.mxu0
  %v814 = vadd.f32 %v758, %v813
  %815 = vmatmul.f32.gmra.mxu0 %v649
  %v816 = vpop.f32.mrf.mxu0
  %v817 = vadd.f32 %v761, %v816
  %818 = vmatmul.f32.gmra.mxu0 %v652
  %v819 = vpop.f32.mrf.mxu0
  %v820 = vadd.f32 %v764, %v819
  %821 = vmatmul.f32.gmra.mxu0 %v655
  %v822 = vpop.f32.mrf.mxu0
  %v823 = vadd.f32 %v767, %v822
  %824 = vmatmul.f32.gmra.mxu0 %v658
  %v825 = vpop.f32.mrf.mxu0
  %v826 = vadd.f32 %v770, %v825
  %827 = vmatmul.f32.gmra.mxu0 %v661
  %v828 = vpop.f32.mrf.mxu0
  %v829 = vadd.f32 %v773, %v828
  %830 = vmatmul.f32.gmra.mxu0 %v664
  %v831 = vpop.f32.mrf.mxu0
  %v832 = vadd.f32 %v776, %v831
  %833 = vdwg.mxu0
  %v834 = vmax.f32 %v796, 0.0
  %v835 = vmax.f32 %v799, 0.0
  %v836 = vmax.f32 %v802, 0.0
  %v837 = vmax.f32 %v805, 0.0
  %v838 = vmax.f32 %v808, 0.0
  %v839 = vmax.f32 %v811, 0.0
  %v840 = vmax.f32 %v814, 0.0
  %v841 = vmax.f32 %v817, 0.0
  %v842 = vmax.f32 %v820, 0.0
  %v843 = vmax.f32 %v823, 0.0
  %v844 = vmax.f32 %v826, 0.0
  %v845 = vmax.f32 %v829, 0.0
  %v846 = vmax.f32 %v832, 0.0
  %v847 = vmax.f32 %v574, %v834
  %v848 = vmax.f32 %v575, %v835
  %v849 = vmax.f32 %v576, %v836
  %v850 = vmax.f32 %v577, %v837
  %v851 = vmax.f32 %v578, %v838
  %v852 = vmax.f32 %v579, %v839
  %v853 = vmax.f32 %v580, %v840
  %v854 = vmax.f32 %v581, %v841
  %v855 = vmax.f32 %v582, %v842
  %v856 = vmax.f32 %v583, %v843
  %v857 = vmax.f32 %v584, %v844
  %v858 = vmax.f32 %v585, %v845
  %v859 = vmax.f32 %v586, %v846
  %s860 = scalar_lea.vmem %s0, 936
  %v861 = vld [vmem:[%s860] sm:$0xff]
  %v862 = vld [vmem:[%s860 + $0x8] sm:$0xff]
  %v863 = vld [vmem:[%s860 + $0x10] sm:$0xff]
  %v864 = vld [vmem:[%s860 + $0x18] sm:$0xff]
  %v865 = vld [vmem:[%s860 + $0x20] sm:$0xff]
  %v866 = vld [vmem:[%s860 + $0x28] sm:$0xff]
  %v867 = vld [vmem:[%s860 + $0x30] sm:$0xff]
  %v868 = vld [vmem:[%s860 + $0x38] sm:$0xff]
  %v869 = vld [vmem:[%s860 + $0x40] sm:$0xff]
  %v870 = vld [vmem:[%s860 + $0x48] sm:$0xff]
  %v871 = vld [vmem:[%s860 + $0x50] sm:$0xff]
  %v872 = vld [vmem:[%s860 + $0x58] sm:$0xff]
  %v873 = vld [vmem:[%s860 + $0x60] sm:$0xff]
  %v874 = vld [vmem:[%s860 + $0x68] sm:$0xff]
  %v875 = vld [vmem:[%s860 + $0x70] sm:$0xff]
  %v876 = vld [vmem:[%s860 + $0x78] sm:$0xff]
  %v877 = vld [vmem:[%s860 + $0x80] sm:$0xff]
  %v878 = vld [vmem:[%s860 + $0x88] sm:$0xff]
  %v879 = vld [vmem:[%s860 + $0x90] sm:$0xff]
  %v880 = vld [vmem:[%s860 + $0x98] sm:$0xff]
  %v881 = vld [vmem:[%s860 + $0xa0] sm:$0xff]
  %v882 = vld [vmem:[%s860 + $0xa8] sm:$0xff]
  %v883 = vld [vmem:[%s860 + $0xb0] sm:$0xff]
  %v884 = vld [vmem:[%s860 + $0xb8] sm:$0xff]
  %v885 = vld [vmem:[%s860 + $0xc0] sm:$0xff]
  %v886 = vld [vmem:[%s860 + $0xc8] sm:$0xff]
  %v887 = vld [vmem:[%s860 + $0xd0] sm:$0xff]
  %v888 = vld [vmem:[%s860 + $0xd8] sm:$0xff]
  %v889 = vld [vmem:[%s860 + $0xe0] sm:$0xff]
  %v890 = vld [vmem:[%s860 + $0xe8] sm:$0xff]
  %v891 = vld [vmem:[%s860 + $0xf0] sm:$0xff]
  %v892 = vld [vmem:[%s860 + $0xf8] sm:$0xff]
  %v893 = vld [vmem:[%s860 + $0x100] sm:$0xff]
  %v894 = vld [vmem:[%s860 + $0x108] sm:$0xff]
  %v895 = vld [vmem:[%s860 + $0x110] sm:$0xff]
  %v896 = vld [vmem:[%s860 + $0x118] sm:$0xff]
  %v897 = vld [vmem:[%s860 + $0x120] sm:$0x3]
  %v898 = vld [vmem:[%s860 + $0x128] sm:$0x3]
  %v899 = vld [vmem:[%s860 + $0x130] sm:$0x3]
  %v901 = vsel %vm93, %v863, 0
  %v904 = vsel %vm93, %v866, 0
  %v907 = vsel %vm93, %v869, 0
  %v910 = vsel %vm93, %v872, 0
  %v913 = vsel %vm93, %v875, 0
  %v916 = vsel %vm93, %v878, 0
  %v919 = vsel %vm93, %v881, 0
  %v922 = vsel %vm93, %v884, 0
  %v925 = vsel %vm93, %v887, 0
  %v928 = vsel %vm93, %v890, 0
  %v931 = vsel %vm93, %v893, 0
  %v934 = vsel %vm93, %v896, 0
  %v937 = vsel %vm93, %v899, 0
  %939 = vmatpush.msra.mxu0 %v29
  %940 = vmatpush.msra.mxu0 %v28
  %941 = vmatpush.msra.mxu0 %v27
  %942 = vmatpush.msra.mxu0 %v26
  %943 = vmatpush.msra.mxu0 %v25
  %944 = vmatpush.msra.mxu0 %v24
  %945 = vmatpush.msra.mxu0 %v23
  %946 = vmatpush.msra.mxu0 %v22
  %947 = vmatpush.msra.mxu0 %v21
  %948 = vmatpush.msra.mxu0 %v20
  %949 = vmatpush.msra.mxu0 %v19
  %950 = vmatpush.msra.mxu0 %v18
  %951 = vmatpush.msra.mxu0 %v17
  %952 = vmatpush.msra.mxu0 %v16
  %953 = vmatpush.msra.mxu0 %v15
  %954 = vmatpush.msra.mxu0 %v14
  %955 = vmatmul.f32.gmra.mxu0 %v861
  %v956 = vpop.f32.mrf.mxu0
  %v957 = vadd.f32 %v91, %v956
  %958 = vmatmul.f32.gmra.mxu0 %v864
  %v959 = vpop.f32.mrf.mxu0
  %v960 = vadd.f32 %v91, %v959
  %961 = vmatmul.f32.gmra.mxu0 %v867
  %v962 = vpop.f32.mrf.mxu0
  %v963 = vadd.f32 %v91, %v962
  %964 = vmatmul.f32.gmra.mxu0 %v870
  %v965 = vpop.f32.mrf.mxu0
  %v966 = vadd.f32 %v91, %v965
  %967 = vmatmul.f32.gmra.mxu0 %v873
  %v968 = vpop.f32.mrf.mxu0
  %v969 = vadd.f32 %v91, %v968
  %970 = vmatmul.f32.gmra.mxu0 %v876
  %v971 = vpop.f32.mrf.mxu0
  %v972 = vadd.f32 %v91, %v971
  %973 = vmatmul.f32.gmra.mxu0 %v879
  %v974 = vpop.f32.mrf.mxu0
  %v975 = vadd.f32 %v91, %v974
  %976 = vmatmul.f32.gmra.mxu0 %v882
  %v977 = vpop.f32.mrf.mxu0
  %v978 = vadd.f32 %v91, %v977
  %979 = vmatmul.f32.gmra.mxu0 %v885
  %v980 = vpop.f32.mrf.mxu0
  %v981 = vadd.f32 %v91, %v980
  %982 = vmatmul.f32.gmra.mxu0 %v888
  %v983 = vpop.f32.mrf.mxu0
  %v984 = vadd.f32 %v91, %v983
  %985 = vmatmul.f32.gmra.mxu0 %v891
  %v986 = vpop.f32.mrf.mxu0
  %v987 = vadd.f32 %v91, %v986
  %988 = vmatmul.f32.gmra.mxu0 %v894
  %v989 = vpop.f32.mrf.mxu0
  %v990 = vadd.f32 %v91, %v989
  %991 = vmatmul.f32.gmra.mxu0 %v897
  %v992 = vpop.f32.mrf.mxu0
  %v993 = vadd.f32 %v91, %v992
  %994 = vdwg.mxu0
  %995 = vmatpush.msra.mxu0 %v45
  %996 = vmatpush.msra.mxu0 %v44
  %997 = vmatpush.msra.mxu0 %v43
  %998 = vmatpush.msra.mxu0 %v42
  %999 = vmatpush.msra.mxu0 %v41
  %1000 = vmatpush.msra.mxu0 %v40
  %1001 = vmatpush.msra.mxu0 %v39
  %1002 = vmatpush.msra.mxu0 %v38
  %1003 = vmatpush.msra.mxu0 %v37
  %1004 = vmatpush.msra.mxu0 %v36
  %1005 = vmatpush.msra.mxu0 %v35
  %1006 = vmatpush.msra.mxu0 %v34
  %1007 = vmatpush.msra.mxu0 %v33
  %1008 = vmatpush.msra.mxu0 %v32
  %1009 = vmatpush.msra.mxu0 %v31
  %1010 = vmatpush.msra.mxu0 %v30
  %1011 = vmatmul.f32.gmra.mxu0 %v862
  %v1012 = vpop.f32.mrf.mxu0
  %v1013 = vadd.f32 %v957, %v1012
  %1014 = vmatmul.f32.gmra.mxu0 %v865
  %v1015 = vpop.f32.mrf.mxu0
  %v1016 = vadd.f32 %v960, %v1015
  %1017 = vmatmul.f32.gmra.mxu0 %v868
  %v1018 = vpop.f32.mrf.mxu0
  %v1019 = vadd.f32 %v963, %v1018
  %1020 = vmatmul.f32.gmra.mxu0 %v871
  %v1021 = vpop.f32.mrf.mxu0
  %v1022 = vadd.f32 %v966, %v1021
  %1023 = vmatmul.f32.gmra.mxu0 %v874
  %v1024 = vpop.f32.mrf.mxu0
  %v1025 = vadd.f32 %v969, %v1024
  %1026 = vmatmul.f32.gmra.mxu0 %v877
  %v1027 = vpop.f32.mrf.mxu0
  %v1028 = vadd.f32 %v972, %v1027
  %1029 = vmatmul.f32.gmra.mxu0 %v880
  %v1030 = vpop.f32.mrf.mxu0
  %v1031 = vadd.f32 %v975, %v1030
  %1032 = vmatmul.f32.gmra.mxu0 %v883
  %v1033 = vpop.f32.mrf.mxu0
  %v1034 = vadd.f32 %v978, %v1033
  %1035 = vmatmul.f32.gmra.mxu0 %v886
  %v1036 = vpop.f32.mrf.mxu0
  %v1037 = vadd.f32 %v981, %v1036
  %1038 = vmatmul.f32.gmra.mxu0 %v889
  %v1039 = vpop.f32.mrf.mxu0
  %v1040 = vadd.f32 %v984, %v1039
  %1041 = vmatmul.f32.gmra.mxu0 %v892
  %v1042 = vpop.f32.mrf.mxu0
  %v1043 = vadd.f32 %v987, %v1042
  %1044 = vmatmul.f32.gmra.mxu0 %v895
  %v1045 = vpop.f32.mrf.mxu0
  %v1046 = vadd.f32 %v990, %v1045
  %1047 = vmatmul.f32.gmra.mxu0 %v898
  %v1048 = vpop.f32.mrf.mxu0
  %v1049 = vadd.f32 %v993, %v1048
  %1050 = vdwg.mxu0
  %1051 = vmatpush.msra.mxu0 0.0
  %1052 = vmatpush.msra.mxu0 0.0
  %1053 = vmatpush.msra.mxu0 0.0
  %1054 = vmatpush.msra.mxu0 0.0
  %1055 = vmatpush.msra.mxu0 0.0
  %1056 = vmatpush.msra.mxu0 0.0
  %1057 = vmatpush.msra.mxu0 0.0
  %1058 = vmatpush.msra.mxu0 0.0
  %1059 = vmatpush.msra.mxu0 0.0
  %1060 = vmatpush.msra.mxu0 0.0
  %1061 = vmatpush.msra.mxu0 0.0
  %1062 = vmatpush.msra.mxu0 0.0
  %1063 = vmatpush.msra.mxu0 %v49
  %1064 = vmatpush.msra.mxu0 %v48
  %1065 = vmatpush.msra.mxu0 %v47
  %1066 = vmatpush.msra.mxu0 %v46
  %1067 = vmatmul.f32.gmra.mxu0 %v901
  %v1068 = vpop.f32.mrf.mxu0
  %v1069 = vadd.f32 %v1013, %v1068
  %1070 = vmatmul.f32.gmra.mxu0 %v904
  %v1071 = vpop.f32.mrf.mxu0
  %v1072 = vadd.f32 %v1016, %v1071
  %1073 = vmatmul.f32.gmra.mxu0 %v907
  %v1074 = vpop.f32.mrf.mxu0
  %v1075 = vadd.f32 %v1019, %v1074
  %1076 = vmatmul.f32.gmra.mxu0 %v910
  %v1077 = vpop.f32.mrf.mxu0
  %v1078 = vadd.f32 %v1022, %v1077
  %1079 = vmatmul.f32.gmra.mxu0 %v913
  %v1080 = vpop.f32.mrf.mxu0
  %v1081 = vadd.f32 %v1025, %v1080
  %1082 = vmatmul.f32.gmra.mxu0 %v916
  %v1083 = vpop.f32.mrf.mxu0
  %v1084 = vadd.f32 %v1028, %v1083
  %1085 = vmatmul.f32.gmra.mxu0 %v919
  %v1086 = vpop.f32.mrf.mxu0
  %v1087 = vadd.f32 %v1031, %v1086
  %1088 = vmatmul.f32.gmra.mxu0 %v922
  %v1089 = vpop.f32.mrf.mxu0
  %v1090 = vadd.f32 %v1034, %v1089
  %1091 = vmatmul.f32.gmra.mxu0 %v925
  %v1092 = vpop.f32.mrf.mxu0
  %v1093 = vadd.f32 %v1037, %v1092
  %1094 = vmatmul.f32.gmra.mxu0 %v928
  %v1095 = vpop.f32.mrf.mxu0
  %v1096 = vadd.f32 %v1040, %v1095
  %1097 = vmatmul.f32.gmra.mxu0 %v931
  %v1098 = vpop.f32.mrf.mxu0
  %v1099 = vadd.f32 %v1043, %v1098
  %1100 = vmatmul.f32.gmra.mxu0 %v934
  %v1101 = vpop.f32.mrf.mxu0
  %v1102 = vadd.f32 %v1046, %v1101
  %1103 = vmatmul.f32.gmra.mxu0 %v937
  %v1104 = vpop.f32.mrf.mxu0
  %v1105 = vadd.f32 %v1049, %v1104
  %1106 = vdwg.mxu0
  %v1107 = vmax.f32 %v1069, 0.0
  %v1108 = vmax.f32 %v1072, 0.0
  %v1109 = vmax.f32 %v1075, 0.0
  %v1110 = vmax.f32 %v1078, 0.0
  %v1111 = vmax.f32 %v1081, 0.0
  %v1112 = vmax.f32 %v1084, 0.0
  %v1113 = vmax.f32 %v1087, 0.0
  %v1114 = vmax.f32 %v1090, 0.0
  %v1115 = vmax.f32 %v1093, 0.0
  %v1116 = vmax.f32 %v1096, 0.0
  %v1117 = vmax.f32 %v1099, 0.0
  %v1118 = vmax.f32 %v1102, 0.0
  %v1119 = vmax.f32 %v1105, 0.0
  %v1120 = vmax.f32 %v847, %v1107
  %v1121 = vmax.f32 %v848, %v1108
  %v1122 = vmax.f32 %v849, %v1109
  %v1123 = vmax.f32 %v850, %v1110
  %v1124 = vmax.f32 %v851, %v1111
  %v1125 = vmax.f32 %v852, %v1112
  %v1126 = vmax.f32 %v853, %v1113
  %v1127 = vmax.f32 %v854, %v1114
  %v1128 = vmax.f32 %v855, %v1115
  %v1129 = vmax.f32 %v856, %v1116
  %v1130 = vmax.f32 %v857, %v1117
  %v1131 = vmax.f32 %v858, %v1118
  %v1132 = vmax.f32 %v859, %v1119
  %vm1133 = vcmask 523264
  %1134 = vst.msk [vmem:[%s3] sm:$0xff] %vm1133, %v1120
  %1135 = vst.msk [vmem:[%s3 + $0x8] sm:$0xff] %vm1133, %v1121
  %1136 = vst.msk [vmem:[%s3 + $0x10] sm:$0xff] %vm1133, %v1122
  %1137 = vst.msk [vmem:[%s3 + $0x18] sm:$0xff] %vm1133, %v1123
  %1138 = vst.msk [vmem:[%s3 + $0x20] sm:$0xff] %vm1133, %v1124
  %1139 = vst.msk [vmem:[%s3 + $0x28] sm:$0xff] %vm1133, %v1125
  %1140 = vst.msk [vmem:[%s3 + $0x30] sm:$0xff] %vm1133, %v1126
  %1141 = vst.msk [vmem:[%s3 + $0x38] sm:$0xff] %vm1133, %v1127
  %1142 = vst.msk [vmem:[%s3 + $0x40] sm:$0xff] %vm1133, %v1128
  %1143 = vst.msk [vmem:[%s3 + $0x48] sm:$0xff] %vm1133, %v1129
  %1144 = vst.msk [vmem:[%s3 + $0x50] sm:$0xff] %vm1133, %v1130
  %1145 = vst.msk [vmem:[%s3 + $0x58] sm:$0xff] %vm1133, %v1131
  %vm1146 = vcmask 517120
  %1147 = vst.msk [vmem:[%s3 + $0x60] sm:$0x3] %vm1146, %v1132
  // Predicated region
  $region14: #{model_forward.4} parent=0 // pred_check
    _
  $region15: #{model_forward.4} parent=0 // pred_check_branch
    %1149 = sbr.rel (0) target = $region17
  $region16: #{model_forward.4} parent=0 // pred_region
    _
  $region17: #{model_forward.4} parent=0 // pred_fallthru
    _
  // Predicated region
  $region18: #{model_forward.4} parent=0 // pred_check
    _
  $region19: #{model_forward.4} parent=0 // pred_check_branch
    %1151 = sbr.rel (0) target = $region21
  $region20: #{model_forward.4} parent=0 // pred_region
    _
  $region21: #{model_forward.4} parent=0 // pred_fallthru
    _

// kernel: model_forward.5
$region0: #{model_forward.5}
  #allocation0 [shape = 'u32[]', space=smem, size = 0x4, offset = 0x4, fixed_abs, tag = 'smem constant byte address 0x4 - core index']
  #allocation1 [shape = 'u32[72,128]{1,0:T(1,128)}', space=vmem, size = 0x9000, scoped, tag = 'internal scratch']
  %s0 = inlined_call_operand.vmem [shape: f32[2,3136], index: 0, kind: input, shape index: {}]
  %s1 = inlined_call_operand.vmem [shape: f32[3136,128], index: 1, kind: input, shape index: {}]
  %s2 = inlined_call_operand.vmem [shape: f32[1,128], index: 2, kind: input, shape index: {}]
  %s3 = inlined_call_operand.vmem [shape: f32[128,10], index: 3, kind: input, shape index: {}]
  %s4 = inlined_call_operand.vmem [shape: f32[1,10], index: 4, kind: input, shape index: {}]
  %s5 = inlined_call_operand.hbm [shape: f32[2,10], index: 5, kind: output, shape index: {}]
  %s6 = sld [smem:[#allocation0]]
  $region30: #{model_forward.5} parent=0
    _
  %s8 = ssub.s32 1, %s6
  %s9 = scalar_select 0, %s8, %s6
  $region1: #{model_forward.5} parent=0
    #allocation2 [shape = 'u8[1024]{0}', space=vmem, size = 0x400, scoped, tag = 'output window, operand 0, single buffered']
    #allocation3 [shape = 's32[1]{0}', space=sflag, size = 0x4, scoped, tag = 'scoped memory for model_forward.5']
    %10 = vsyncpa [#allocation3], 0
    // Predicated region
    $region2: #{model_forward.5} parent=1 // pred_check
      _
    $region3: #{model_forward.5} parent=1 // pred_check_branch
      %12 = sbr.rel (0) target = $region5
    $region4: #{model_forward.5} parent=1 // pred_region
      _
    $region5: #{model_forward.5} parent=1 // pred_fallthru
      _
    // Predicated region
    $region6: #{model_forward.5} parent=1 // pred_check
      _
    $region7: #{model_forward.5} parent=1 // pred_check_branch
      %14 = sbr.rel (0) target = $region9
    $region8: #{model_forward.5} parent=1 // pred_region
      _
    $region9: #{model_forward.5} parent=1 // pred_fallthru
      _
    // Predicated region
    $region10: #{model_forward.5} parent=1 // pred_check
      _
    $region11: #{model_forward.5} parent=1 // pred_check_branch
      %16 = sbr.rel (0) target = $region13
    $region12: #{model_forward.5} parent=1 // pred_region
      _
    $region13: #{model_forward.5} parent=1 // pred_fallthru
      _
    // Predicated region
    $region14: #{model_forward.5} parent=1 // pred_check
      _
    $region15: #{model_forward.5} parent=1 // pred_check_branch
      %18 = sbr.rel (0) target = $region17
    $region16: #{model_forward.5} parent=1 // pred_region
      _
    $region17: #{model_forward.5} parent=1 // pred_fallthru
      _
    // Predicated region
    $region18: #{model_forward.5} parent=1 // pred_check
      _
    $region19: #{model_forward.5} parent=1 // pred_check_branch
      %20 = sbr.rel (0) target = $region21
    $region20: #{model_forward.5} parent=1 // pred_region
      _
    $region21: #{model_forward.5} parent=1 // pred_fallthru
      _
    %v21 = vld [vmem:[%s0] sm:$0xff]
    %v22 = vld [vmem:[%s0 + $0x8] sm:$0xff]
    %v23 = vld [vmem:[%s0 + $0x10] sm:$0xff]
    %v24 = vld [vmem:[%s0 + $0x18] sm:$0xff]
    %v25 = vld [vmem:[%s0 + $0x20] sm:$0xff]
    %v26 = vld [vmem:[%s0 + $0x28] sm:$0xff]
    %v27 = vld [vmem:[%s0 + $0x30] sm:$0x3]
    %v28 = vld [vmem:[%s1] sm:$0xff]
    %v29 = vld [vmem:[%s1 + $0x8] sm:$0xff]
    %v30 = vld [vmem:[%s1 + $0x10] sm:$0xff]
    %v31 = vld [vmem:[%s1 + $0x18] sm:$0xff]
    %v32 = vld [vmem:[%s1 + $0x20] sm:$0xff]
    %v33 = vld [vmem:[%s1 + $0x28] sm:$0xff]
    %v34 = vld [vmem:[%s1 + $0x30] sm:$0xff]
    %v35 = vld [vmem:[%s1 + $0x38] sm:$0xff]
    %v36 = vld [vmem:[%s1 + $0x40] sm:$0xff]
    %v37 = vld [vmem:[%s1 + $0x48] sm:$0xff]
    %v38 = vld [vmem:[%s1 + $0x50] sm:$0xff]
    %v39 = vld [vmem:[%s1 + $0x58] sm:$0xff]
    %v40 = vld [vmem:[%s1 + $0x60] sm:$0xff]
    %v41 = vld [vmem:[%s1 + $0x68] sm:$0xff]
    %v42 = vld [vmem:[%s1 + $0x70] sm:$0xff]
    %v43 = vld [vmem:[%s1 + $0x78] sm:$0xff]
    %v44 = vld [vmem:[%s1 + $0x80] sm:$0xff]
    %v45 = vld [vmem:[%s1 + $0x88] sm:$0xff]
    %v46 = vld [vmem:[%s1 + $0x90] sm:$0xff]
    %v47 = vld [vmem:[%s1 + $0x98] sm:$0xff]
    %v48 = vld [vmem:[%s1 + $0xa0] sm:$0xff]
    %v49 = vld [vmem:[%s1 + $0xa8] sm:$0xff]
    %v50 = vld [vmem:[%s1 + $0xb0] sm:$0xff]
    %v51 = vld [vmem:[%s1 + $0xb8] sm:$0xff]
    %v52 = vld [vmem:[%s1 + $0xc0] sm:$0xff]
    %v53 = vld [vmem:[%s1 + $0xc8] sm:$0xff]
    %v54 = vld [vmem:[%s1 + $0xd0] sm:$0xff]
    %v55 = vld [vmem:[%s1 + $0xd8] sm:$0xff]
    %v56 = vld [vmem:[%s1 + $0xe0] sm:$0xff]
    %v57 = vld [vmem:[%s1 + $0xe8] sm:$0xff]
    %v58 = vld [vmem:[%s1 + $0xf0] sm:$0xff]
    %v59 = vld [vmem:[%s1 + $0xf8] sm:$0xff]
    %v60 = vld [vmem:[%s1 + $0x100] sm:$0xff]
    %v61 = vld [vmem:[%s1 + $0x108] sm:$0xff]
    %v62 = vld [vmem:[%s1 + $0x110] sm:$0xff]
    %v63 = vld [vmem:[%s1 + $0x118] sm:$0xff]
    %v64 = vld [vmem:[%s1 + $0x120] sm:$0xff]
    %v65 = vld [vmem:[%s1 + $0x128] sm:$0xff]
    %v66 = vld [vmem:[%s1 + $0x130] sm:$0xff]
    %v67 = vld [vmem:[%s1 + $0x138] sm:$0xff]
    %v68 = vld [vmem:[%s1 + $0x140] sm:$0xff]
    %v69 = vld [vmem:[%s1 + $0x148] sm:$0xff]
    %v70 = vld [vmem:[%s1 + $0x150] sm:$0xff]
    %v71 = vld [vmem:[%s1 + $0x158] sm:$0xff]
    %v72 = vld [vmem:[%s1 + $0x160] sm:$0xff]
    %v73 = vld [vmem:[%s1 + $0x168] sm:$0xff]
    %v74 = vld [vmem:[%s1 + $0x170] sm:$0xff]
    %v75 = vld [vmem:[%s1 + $0x178] sm:$0xff]
    %v76 = vld [vmem:[%s1 + $0x180] sm:$0xff]
    %v77 = vld [vmem:[%s1 + $0x188] sm:$0xff]
    %v78 = vld [vmem:[%s1 + $0x190] sm:$0xff]
    %v79 = vld [vmem:[%s1 + $0x198] sm:$0xff]
    %v80 = vld [vmem:[%s1 + $0x1a0] sm:$0xff]
    %v81 = vld [vmem:[%s1 + $0x1a8] sm:$0xff]
    %v82 = vld [vmem:[%s1 + $0x1b0] sm:$0xff]
    %v83 = vld [vmem:[%s1 + $0x1b8] sm:$0xff]
    %v84 = vld [vmem:[%s1 + $0x1c0] sm:$0xff]
    %v85 = vld [vmem:[%s1 + $0x1c8] sm:$0xff]
    %v86 = vld [vmem:[%s1 + $0x1d0] sm:$0xff]
    %v87 = vld [vmem:[%s1 + $0x1d8] sm:$0xff]
    %v88 = vld [vmem:[%s1 + $0x1e0] sm:$0xff]
    %v89 = vld [vmem:[%s1 + $0x1e8] sm:$0xff]
    %v90 = vld [vmem:[%s1 + $0x1f0] sm:$0xff]
    %v91 = vld [vmem:[%s1 + $0x1f8] sm:$0xff]
    %v92 = vld [vmem:[%s1 + $0x200] sm:$0xff]
    %v93 = vld [vmem:[%s1 + $0x208] sm:$0xff]
    %v94 = vld [vmem:[%s1 + $0x210] sm:$0xff]
    %v95 = vld [vmem:[%s1 + $0x218] sm:$0xff]
    %v96 = vld [vmem:[%s1 + $0x220] sm:$0xff]
    %v97 = vld [vmem:[%s1 + $0x228] sm:$0xff]
    %v98 = vld [vmem:[%s1 + $0x230] sm:$0xff]
    %v99 = vld [vmem:[%s1 + $0x238] sm:$0xff]
    %v100 = vld [vmem:[%s1 + $0x240] sm:$0xff]
    %v101 = vld [vmem:[%s1 + $0x248] sm:$0xff]
    %v102 = vld [vmem:[%s1 + $0x250] sm:$0xff]
    %v103 = vld [vmem:[%s1 + $0x258] sm:$0xff]
    %v104 = vld [vmem:[%s1 + $0x260] sm:$0xff]
    %v105 = vld [vmem:[%s1 + $0x268] sm:$0xff]
    %v106 = vld [vmem:[%s1 + $0x270] sm:$0xff]
    %v107 = vld [vmem:[%s1 + $0x278] sm:$0xff]
    %v108 = vld [vmem:[%s1 + $0x280] sm:$0xff]
    %v109 = vld [vmem:[%s1 + $0x288] sm:$0xff]
    %v110 = vld [vmem:[%s1 + $0x290] sm:$0xff]
    %v111 = vld [vmem:[%s1 + $0x298] sm:$0xff]
    %v112 = vld [vmem:[%s1 + $0x2a0] sm:$0xff]
    %v113 = vld [vmem:[%s1 + $0x2a8] sm:$0xff]
    %v114 = vld [vmem:[%s1 + $0x2b0] sm:$0xff]
    %v115 = vld [vmem:[%s1 + $0x2b8] sm:$0xff]
    %v116 = vld [vmem:[%s1 + $0x2c0] sm:$0xff]
    %v117 = vld [vmem:[%s1 + $0x2c8] sm:$0xff]
    %v118 = vld [vmem:[%s1 + $0x2d0] sm:$0xff]
    %v119 = vld [vmem:[%s1 + $0x2d8] sm:$0xff]
    %v120 = vld [vmem:[%s1 + $0x2e0] sm:$0xff]
    %v121 = vld [vmem:[%s1 + $0x2e8] sm:$0xff]
    %v122 = vld [vmem:[%s1 + $0x2f0] sm:$0xff]
    %v123 = vld [vmem:[%s1 + $0x2f8] sm:$0xff]
    %v124 = vld [vmem:[%s1 + $0x300] sm:$0xff]
    %v125 = vld [vmem:[%s1 + $0x308] sm:$0xff]
    %v126 = vld [vmem:[%s1 + $0x310] sm:$0xff]
    %v127 = vld [vmem:[%s1 + $0x318] sm:$0xff]
    %v128 = vld [vmem:[%s1 + $0x320] sm:$0xff]
    %v129 = vld [vmem:[%s1 + $0x328] sm:$0xff]
    %v130 = vld [vmem:[%s1 + $0x330] sm:$0xff]
    %v131 = vld [vmem:[%s1 + $0x338] sm:$0xff]
    %v132 = vld [vmem:[%s1 + $0x340] sm:$0xff]
    %v133 = vld [vmem:[%s1 + $0x348] sm:$0xff]
    %v134 = vld [vmem:[%s1 + $0x350] sm:$0xff]
    %v135 = vld [vmem:[%s1 + $0x358] sm:$0xff]
    %v136 = vld [vmem:[%s1 + $0x360] sm:$0xff]
    %v137 = vld [vmem:[%s1 + $0x368] sm:$0xff]
    %v138 = vld [vmem:[%s1 + $0x370] sm:$0xff]
    %v139 = vld [vmem:[%s1 + $0x378] sm:$0xff]
    %v140 = vld [vmem:[%s1 + $0x380] sm:$0xff]
    %v141 = vld [vmem:[%s1 + $0x388] sm:$0xff]
    %v142 = vld [vmem:[%s1 + $0x390] sm:$0xff]
    %v143 = vld [vmem:[%s1 + $0x398] sm:$0xff]
    %v144 = vld [vmem:[%s1 + $0x3a0] sm:$0xff]
    %v145 = vld [vmem:[%s1 + $0x3a8] sm:$0xff]
    %v146 = vld [vmem:[%s1 + $0x3b0] sm:$0xff]
    %v147 = vld [vmem:[%s1 + $0x3b8] sm:$0xff]
    %v148 = vld [vmem:[%s1 + $0x3c0] sm:$0xff]
    %v149 = vld [vmem:[%s1 + $0x3c8] sm:$0xff]
    %v150 = vld [vmem:[%s1 + $0x3d0] sm:$0xff]
    %v151 = vld [vmem:[%s1 + $0x3d8] sm:$0xff]
    %v152 = vld [vmem:[%s1 + $0x3e0] sm:$0xff]
    %v153 = vld [vmem:[%s1 + $0x3e8] sm:$0xff]
    %v154 = vld [vmem:[%s1 + $0x3f0] sm:$0xff]
    %v155 = vld [vmem:[%s1 + $0x3f8] sm:$0xff]
    %v156 = vld [vmem:[%s1 + $0x400] sm:$0xff]
    %v157 = vld [vmem:[%s1 + $0x408] sm:$0xff]
    %v158 = vld [vmem:[%s1 + $0x410] sm:$0xff]
    %v159 = vld [vmem:[%s1 + $0x418] sm:$0xff]
    %v160 = vld [vmem:[%s1 + $0x420] sm:$0xff]
    %v161 = vld [vmem:[%s1 + $0x428] sm:$0xff]
    %v162 = vld [vmem:[%s1 + $0x430] sm:$0xff]
    %v163 = vld [vmem:[%s1 + $0x438] sm:$0xff]
    %v164 = vld [vmem:[%s1 + $0x440] sm:$0xff]
    %v165 = vld [vmem:[%s1 + $0x448] sm:$0xff]
    %v166 = vld [vmem:[%s1 + $0x450] sm:$0xff]
    %v167 = vld [vmem:[%s1 + $0x458] sm:$0xff]
    %v168 = vld [vmem:[%s1 + $0x460] sm:$0xff]
    %v169 = vld [vmem:[%s1 + $0x468] sm:$0xff]
    %v170 = vld [vmem:[%s1 + $0x470] sm:$0xff]
    %v171 = vld [vmem:[%s1 + $0x478] sm:$0xff]
    %v172 = vld [vmem:[%s1 + $0x480] sm:$0xff]
    %v173 = vld [vmem:[%s1 + $0x488] sm:$0xff]
    %v174 = vld [vmem:[%s1 + $0x490] sm:$0xff]
    %v175 = vld [vmem:[%s1 + $0x498] sm:$0xff]
    %v176 = vld [vmem:[%s1 + $0x4a0] sm:$0xff]
    %v177 = vld [vmem:[%s1 + $0x4a8] sm:$0xff]
    %v178 = vld [vmem:[%s1 + $0x4b0] sm:$0xff]
    %v179 = vld [vmem:[%s1 + $0x4b8] sm:$0xff]
    %v180 = vld [vmem:[%s1 + $0x4c0] sm:$0xff]
    %v181 = vld [vmem:[%s1 + $0x4c8] sm:$0xff]
    %v182 = vld [vmem:[%s1 + $0x4d0] sm:$0xff]
    %v183 = vld [vmem:[%s1 + $0x4d8] sm:$0xff]
    %v184 = vld [vmem:[%s1 + $0x4e0] sm:$0xff]
    %v185 = vld [vmem:[%s1 + $0x4e8] sm:$0xff]
    %v186 = vld [vmem:[%s1 + $0x4f0] sm:$0xff]
    %v187 = vld [vmem:[%s1 + $0x4f8] sm:$0xff]
    %v188 = vld [vmem:[%s1 + $0x500] sm:$0xff]
    %v189 = vld [vmem:[%s1 + $0x508] sm:$0xff]
    %v190 = vld [vmem:[%s1 + $0x510] sm:$0xff]
    %v191 = vld [vmem:[%s1 + $0x518] sm:$0xff]
    %v192 = vld [vmem:[%s1 + $0x520] sm:$0xff]
    %v193 = vld [vmem:[%s1 + $0x528] sm:$0xff]
    %v194 = vld [vmem:[%s1 + $0x530] sm:$0xff]
    %v195 = vld [vmem:[%s1 + $0x538] sm:$0xff]
    %v196 = vld [vmem:[%s1 + $0x540] sm:$0xff]
    %v197 = vld [vmem:[%s1 + $0x548] sm:$0xff]
    %v198 = vld [vmem:[%s1 + $0x550] sm:$0xff]
    %v199 = vld [vmem:[%s1 + $0x558] sm:$0xff]
    %v200 = vld [vmem:[%s1 + $0x560] sm:$0xff]
    %v201 = vld [vmem:[%s1 + $0x568] sm:$0xff]
    %v202 = vld [vmem:[%s1 + $0x570] sm:$0xff]
    %v203 = vld [vmem:[%s1 + $0x578] sm:$0xff]
    %v204 = vld [vmem:[%s1 + $0x580] sm:$0xff]
    %v205 = vld [vmem:[%s1 + $0x588] sm:$0xff]
    %v206 = vld [vmem:[%s1 + $0x590] sm:$0xff]
    %v207 = vld [vmem:[%s1 + $0x598] sm:$0xff]
    %v208 = vld [vmem:[%s1 + $0x5a0] sm:$0xff]
    %v209 = vld [vmem:[%s1 + $0x5a8] sm:$0xff]
    %v210 = vld [vmem:[%s1 + $0x5b0] sm:$0xff]
    %v211 = vld [vmem:[%s1 + $0x5b8] sm:$0xff]
    %v212 = vld [vmem:[%s1 + $0x5c0] sm:$0xff]
    %v213 = vld [vmem:[%s1 + $0x5c8] sm:$0xff]
    %v214 = vld [vmem:[%s1 + $0x5d0] sm:$0xff]
    %v215 = vld [vmem:[%s1 + $0x5d8] sm:$0xff]
    %v216 = vld [vmem:[%s1 + $0x5e0] sm:$0xff]
    %v217 = vld [vmem:[%s1 + $0x5e8] sm:$0xff]
    %v218 = vld [vmem:[%s1 + $0x5f0] sm:$0xff]
    %v219 = vld [vmem:[%s1 + $0x5f8] sm:$0xff]
    %v220 = vld [vmem:[%s1 + $0x600] sm:$0xff]
    %v221 = vld [vmem:[%s1 + $0x608] sm:$0xff]
    %v222 = vld [vmem:[%s1 + $0x610] sm:$0xff]
    %v223 = vld [vmem:[%s1 + $0x618] sm:$0xff]
    %v224 = vld [vmem:[%s1 + $0x620] sm:$0xff]
    %v225 = vld [vmem:[%s1 + $0x628] sm:$0xff]
    %v226 = vld [vmem:[%s1 + $0x630] sm:$0xff]
    %v227 = vld [vmem:[%s1 + $0x638] sm:$0xff]
    %v228 = vld [vmem:[%s1 + $0x640] sm:$0xff]
    %v229 = vld [vmem:[%s1 + $0x648] sm:$0xff]
    %v230 = vld [vmem:[%s1 + $0x650] sm:$0xff]
    %v231 = vld [vmem:[%s1 + $0x658] sm:$0xff]
    %v232 = vld [vmem:[%s1 + $0x660] sm:$0xff]
    %v233 = vld [vmem:[%s1 + $0x668] sm:$0xff]
    %v234 = vld [vmem:[%s1 + $0x670] sm:$0xff]
    %v235 = vld [vmem:[%s1 + $0x678] sm:$0xff]
    %v236 = vld [vmem:[%s1 + $0x680] sm:$0xff]
    %v237 = vld [vmem:[%s1 + $0x688] sm:$0xff]
    %v238 = vld [vmem:[%s1 + $0x690] sm:$0xff]
    %v239 = vld [vmem:[%s1 + $0x698] sm:$0xff]
    %v240 = vld [vmem:[%s1 + $0x6a0] sm:$0xff]
    %v241 = vld [vmem:[%s1 + $0x6a8] sm:$0xff]
    %v242 = vld [vmem:[%s1 + $0x6b0] sm:$0xff]
    %v243 = vld [vmem:[%s1 + $0x6b8] sm:$0xff]
    %v244 = vld [vmem:[%s1 + $0x6c0] sm:$0xff]
    %v245 = vld [vmem:[%s1 + $0x6c8] sm:$0xff]
    %v246 = vld [vmem:[%s1 + $0x6d0] sm:$0xff]
    %v247 = vld [vmem:[%s1 + $0x6d8] sm:$0xff]
    %v248 = vld [vmem:[%s1 + $0x6e0] sm:$0xff]
    %v249 = vld [vmem:[%s1 + $0x6e8] sm:$0xff]
    %v250 = vld [vmem:[%s1 + $0x6f0] sm:$0xff]
    %v251 = vld [vmem:[%s1 + $0x6f8] sm:$0xff]
    %v252 = vld [vmem:[%s1 + $0x700] sm:$0xff]
    %v253 = vld [vmem:[%s1 + $0x708] sm:$0xff]
    %v254 = vld [vmem:[%s1 + $0x710] sm:$0xff]
    %v255 = vld [vmem:[%s1 + $0x718] sm:$0xff]
    %v256 = vld [vmem:[%s1 + $0x720] sm:$0xff]
    %v257 = vld [vmem:[%s1 + $0x728] sm:$0xff]
    %v258 = vld [vmem:[%s1 + $0x730] sm:$0xff]
    %v259 = vld [vmem:[%s1 + $0x738] sm:$0xff]
    %v260 = vld [vmem:[%s1 + $0x740] sm:$0xff]
    %v261 = vld [vmem:[%s1 + $0x748] sm:$0xff]
    %v262 = vld [vmem:[%s1 + $0x750] sm:$0xff]
    %v263 = vld [vmem:[%s1 + $0x758] sm:$0xff]
    %v264 = vld [vmem:[%s1 + $0x760] sm:$0xff]
    %v265 = vld [vmem:[%s1 + $0x768] sm:$0xff]
    %v266 = vld [vmem:[%s1 + $0x770] sm:$0xff]
    %v267 = vld [vmem:[%s1 + $0x778] sm:$0xff]
    %v268 = vld [vmem:[%s1 + $0x780] sm:$0xff]
    %v269 = vld [vmem:[%s1 + $0x788] sm:$0xff]
    %v270 = vld [vmem:[%s1 + $0x790] sm:$0xff]
    %v271 = vld [vmem:[%s1 + $0x798] sm:$0xff]
    %v272 = vld [vmem:[%s1 + $0x7a0] sm:$0xff]
    %v273 = vld [vmem:[%s1 + $0x7a8] sm:$0xff]
    %v274 = vld [vmem:[%s1 + $0x7b0] sm:$0xff]
    %v275 = vld [vmem:[%s1 + $0x7b8] sm:$0xff]
    %v276 = vld [vmem:[%s1 + $0x7c0] sm:$0xff]
    %v277 = vld [vmem:[%s1 + $0x7c8] sm:$0xff]
    %v278 = vld [vmem:[%s1 + $0x7d0] sm:$0xff]
    %v279 = vld [vmem:[%s1 + $0x7d8] sm:$0xff]
    %v280 = vld [vmem:[%s1 + $0x7e0] sm:$0xff]
    %v281 = vld [vmem:[%s1 + $0x7e8] sm:$0xff]
    %v282 = vld [vmem:[%s1 + $0x7f0] sm:$0xff]
    %v283 = vld [vmem:[%s1 + $0x7f8] sm:$0xff]
    %v284 = vld [vmem:[%s1 + $0x800] sm:$0xff]
    %v285 = vld [vmem:[%s1 + $0x808] sm:$0xff]
    %v286 = vld [vmem:[%s1 + $0x810] sm:$0xff]
    %v287 = vld [vmem:[%s1 + $0x818] sm:$0xff]
    %v288 = vld [vmem:[%s1 + $0x820] sm:$0xff]
    %v289 = vld [vmem:[%s1 + $0x828] sm:$0xff]
    %v290 = vld [vmem:[%s1 + $0x830] sm:$0xff]
    %v291 = vld [vmem:[%s1 + $0x838] sm:$0xff]
    %v292 = vld [vmem:[%s1 + $0x840] sm:$0xff]
    %v293 = vld [vmem:[%s1 + $0x848] sm:$0xff]
    %v294 = vld [vmem:[%s1 + $0x850] sm:$0xff]
    %v295 = vld [vmem:[%s1 + $0x858] sm:$0xff]
    %v296 = vld [vmem:[%s1 + $0x860] sm:$0xff]
    %v297 = vld [vmem:[%s1 + $0x868] sm:$0xff]
    %v298 = vld [vmem:[%s1 + $0x870] sm:$0xff]
    %v299 = vld [vmem:[%s1 + $0x878] sm:$0xff]
    %v300 = vld [vmem:[%s1 + $0x880] sm:$0xff]
    %v301 = vld [vmem:[%s1 + $0x888] sm:$0xff]
    %v302 = vld [vmem:[%s1 + $0x890] sm:$0xff]
    %v303 = vld [vmem:[%s1 + $0x898] sm:$0xff]
    %v304 = vld [vmem:[%s1 + $0x8a0] sm:$0xff]
    %v305 = vld [vmem:[%s1 + $0x8a8] sm:$0xff]
    %v306 = vld [vmem:[%s1 + $0x8b0] sm:$0xff]
    %v307 = vld [vmem:[%s1 + $0x8b8] sm:$0xff]
    %v308 = vld [vmem:[%s1 + $0x8c0] sm:$0xff]
    %v309 = vld [vmem:[%s1 + $0x8c8] sm:$0xff]
    %v310 = vld [vmem:[%s1 + $0x8d0] sm:$0xff]
    %v311 = vld [vmem:[%s1 + $0x8d8] sm:$0xff]
    %v312 = vld [vmem:[%s1 + $0x8e0] sm:$0xff]
    %v313 = vld [vmem:[%s1 + $0x8e8] sm:$0xff]
    %v314 = vld [vmem:[%s1 + $0x8f0] sm:$0xff]
    %v315 = vld [vmem:[%s1 + $0x8f8] sm:$0xff]
    %v316 = vld [vmem:[%s1 + $0x900] sm:$0xff]
    %v317 = vld [vmem:[%s1 + $0x908] sm:$0xff]
    %v318 = vld [vmem:[%s1 + $0x910] sm:$0xff]
    %v319 = vld [vmem:[%s1 + $0x918] sm:$0xff]
    %v320 = vld [vmem:[%s1 + $0x920] sm:$0xff]
    %v321 = vld [vmem:[%s1 + $0x928] sm:$0xff]
    %v322 = vld [vmem:[%s1 + $0x930] sm:$0xff]
    %v323 = vld [vmem:[%s1 + $0x938] sm:$0xff]
    %v324 = vld [vmem:[%s1 + $0x940] sm:$0xff]
    %v325 = vld [vmem:[%s1 + $0x948] sm:$0xff]
    %v326 = vld [vmem:[%s1 + $0x950] sm:$0xff]
    %v327 = vld [vmem:[%s1 + $0x958] sm:$0xff]
    %v328 = vld [vmem:[%s1 + $0x960] sm:$0xff]
    %v329 = vld [vmem:[%s1 + $0x968] sm:$0xff]
    %v330 = vld [vmem:[%s1 + $0x970] sm:$0xff]
    %v331 = vld [vmem:[%s1 + $0x978] sm:$0xff]
    %v332 = vld [vmem:[%s1 + $0x980] sm:$0xff]
    %v333 = vld [vmem:[%s1 + $0x988] sm:$0xff]
    %v334 = vld [vmem:[%s1 + $0x990] sm:$0xff]
    %v335 = vld [vmem:[%s1 + $0x998] sm:$0xff]
    %v336 = vld [vmem:[%s1 + $0x9a0] sm:$0xff]
    %v337 = vld [vmem:[%s1 + $0x9a8] sm:$0xff]
    %v338 = vld [vmem:[%s1 + $0x9b0] sm:$0xff]
    %v339 = vld [vmem:[%s1 + $0x9b8] sm:$0xff]
    %v340 = vld [vmem:[%s1 + $0x9c0] sm:$0xff]
    %v341 = vld [vmem:[%s1 + $0x9c8] sm:$0xff]
    %v342 = vld [vmem:[%s1 + $0x9d0] sm:$0xff]
    %v343 = vld [vmem:[%s1 + $0x9d8] sm:$0xff]
    %v344 = vld [vmem:[%s1 + $0x9e0] sm:$0xff]
    %v345 = vld [vmem:[%s1 + $0x9e8] sm:$0xff]
    %v346 = vld [vmem:[%s1 + $0x9f0] sm:$0xff]
    %v347 = vld [vmem:[%s1 + $0x9f8] sm:$0xff]
    %v348 = vld [vmem:[%s1 + $0xa00] sm:$0xff]
    %v349 = vld [vmem:[%s1 + $0xa08] sm:$0xff]
    %v350 = vld [vmem:[%s1 + $0xa10] sm:$0xff]
    %v351 = vld [vmem:[%s1 + $0xa18] sm:$0xff]
    %v352 = vld [vmem:[%s1 + $0xa20] sm:$0xff]
    %v353 = vld [vmem:[%s1 + $0xa28] sm:$0xff]
    %v354 = vld [vmem:[%s1 + $0xa30] sm:$0xff]
    %v355 = vld [vmem:[%s1 + $0xa38] sm:$0xff]
    %v356 = vld [vmem:[%s1 + $0xa40] sm:$0xff]
    %v357 = vld [vmem:[%s1 + $0xa48] sm:$0xff]
    %v358 = vld [vmem:[%s1 + $0xa50] sm:$0xff]
    %v359 = vld [vmem:[%s1 + $0xa58] sm:$0xff]
    %v360 = vld [vmem:[%s1 + $0xa60] sm:$0xff]
    %v361 = vld [vmem:[%s1 + $0xa68] sm:$0xff]
    %v362 = vld [vmem:[%s1 + $0xa70] sm:$0xff]
    %v363 = vld [vmem:[%s1 + $0xa78] sm:$0xff]
    %v364 = vld [vmem:[%s1 + $0xa80] sm:$0xff]
    %v365 = vld [vmem:[%s1 + $0xa88] sm:$0xff]
    %v366 = vld [vmem:[%s1 + $0xa90] sm:$0xff]
    %v367 = vld [vmem:[%s1 + $0xa98] sm:$0xff]
    %v368 = vld [vmem:[%s1 + $0xaa0] sm:$0xff]
    %v369 = vld [vmem:[%s1 + $0xaa8] sm:$0xff]
    %v370 = vld [vmem:[%s1 + $0xab0] sm:$0xff]
    %v371 = vld [vmem:[%s1 + $0xab8] sm:$0xff]
    %v372 = vld [vmem:[%s1 + $0xac0] sm:$0xff]
    %v373 = vld [vmem:[%s1 + $0xac8] sm:$0xff]
    %v374 = vld [vmem:[%s1 + $0xad0] sm:$0xff]
    %v375 = vld [vmem:[%s1 + $0xad8] sm:$0xff]
    %v376 = vld [vmem:[%s1 + $0xae0] sm:$0xff]
    %v377 = vld [vmem:[%s1 + $0xae8] sm:$0xff]
    %v378 = vld [vmem:[%s1 + $0xaf0] sm:$0xff]
    %v379 = vld [vmem:[%s1 + $0xaf8] sm:$0xff]
    %v380 = vld [vmem:[%s1 + $0xb00] sm:$0xff]
    %v381 = vld [vmem:[%s1 + $0xb08] sm:$0xff]
    %v382 = vld [vmem:[%s1 + $0xb10] sm:$0xff]
    %v383 = vld [vmem:[%s1 + $0xb18] sm:$0xff]
    %v384 = vld [vmem:[%s1 + $0xb20] sm:$0xff]
    %v385 = vld [vmem:[%s1 + $0xb28] sm:$0xff]
    %v386 = vld [vmem:[%s1 + $0xb30] sm:$0xff]
    %v387 = vld [vmem:[%s1 + $0xb38] sm:$0xff]
    %v388 = vld [vmem:[%s1 + $0xb40] sm:$0xff]
    %v389 = vld [vmem:[%s1 + $0xb48] sm:$0xff]
    %v390 = vld [vmem:[%s1 + $0xb50] sm:$0xff]
    %v391 = vld [vmem:[%s1 + $0xb58] sm:$0xff]
    %v392 = vld [vmem:[%s1 + $0xb60] sm:$0xff]
    %v393 = vld [vmem:[%s1 + $0xb68] sm:$0xff]
    %v394 = vld [vmem:[%s1 + $0xb70] sm:$0xff]
    %v395 = vld [vmem:[%s1 + $0xb78] sm:$0xff]
    %v396 = vld [vmem:[%s1 + $0xb80] sm:$0xff]
    %v397 = vld [vmem:[%s1 + $0xb88] sm:$0xff]
    %v398 = vld [vmem:[%s1 + $0xb90] sm:$0xff]
    %v399 = vld [vmem:[%s1 + $0xb98] sm:$0xff]
    %v400 = vld [vmem:[%s1 + $0xba0] sm:$0xff]
    %v401 = vld [vmem:[%s1 + $0xba8] sm:$0xff]
    %v402 = vld [vmem:[%s1 + $0xbb0] sm:$0xff]
    %v403 = vld [vmem:[%s1 + $0xbb8] sm:$0xff]
    %v404 = vld [vmem:[%s1 + $0xbc0] sm:$0xff]
    %v405 = vld [vmem:[%s1 + $0xbc8] sm:$0xff]
    %v406 = vld [vmem:[%s1 + $0xbd0] sm:$0xff]
    %v407 = vld [vmem:[%s1 + $0xbd8] sm:$0xff]
    %v408 = vld [vmem:[%s1 + $0xbe0] sm:$0xff]
    %v409 = vld [vmem:[%s1 + $0xbe8] sm:$0xff]
    %v410 = vld [vmem:[%s1 + $0xbf0] sm:$0xff]
    %v411 = vld [vmem:[%s1 + $0xbf8] sm:$0xff]
    %v412 = vld [vmem:[%s1 + $0xc00] sm:$0xff]
    %v413 = vld [vmem:[%s1 + $0xc08] sm:$0xff]
    %v414 = vld [vmem:[%s1 + $0xc10] sm:$0xff]
    %v415 = vld [vmem:[%s1 + $0xc18] sm:$0xff]
    %v416 = vld [vmem:[%s1 + $0xc20] sm:$0xff]
    %v417 = vld [vmem:[%s1 + $0xc28] sm:$0xff]
    %v418 = vld [vmem:[%s1 + $0xc30] sm:$0xff]
    %v419 = vld [vmem:[%s1 + $0xc38] sm:$0xff]
    %v420 = vld [vmem:[%s2] sm:$0x1]
    %v422 = vperm.slane %v420, 0
    %431 = vst [vmem:[#allocation1] ss:$4 sm:$0xff] %v21
    %s432 = scalar_lea.vmem [#allocation1], 32
    %433 = vst [vmem:[%s432] ss:$4 sm:$0xff] %v22
    %v434 = vld.sshfl [vmem:[#allocation1] sm:$0xff pattern:$0x73625140]
    %v435 = vld.sshfl [vmem:[#allocation1 + $0x8] sm:$0xff pattern:$0x73625140]
    %v436 = vld.sshfl [vmem:[#allocation1 + $0x10] sm:$0xff pattern:$0x73625140]
    %v437 = vld.sshfl [vmem:[#allocation1 + $0x18] sm:$0xff pattern:$0x73625140]
    %v438 = vld.sshfl [vmem:[#allocation1 + $0x20] sm:$0xff pattern:$0x73625140]
    %v439 = vld.sshfl [vmem:[#allocation1 + $0x28] sm:$0xff pattern:$0x73625140]
    %v440 = vld.sshfl [vmem:[#allocation1 + $0x30] sm:$0xff pattern:$0x73625140]
    %v441 = vld.sshfl [vmem:[#allocation1 + $0x38] sm:$0xff pattern:$0x73625140]
    %442 = vst [vmem:[#allocation1] ss:$4 sm:$0xff] %v23
    %443 = vst [vmem:[%s432] ss:$4 sm:$0xff] %v24
    %v444 = vld.sshfl [vmem:[#allocation1] sm:$0xff pattern:$0x73625140]
    %v445 = vld.sshfl [vmem:[#allocation1 + $0x8] sm:$0xff pattern:$0x73625140]
    %v446 = vld.sshfl [vmem:[#allocation1 + $0x10] sm:$0xff pattern:$0x73625140]
    %v447 = vld.sshfl [vmem:[#allocation1 + $0x18] sm:$0xff pattern:$0x73625140]
    %v448 = vld.sshfl [vmem:[#allocation1 + $0x20] sm:$0xff pattern:$0x73625140]
    %v449 = vld.sshfl [vmem:[#allocation1 + $0x28] sm:$0xff pattern:$0x73625140]
    %v450 = vld.sshfl [vmem:[#allocation1 + $0x30] sm:$0xff pattern:$0x73625140]
    %v451 = vld.sshfl [vmem:[#allocation1 + $0x38] sm:$0xff pattern:$0x73625140]
    %452 = vst [vmem:[#allocation1] ss:$4 sm:$0xff] %v25
    %453 = vst [vmem:[%s432] ss:$4 sm:$0xff] %v26
    %v454 = vld.sshfl [vmem:[#allocation1] sm:$0xff pattern:$0x73625140]
    %v455 = vld.sshfl [vmem:[#allocation1 + $0x8] sm:$0xff pattern:$0x73625140]
    %v456 = vld.sshfl [vmem:[#allocation1 + $0x10] sm:$0xff pattern:$0x73625140]
    %v457 = vld.sshfl [vmem:[#allocation1 + $0x18] sm:$0xff pattern:$0x73625140]
    %v458 = vld.sshfl [vmem:[#allocation1 + $0x20] sm:$0xff pattern:$0x73625140]
    %v459 = vld.sshfl [vmem:[#allocation1 + $0x28] sm:$0xff pattern:$0x73625140]
    %v460 = vld.sshfl [vmem:[#allocation1 + $0x30] sm:$0xff pattern:$0x73625140]
    %v461 = vld.sshfl [vmem:[#allocation1 + $0x38] sm:$0xff pattern:$0x73625140]
    %462 = vst [vmem:[#allocation1] ss:$4 sm:$0xff] %v27
    %v463 = vld.sshfl [vmem:[#allocation1] sm:$0xff pattern:$0x73625140]
    %vm488 = vcmask 523264
    %v489 = vsel %vm488, %v463, 0
    %491 = vmatpush.msra.mxu0 %v43
    %492 = vmatpush.msra.mxu0 %v42
    %493 = vmatpush.msra.mxu0 %v41
    %494 = vmatpush.msra.mxu0 %v40
    %495 = vmatpush.msra.mxu0 %v39
    %496 = vmatpush.msra.mxu0 %v38
    %497 = vmatpush.msra.mxu0 %v37
    %498 = vmatpush.msra.mxu0 %v36
    %499 = vmatpush.msra.mxu0 %v35
    %500 = vmatpush.msra.mxu0 %v34
    %501 = vmatpush.msra.mxu0 %v33
    %502 = vmatpush.msra.mxu0 %v32
    %503 = vmatpush.msra.mxu0 %v31
    %504 = vmatpush.msra.mxu0 %v30
    %505 = vmatpush.msra.mxu0 %v29
    %506 = vmatpush.msra.mxu0 %v28
    %507 = vmatmul.f32.gmra.mxu0 %v434
    %v508 = vpop.f32.mrf.mxu0
    %v509 = vadd.f32 %v422, %v508
    %510 = vdwg.mxu0
    %511 = vmatpush.msra.mxu0 %v59
    %512 = vmatpush.msra.mxu0 %v58
    %513 = vmatpush.msra.mxu0 %v57
    %514 = vmatpush.msra.mxu0 %v56
    %515 = vmatpush.msra.mxu0 %v55
    %516 = vmatpush.msra.mxu0 %v54
    %517 = vmatpush.msra.mxu0 %v53
    %518 = vmatpush.msra.mxu0 %v52
    %519 = vmatpush.msra.mxu0 %v51
    %520 = vmatpush.msra.mxu0 %v50
    %521 = vmatpush.msra.mxu0 %v49
    %522 = vmatpush.msra.mxu0 %v48
    %523 = vmatpush.msra.mxu0 %v47
    %524 = vmatpush.msra.mxu0 %v46
    %525 = vmatpush.msra.mxu0 %v45
    %526 = vmatpush.msra.mxu0 %v44
    %527 = vmatmul.f32.gmra.mxu0 %v435
    %v528 = vpop.f32.mrf.mxu0
    %v529 = vadd.f32 %v509, %v528
    %530 = vdwg.mxu0
    %531 = vmatpush.msra.mxu0 %v75
    %532 = vmatpush.msra.mxu0 %v74
    %533 = vmatpush.msra.mxu0 %v73
    %534 = vmatpush.msra.mxu0 %v72
    %535 = vmatpush.msra.mxu0 %v71
    %536 = vmatpush.msra.mxu0 %v70
    %537 = vmatpush.msra.mxu0 %v69
    %538 = vmatpush.msra.mxu0 %v68
    %539 = vmatpush.msra.mxu0 %v67
    %540 = vmatpush.msra.mxu0 %v66
    %541 = vmatpush.msra.mxu0 %v65
    %542 = vmatpush.msra.mxu0 %v64
    %543 = vmatpush.msra.mxu0 %v63
    %544 = vmatpush.msra.mxu0 %v62
    %545 = vmatpush.msra.mxu0 %v61
    %546 = vmatpush.msra.mxu0 %v60
    %547 = vmatmul.f32.gmra.mxu0 %v436
    %v548 = vpop.f32.mrf.mxu0
    %v549 = vadd.f32 %v529, %v548
    %550 = vdwg.mxu0
    %551 = vmatpush.msra.mxu0 %v91
    %552 = vmatpush.msra.mxu0 %v90
    %553 = vmatpush.msra.mxu0 %v89
    %554 = vmatpush.msra.mxu0 %v88
    %555 = vmatpush.msra.mxu0 %v87
    %556 = vmatpush.msra.mxu0 %v86
    %557 = vmatpush.msra.mxu0 %v85
    %558 = vmatpush.msra.mxu0 %v84
    %559 = vmatpush.msra.mxu0 %v83
    %560 = vmatpush.msra.mxu0 %v82
    %561 = vmatpush.msra.mxu0 %v81
    %562 = vmatpush.msra.mxu0 %v80
    %563 = vmatpush.msra.mxu0 %v79
    %564 = vmatpush.msra.mxu0 %v78
    %565 = vmatpush.msra.mxu0 %v77
    %566 = vmatpush.msra.mxu0 %v76
    %567 = vmatmul.f32.gmra.mxu0 %v437
    %v568 = vpop.f32.mrf.mxu0
    %v569 = vadd.f32 %v549, %v568
    %570 = vdwg.mxu0
    %571 = vmatpush.msra.mxu0 %v107
    %572 = vmatpush.msra.mxu0 %v106
    %573 = vmatpush.msra.mxu0 %v105
    %574 = vmatpush.msra.mxu0 %v104
    %575 = vmatpush.msra.mxu0 %v103
    %576 = vmatpush.msra.mxu0 %v102
    %577 = vmatpush.msra.mxu0 %v101
    %578 = vmatpush.msra.mxu0 %v100
    %579 = vmatpush.msra.mxu0 %v99
    %580 = vmatpush.msra.mxu0 %v98
    %581 = vmatpush.msra.mxu0 %v97
    %582 = vmatpush.msra.mxu0 %v96
    %583 = vmatpush.msra.mxu0 %v95
    %584 = vmatpush.msra.mxu0 %v94
    %585 = vmatpush.msra.mxu0 %v93
    %586 = vmatpush.msra.mxu0 %v92
    %587 = vmatmul.f32.gmra.mxu0 %v438
    %v588 = vpop.f32.mrf.mxu0
    %v589 = vadd.f32 %v569, %v588
    %590 = vdwg.mxu0
    %591 = vmatpush.msra.mxu0 %v123
    %592 = vmatpush.msra.mxu0 %v122
    %593 = vmatpush.msra.mxu0 %v121
    %594 = vmatpush.msra.mxu0 %v120
    %595 = vmatpush.msra.mxu0 %v119
    %596 = vmatpush.msra.mxu0 %v118
    %597 = vmatpush.msra.mxu0 %v117
    %598 = vmatpush.msra.mxu0 %v116
    %599 = vmatpush.msra.mxu0 %v115
    %600 = vmatpush.msra.mxu0 %v114
    %601 = vmatpush.msra.mxu0 %v113
    %602 = vmatpush.msra.mxu0 %v112
    %603 = vmatpush.msra.mxu0 %v111
    %604 = vmatpush.msra.mxu0 %v110
    %605 = vmatpush.msra.mxu0 %v109
    %606 = vmatpush.msra.mxu0 %v108
    %607 = vmatmul.f32.gmra.mxu0 %v439
    %v608 = vpop.f32.mrf.mxu0
    %v609 = vadd.f32 %v589, %v608
    %610 = vdwg.mxu0
    %611 = vmatpush.msra.mxu0 %v139
    %612 = vmatpush.msra.mxu0 %v138
    %613 = vmatpush.msra.mxu0 %v137
    %614 = vmatpush.msra.mxu0 %v136
    %615 = vmatpush.msra.mxu0 %v135
    %616 = vmatpush.msra.mxu0 %v134
    %617 = vmatpush.msra.mxu0 %v133
    %618 = vmatpush.msra.mxu0 %v132
    %619 = vmatpush.msra.mxu0 %v131
    %620 = vmatpush.msra.mxu0 %v130
    %621 = vmatpush.msra.mxu0 %v129
    %622 = vmatpush.msra.mxu0 %v128
    %623 = vmatpush.msra.mxu0 %v127
    %624 = vmatpush.msra.mxu0 %v126
    %625 = vmatpush.msra.mxu0 %v125
    %626 = vmatpush.msra.mxu0 %v124
    %627 = vmatmul.f32.gmra.mxu0 %v440
    %v628 = vpop.f32.mrf.mxu0
    %v629 = vadd.f32 %v609, %v628
    %630 = vdwg.mxu0
    %631 = vmatpush.msra.mxu0 %v155
    %632 = vmatpush.msra.mxu0 %v154
    %633 = vmatpush.msra.mxu0 %v153
    %634 = vmatpush.msra.mxu0 %v152
    %635 = vmatpush.msra.mxu0 %v151
    %636 = vmatpush.msra.mxu0 %v150
    %637 = vmatpush.msra.mxu0 %v149
    %638 = vmatpush.msra.mxu0 %v148
    %639 = vmatpush.msra.mxu0 %v147
    %640 = vmatpush.msra.mxu0 %v146
    %641 = vmatpush.msra.mxu0 %v145
    %642 = vmatpush.msra.mxu0 %v144
    %643 = vmatpush.msra.mxu0 %v143
    %644 = vmatpush.msra.mxu0 %v142
    %645 = vmatpush.msra.mxu0 %v141
    %646 = vmatpush.msra.mxu0 %v140
    %647 = vmatmul.f32.gmra.mxu0 %v441
    %v648 = vpop.f32.mrf.mxu0
    %v649 = vadd.f32 %v629, %v648
    %650 = vdwg.mxu0
    %651 = vmatpush.msra.mxu0 %v171
    %652 = vmatpush.msra.mxu0 %v170
    %653 = vmatpush.msra.mxu0 %v169
    %654 = vmatpush.msra.mxu0 %v168
    %655 = vmatpush.msra.mxu0 %v167
    %656 = vmatpush.msra.mxu0 %v166
    %657 = vmatpush.msra.mxu0 %v165
    %658 = vmatpush.msra.mxu0 %v164
    %659 = vmatpush.msra.mxu0 %v163
    %660 = vmatpush.msra.mxu0 %v162
    %661 = vmatpush.msra.mxu0 %v161
    %662 = vmatpush.msra.mxu0 %v160
    %663 = vmatpush.msra.mxu0 %v159
    %664 = vmatpush.msra.mxu0 %v158
    %665 = vmatpush.msra.mxu0 %v157
    %666 = vmatpush.msra.mxu0 %v156
    %667 = vmatmul.f32.gmra.mxu0 %v444
    %v668 = vpop.f32.mrf.mxu0
    %v669 = vadd.f32 %v649, %v668
    %670 = vdwg.mxu0
    %671 = vmatpush.msra.mxu0 %v187
    %672 = vmatpush.msra.mxu0 %v186
    %673 = vmatpush.msra.mxu0 %v185
    %674 = vmatpush.msra.mxu0 %v184
    %675 = vmatpush.msra.mxu0 %v183
    %676 = vmatpush.msra.mxu0 %v182
    %677 = vmatpush.msra.mxu0 %v181
    %678 = vmatpush.msra.mxu0 %v180
    %679 = vmatpush.msra.mxu0 %v179
    %680 = vmatpush.msra.mxu0 %v178
    %681 = vmatpush.msra.mxu0 %v177
    %682 = vmatpush.msra.mxu0 %v176
    %683 = vmatpush.msra.mxu0 %v175
    %684 = vmatpush.msra.mxu0 %v174
    %685 = vmatpush.msra.mxu0 %v173
    %686 = vmatpush.msra.mxu0 %v172
    %687 = vmatmul.f32.gmra.mxu0 %v445
    %v688 = vpop.f32.mrf.mxu0
    %v689 = vadd.f32 %v669, %v688
    %690 = vdwg.mxu0
    %691 = vmatpush.msra.mxu0 %v203
    %692 = vmatpush.msra.mxu0 %v202
    %693 = vmatpush.msra.mxu0 %v201
    %694 = vmatpush.msra.mxu0 %v200
    %695 = vmatpush.msra.mxu0 %v199
    %696 = vmatpush.msra.mxu0 %v198
    %697 = vmatpush.msra.mxu0 %v197
    %698 = vmatpush.msra.mxu0 %v196
    %699 = vmatpush.msra.mxu0 %v195
    %700 = vmatpush.msra.mxu0 %v194
    %701 = vmatpush.msra.mxu0 %v193
    %702 = vmatpush.msra.mxu0 %v192
    %703 = vmatpush.msra.mxu0 %v191
    %704 = vmatpush.msra.mxu0 %v190
    %705 = vmatpush.msra.mxu0 %v189
    %706 = vmatpush.msra.mxu0 %v188
    %707 = vmatmul.f32.gmra.mxu0 %v446
    %v708 = vpop.f32.mrf.mxu0
    %v709 = vadd.f32 %v689, %v708
    %710 = vdwg.mxu0
    %711 = vmatpush.msra.mxu0 %v219
    %712 = vmatpush.msra.mxu0 %v218
    %713 = vmatpush.msra.mxu0 %v217
    %714 = vmatpush.msra.mxu0 %v216
    %715 = vmatpush.msra.mxu0 %v215
    %716 = vmatpush.msra.mxu0 %v214
    %717 = vmatpush.msra.mxu0 %v213
    %718 = vmatpush.msra.mxu0 %v212
    %719 = vmatpush.msra.mxu0 %v211
    %720 = vmatpush.msra.mxu0 %v210
    %721 = vmatpush.msra.mxu0 %v209
    %722 = vmatpush.msra.mxu0 %v208
    %723 = vmatpush.msra.mxu0 %v207
    %724 = vmatpush.msra.mxu0 %v206
    %725 = vmatpush.msra.mxu0 %v205
    %726 = vmatpush.msra.mxu0 %v204
    %727 = vmatmul.f32.gmra.mxu0 %v447
    %v728 = vpop.f32.mrf.mxu0
    %v729 = vadd.f32 %v709, %v728
    %730 = vdwg.mxu0
    %731 = vmatpush.msra.mxu0 %v235
    %732 = vmatpush.msra.mxu0 %v234
    %733 = vmatpush.msra.mxu0 %v233
    %734 = vmatpush.msra.mxu0 %v232
    %735 = vmatpush.msra.mxu0 %v231
    %736 = vmatpush.msra.mxu0 %v230
    %737 = vmatpush.msra.mxu0 %v229
    %738 = vmatpush.msra.mxu0 %v228
    %739 = vmatpush.msra.mxu0 %v227
    %740 = vmatpush.msra.mxu0 %v226
    %741 = vmatpush.msra.mxu0 %v225
    %742 = vmatpush.msra.mxu0 %v224
    %743 = vmatpush.msra.mxu0 %v223
    %744 = vmatpush.msra.mxu0 %v222
    %745 = vmatpush.msra.mxu0 %v221
    %746 = vmatpush.msra.mxu0 %v220
    %747 = vmatmul.f32.gmra.mxu0 %v448
    %v748 = vpop.f32.mrf.mxu0
    %v749 = vadd.f32 %v729, %v748
    %750 = vdwg.mxu0
    %751 = vmatpush.msra.mxu0 %v251
    %752 = vmatpush.msra.mxu0 %v250
    %753 = vmatpush.msra.mxu0 %v249
    %754 = vmatpush.msra.mxu0 %v248
    %755 = vmatpush.msra.mxu0 %v247
    %756 = vmatpush.msra.mxu0 %v246
    %757 = vmatpush.msra.mxu0 %v245
    %758 = vmatpush.msra.mxu0 %v244
    %759 = vmatpush.msra.mxu0 %v243
    %760 = vmatpush.msra.mxu0 %v242
    %761 = vmatpush.msra.mxu0 %v241
    %762 = vmatpush.msra.mxu0 %v240
    %763 = vmatpush.msra.mxu0 %v239
    %764 = vmatpush.msra.mxu0 %v238
    %765 = vmatpush.msra.mxu0 %v237
    %766 = vmatpush.msra.mxu0 %v236
    %767 = vmatmul.f32.gmra.mxu0 %v449
    %v768 = vpop.f32.mrf.mxu0
    %v769 = vadd.f32 %v749, %v768
    %770 = vdwg.mxu0
    %771 = vmatpush.msra.mxu0 %v267
    %772 = vmatpush.msra.mxu0 %v266
    %773 = vmatpush.msra.mxu0 %v265
    %774 = vmatpush.msra.mxu0 %v264
    %775 = vmatpush.msra.mxu0 %v263
    %776 = vmatpush.msra.mxu0 %v262
    %777 = vmatpush.msra.mxu0 %v261
    %778 = vmatpush.msra.mxu0 %v260
    %779 = vmatpush.msra.mxu0 %v259
    %780 = vmatpush.msra.mxu0 %v258
    %781 = vmatpush.msra.mxu0 %v257
    %782 = vmatpush.msra.mxu0 %v256
    %783 = vmatpush.msra.mxu0 %v255
    %784 = vmatpush.msra.mxu0 %v254
    %785 = vmatpush.msra.mxu0 %v253
    %786 = vmatpush.msra.mxu0 %v252
    %787 = vmatmul.f32.gmra.mxu0 %v450
    %v788 = vpop.f32.mrf.mxu0
    %v789 = vadd.f32 %v769, %v788
    %790 = vdwg.mxu0
    %791 = vmatpush.msra.mxu0 %v283
    %792 = vmatpush.msra.mxu0 %v282
    %793 = vmatpush.msra.mxu0 %v281
    %794 = vmatpush.msra.mxu0 %v280
    %795 = vmatpush.msra.mxu0 %v279
    %796 = vmatpush.msra.mxu0 %v278
    %797 = vmatpush.msra.mxu0 %v277
    %798 = vmatpush.msra.mxu0 %v276
    %799 = vmatpush.msra.mxu0 %v275
    %800 = vmatpush.msra.mxu0 %v274
    %801 = vmatpush.msra.mxu0 %v273
    %802 = vmatpush.msra.mxu0 %v272
    %803 = vmatpush.msra.mxu0 %v271
    %804 = vmatpush.msra.mxu0 %v270
    %805 = vmatpush.msra.mxu0 %v269
    %806 = vmatpush.msra.mxu0 %v268
    %807 = vmatmul.f32.gmra.mxu0 %v451
    %v808 = vpop.f32.mrf.mxu0
    %v809 = vadd.f32 %v789, %v808
    %810 = vdwg.mxu0
    %811 = vmatpush.msra.mxu0 %v299
    %812 = vmatpush.msra.mxu0 %v298
    %813 = vmatpush.msra.mxu0 %v297
    %814 = vmatpush.msra.mxu0 %v296
    %815 = vmatpush.msra.mxu0 %v295
    %816 = vmatpush.msra.mxu0 %v294
    %817 = vmatpush.msra.mxu0 %v293
    %818 = vmatpush.msra.mxu0 %v292
    %819 = vmatpush.msra.mxu0 %v291
    %820 = vmatpush.msra.mxu0 %v290
    %821 = vmatpush.msra.mxu0 %v289
    %822 = vmatpush.msra.mxu0 %v288
    %823 = vmatpush.msra.mxu0 %v287
    %824 = vmatpush.msra.mxu0 %v286
    %825 = vmatpush.msra.mxu0 %v285
    %826 = vmatpush.msra.mxu0 %v284
    %827 = vmatmul.f32.gmra.mxu0 %v454
    %v828 = vpop.f32.mrf.mxu0
    %v829 = vadd.f32 %v809, %v828
    %830 = vdwg.mxu0
    %831 = vmatpush.msra.mxu0 %v315
    %832 = vmatpush.msra.mxu0 %v314
    %833 = vmatpush.msra.mxu0 %v313
    %834 = vmatpush.msra.mxu0 %v312
    %835 = vmatpush.msra.mxu0 %v311
    %836 = vmatpush.msra.mxu0 %v310
    %837 = vmatpush.msra.mxu0 %v309
    %838 = vmatpush.msra.mxu0 %v308
    %839 = vmatpush.msra.mxu0 %v307
    %840 = vmatpush.msra.mxu0 %v306
    %841 = vmatpush.msra.mxu0 %v305
    %842 = vmatpush.msra.mxu0 %v304
    %843 = vmatpush.msra.mxu0 %v303
    %844 = vmatpush.msra.mxu0 %v302
    %845 = vmatpush.msra.mxu0 %v301
    %846 = vmatpush.msra.mxu0 %v300
    %847 = vmatmul.f32.gmra.mxu0 %v455
    %v848 = vpop.f32.mrf.mxu0
    %v849 = vadd.f32 %v829, %v848
    %850 = vdwg.mxu0
    %851 = vmatpush.msra.mxu0 %v331
    %852 = vmatpush.msra.mxu0 %v330
    %853 = vmatpush.msra.mxu0 %v329
    %854 = vmatpush.msra.mxu0 %v328
    %855 = vmatpush.msra.mxu0 %v327
    %856 = vmatpush.msra.mxu0 %v326
    %857 = vmatpush.msra.mxu0 %v325
    %858 = vmatpush.msra.mxu0 %v324
    %859 = vmatpush.msra.mxu0 %v323
    %860 = vmatpush.msra.mxu0 %v322
    %861 = vmatpush.msra.mxu0 %v321
    %862 = vmatpush.msra.mxu0 %v320
    %863 = vmatpush.msra.mxu0 %v319
    %864 = vmatpush.msra.mxu0 %v318
    %865 = vmatpush.msra.mxu0 %v317
    %866 = vmatpush.msra.mxu0 %v316
    %867 = vmatmul.f32.gmra.mxu0 %v456
    %v868 = vpop.f32.mrf.mxu0
    %v869 = vadd.f32 %v849, %v868
    %870 = vdwg.mxu0
    %871 = vmatpush.msra.mxu0 %v347
    %872 = vmatpush.msra.mxu0 %v346
    %873 = vmatpush.msra.mxu0 %v345
    %874 = vmatpush.msra.mxu0 %v344
    %875 = vmatpush.msra.mxu0 %v343
    %876 = vmatpush.msra.mxu0 %v342
    %877 = vmatpush.msra.mxu0 %v341
    %878 = vmatpush.msra.mxu0 %v340
    %879 = vmatpush.msra.mxu0 %v339
    %880 = vmatpush.msra.mxu0 %v338
    %881 = vmatpush.msra.mxu0 %v337
    %882 = vmatpush.msra.mxu0 %v336
    %883 = vmatpush.msra.mxu0 %v335
    %884 = vmatpush.msra.mxu0 %v334
    %885 = vmatpush.msra.mxu0 %v333
    %886 = vmatpush.msra.mxu0 %v332
    %887 = vmatmul.f32.gmra.mxu0 %v457
    %v888 = vpop.f32.mrf.mxu0
    %v889 = vadd.f32 %v869, %v888
    %890 = vdwg.mxu0
    %891 = vmatpush.msra.mxu0 %v363
    %892 = vmatpush.msra.mxu0 %v362
    %893 = vmatpush.msra.mxu0 %v361
    %894 = vmatpush.msra.mxu0 %v360
    %895 = vmatpush.msra.mxu0 %v359
    %896 = vmatpush.msra.mxu0 %v358
    %897 = vmatpush.msra.mxu0 %v357
    %898 = vmatpush.msra.mxu0 %v356
    %899 = vmatpush.msra.mxu0 %v355
    %900 = vmatpush.msra.mxu0 %v354
    %901 = vmatpush.msra.mxu0 %v353
    %902 = vmatpush.msra.mxu0 %v352
    %903 = vmatpush.msra.mxu0 %v351
    %904 = vmatpush.msra.mxu0 %v350
    %905 = vmatpush.msra.mxu0 %v349
    %906 = vmatpush.msra.mxu0 %v348
    %907 = vmatmul.f32.gmra.mxu0 %v458
    %v908 = vpop.f32.mrf.mxu0
    %v909 = vadd.f32 %v889, %v908
    %910 = vdwg.mxu0
    %911 = vmatpush.msra.mxu0 %v379
    %912 = vmatpush.msra.mxu0 %v378
    %913 = vmatpush.msra.mxu0 %v377
    %914 = vmatpush.msra.mxu0 %v376
    %915 = vmatpush.msra.mxu0 %v375
    %916 = vmatpush.msra.mxu0 %v374
    %917 = vmatpush.msra.mxu0 %v373
    %918 = vmatpush.msra.mxu0 %v372
    %919 = vmatpush.msra.mxu0 %v371
    %920 = vmatpush.msra.mxu0 %v370
    %921 = vmatpush.msra.mxu0 %v369
    %922 = vmatpush.msra.mxu0 %v368
    %923 = vmatpush.msra.mxu0 %v367
    %924 = vmatpush.msra.mxu0 %v366
    %925 = vmatpush.msra.mxu0 %v365
    %926 = vmatpush.msra.mxu0 %v364
    %927 = vmatmul.f32.gmra.mxu0 %v459
    %v928 = vpop.f32.mrf.mxu0
    %v929 = vadd.f32 %v909, %v928
    %930 = vdwg.mxu0
    %931 = vmatpush.msra.mxu0 %v395
    %932 = vmatpush.msra.mxu0 %v394
    %933 = vmatpush.msra.mxu0 %v393
    %934 = vmatpush.msra.mxu0 %v392
    %935 = vmatpush.msra.mxu0 %v391
    %936 = vmatpush.msra.mxu0 %v390
    %937 = vmatpush.msra.mxu0 %v389
    %938 = vmatpush.msra.mxu0 %v388
    %939 = vmatpush.msra.mxu0 %v387
    %940 = vmatpush.msra.mxu0 %v386
    %941 = vmatpush.msra.mxu0 %v385
    %942 = vmatpush.msra.mxu0 %v384
    %943 = vmatpush.msra.mxu0 %v383
    %944 = vmatpush.msra.mxu0 %v382
    %945 = vmatpush.msra.mxu0 %v381
    %946 = vmatpush.msra.mxu0 %v380
    %947 = vmatmul.f32.gmra.mxu0 %v460
    %v948 = vpop.f32.mrf.mxu0
    %v949 = vadd.f32 %v929, %v948
    %950 = vdwg.mxu0
    %951 = vmatpush.msra.mxu0 %v411
    %952 = vmatpush.msra.mxu0 %v410
    %953 = vmatpush.msra.mxu0 %v409
    %954 = vmatpush.msra.mxu0 %v408
    %955 = vmatpush.msra.mxu0 %v407
    %956 = vmatpush.msra.mxu0 %v406
    %957 = vmatpush.msra.mxu0 %v405
    %958 = vmatpush.msra.mxu0 %v404
    %959 = vmatpush.msra.mxu0 %v403
    %960 = vmatpush.msra.mxu0 %v402
    %961 = vmatpush.msra.mxu0 %v401
    %962 = vmatpush.msra.mxu0 %v400
    %963 = vmatpush.msra.mxu0 %v399
    %964 = vmatpush.msra.mxu0 %v398
    %965 = vmatpush.msra.mxu0 %v397
    %966 = vmatpush.msra.mxu0 %v396
    %967 = vmatmul.f32.gmra.mxu0 %v461
    %v968 = vpop.f32.mrf.mxu0
    %v969 = vadd.f32 %v949, %v968
    %970 = vdwg.mxu0
    %971 = vmatpush.msra.mxu0 0.0
    %972 = vmatpush.msra.mxu0 0.0
    %973 = vmatpush.msra.mxu0 0.0
    %974 = vmatpush.msra.mxu0 0.0
    %975 = vmatpush.msra.mxu0 0.0
    %976 = vmatpush.msra.mxu0 0.0
    %977 = vmatpush.msra.mxu0 0.0
    %978 = vmatpush.msra.mxu0 0.0
    %979 = vmatpush.msra.mxu0 %v419
    %980 = vmatpush.msra.mxu0 %v418
    %981 = vmatpush.msra.mxu0 %v417
    %982 = vmatpush.msra.mxu0 %v416
    %983 = vmatpush.msra.mxu0 %v415
    %984 = vmatpush.msra.mxu0 %v414
    %985 = vmatpush.msra.mxu0 %v413
    %986 = vmatpush.msra.mxu0 %v412
    %987 = vmatmul.f32.gmra.mxu0 %v489
    %v988 = vpop.f32.mrf.mxu0
    %v989 = vadd.f32 %v969, %v988
    %990 = vdwg.mxu0
    %v991 = vmax.f32 %v989, 0.0
    %v992 = vld [vmem:[%s3] sm:$0xff]
    %v993 = vld [vmem:[%s3 + $0x8] sm:$0xff]
    %v994 = vld [vmem:[%s3 + $0x10] sm:$0xff]
    %v995 = vld [vmem:[%s3 + $0x18] sm:$0xff]
    %v996 = vld [vmem:[%s3 + $0x20] sm:$0xff]
    %v997 = vld [vmem:[%s3 + $0x28] sm:$0xff]
    %v998 = vld [vmem:[%s3 + $0x30] sm:$0xff]
    %v999 = vld [vmem:[%s3 + $0x38] sm:$0xff]
    %v1000 = vld [vmem:[%s3 + $0x40] sm:$0xff]
    %v1001 = vld [vmem:[%s3 + $0x48] sm:$0xff]
    %v1002 = vld [vmem:[%s3 + $0x50] sm:$0xff]
    %v1003 = vld [vmem:[%s3 + $0x58] sm:$0xff]
    %v1004 = vld [vmem:[%s3 + $0x60] sm:$0xff]
    %v1005 = vld [vmem:[%s3 + $0x68] sm:$0xff]
    %v1006 = vld [vmem:[%s3 + $0x70] sm:$0xff]
    %v1007 = vld [vmem:[%s3 + $0x78] sm:$0xff]
    %v1008 = vld [vmem:[%s4] sm:$0x1]
    %v1010 = vperm.slane %v1008, 0
    %1012 = vmatpush.msra.mxu0 %v1007
    %1013 = vmatpush.msra.mxu0 %v1006
    %1014 = vmatpush.msra.mxu0 %v1005
    %1015 = vmatpush.msra.mxu0 %v1004
    %1016 = vmatpush.msra.mxu0 %v1003
    %1017 = vmatpush.msra.mxu0 %v1002
    %1018 = vmatpush.msra.mxu0 %v1001
    %1019 = vmatpush.msra.mxu0 %v1000
    %1020 = vmatpush.msra.mxu0 %v999
    %1021 = vmatpush.msra.mxu0 %v998
    %1022 = vmatpush.msra.mxu0 %v997
    %1023 = vmatpush.msra.mxu0 %v996
    %1024 = vmatpush.msra.mxu0 %v995
    %1025 = vmatpush.msra.mxu0 %v994
    %1026 = vmatpush.msra.mxu0 %v993
    %1027 = vmatpush.msra.mxu0 %v992
    %1028 = vmatmul.f32.gmra.mxu0 %v991
    %v1029 = vpop.f32.mrf.mxu0
    %v1030 = vadd.f32 %v1010, %v1029
    %1031 = vdwg.mxu0
    %vm1032 = vcmask 74752
    %v1033 = vsel %vm1032, %v1030, -inf
    %1034 = vmax.xlane.f32.xlu0 %v1033
    %v1035 = vpop.xlane.xlu0 %1034
    %v1036 = vsub.f32 %v1030, %v1035
    %v1037 = vmul.f32 %v1036, 1.442695
    %v1038 = vpow.pop %v1037
    %v1039 = vsel %vm1032, %v1038, 0.0
    %1040 = vadd.xlane.f32.xlu0 %v1039
    %v1041 = vpop.xlane.xlu0 %1040
    %v1042 = vlog2.pop %v1041
    %v1043 = vmul.f32 %v1042, 0.6931472
    %v1044 = vsub.f32 %v1036, %v1043
    %1045 = vst.msk [vmem:[#allocation2] sm:$0x3] %vm1032, %v1044
    // Predicated region
    $region22: #{model_forward.5} parent=1 // pred_check
      _
    $region23: #{model_forward.5} parent=1 // pred_check_branch
      %1047 = sbr.rel (0) target = $region25
    $region24: #{model_forward.5} parent=1 // pred_region
      %1049 = vsyncadd [#allocation3], 0
      %s1051 = sshll.u32 [#allocation2], 4
      %s1052 = int_to_ptr.vmem [resolvable:$true] %s1051
      %s1053 = sshll.u32 %s5, 4
      %s1054 = int_to_ptr.hbm [resolvable:$true] %s1053
      %1056 = dma.vmem_to_hbm [thread:$0]  %s1052, 32, %s1054, [#allocation3]
    $region25: #{model_forward.5} parent=1 // pred_fallthru
      _
    // Predicated region
    $region26: #{model_forward.5} parent=1 // pred_check
      _
    $region27: #{model_forward.5} parent=1 // pred_check_branch
      %1058 = sbr.rel (0) target = $region29
    $region28: #{model_forward.5} parent=1 // pred_region
      %1060 = dma.done [#allocation3], 32
    $region29: #{model_forward.5} parent=1 // pred_fallthru
      _
    %1061 = vsyncpa [#allocation3], 1

</llo_original>
